<compile_context>
chip_gen: v5e
topology: v5e:2x2
jax: 0.10.0
libtpu: 0.0.40
codegen_flags: <defaults>
</compile_context>

<pallas_src>
import jax
import jax.numpy as jnp
from jax.experimental import pallas as pl
from jax.experimental.pallas import tpu as pltpu


def _round_up(n, m):
    return (n + m - 1) // m * m


# ------------------------------ fused kernel --------------------------------

def _aio_block_kernel(alpha_ref, x_ref, w_aio_ref, b_aio_ref, w_d_ref, b_d_ref,
                      w_se1_ref, w_se2_ref, w_dw_ref, b_dw_ref, o_ref, xp_ref):
    H, W, C = o_ref.shape[1], o_ref.shape[2], o_ref.shape[3]
    WP = xp_ref.shape[1]
    S = x_ref.shape[1]

    # ---- AIOLayer (fused 1x1 conv) + "d" 1x1 conv + PReLU ----
    x = x_ref[0]                                                   # (S, lin) f32
    y = jnp.dot(x, w_aio_ref[...], preferred_element_type=jnp.float32) + b_aio_ref[...]
    z = jnp.dot(y, w_d_ref[...], preferred_element_type=jnp.float32) + b_d_ref[...]
    d_alpha = alpha_ref[0]
    d1 = jnp.where(z > 0, z, d_alpha * z)                          # (S, ouc)

    # ---- SE: global average pool -> squeeze -> PReLU -> expand -> sigmoid ----
    gap = jnp.sum(d1, axis=0, keepdims=True) * (1.0 / S)           # (1, ouc)
    sq = jnp.dot(gap, w_se1_ref[...], preferred_element_type=jnp.float32)
    se_alpha = alpha_ref[1]
    sq = jnp.where(sq > 0, sq, se_alpha * sq)
    gate = jax.nn.sigmoid(
        jnp.dot(sq, w_se2_ref[...], preferred_element_type=jnp.float32))
    gated = (d1 * gate).reshape(H, W, C)                           # SE-gated d1

    # ---- depthwise 7x7 (pad 3) + bias; residual folded into the centre tap ----
    # Halo layout: image at rows [3, 3+H) (major dim -> cheap offsets) and
    # columns [0, W) (sublane dim -> aligned store).  Columns [W, WP) stay zero
    # and double as both the right halo and, via roll wrap-around, the left halo.
    # TODO(synk): zeroing the whole scratch every image is slightly redundant but
    # is kept (instead of a program_id==0 guard) so the kernel stays correct when
    # the batch grid axis is split across TensorCores.
    xp_ref[...] = jnp.zeros_like(xp_ref)
    xp_ref[3:3 + H, 0:W, :] = gated
    xp = xp_ref[...]                                               # (H+6, WP, C)

    taps = w_dw_ref[...]                                           # (49, C)
    acc = jnp.zeros((H, W, C), jnp.float32)
    for kx in range(7):
        # rolled[:, j, :] == padded-image column (j + kx - 3); zeros outside.
        shift = (3 - kx) % WP
        rolled = xp if shift == 0 else pltpu.roll(xp, shift=shift, axis=1)
        cols = rolled[:, 0:W, :]                                   # (H+6, W, C)
        for ky in range(7):
            acc = acc + cols[ky:ky + H] * taps[ky * 7 + kx]
    o_ref[0] = acc + b_dw_ref[...]


# -------------------------------- forward -----------------------------------

def aio_block_forward(x_nchw, pp):
    """AIOBlock.forward: x (B, inc+inc2, H, W) NCHW -> (B, ouc, H, W)."""
    b, lin, h, w = x_nchw.shape
    ouc = pp["w_d"].shape[1]
    sq = pp["w_se1"].shape[1]
    s = h * w
    wp = _round_up(w + 6, 8)

    # NCHW -> (B, H*W, lin) rows for the pointwise matmuls (cheap XLA relayout;
    # keep activations in this layout across stacked blocks in a full model).
    x = jnp.transpose(x_nchw, (0, 2, 3, 1)).reshape(b, s, lin)

    out = pl.pallas_call(
        _aio_block_kernel,
        grid=(b,),
        in_specs=[
            pl.BlockSpec(memory_space=pltpu.MemorySpace.SMEM),        # PReLU alphas
            pl.BlockSpec((1, s, lin), lambda i: (i, 0, 0)),           # x rows
            pl.BlockSpec((lin, lin), lambda i: (0, 0)),               # w_aio
            pl.BlockSpec((1, lin), lambda i: (0, 0)),                 # b_aio
            pl.BlockSpec((lin, ouc), lambda i: (0, 0)),               # w_d
            pl.BlockSpec((1, ouc), lambda i: (0, 0)),                 # b_d
            pl.BlockSpec((ouc, sq), lambda i: (0, 0)),                # w_se1
            pl.BlockSpec((sq, ouc), lambda i: (0, 0)),                # w_se2
            pl.BlockSpec((49, ouc), lambda i: (0, 0)),                # dw taps
            pl.BlockSpec((1, ouc), lambda i: (0, 0)),                 # dw bias
        ],
        out_specs=pl.BlockSpec((1, h, w, ouc), lambda i: (i, 0, 0, 0)),
        out_shape=jax.ShapeDtypeStruct((b, h, w, ouc), jnp.float32),
        scratch_shapes=[pltpu.VMEM((h + 6, wp, ouc), jnp.float32)],
        compiler_params=pltpu.CompilerParams(
            dimension_semantics=("parallel",),
            vmem_limit_bytes=32 * 1024 * 1024,
        ),
    )(pp["alphas"], x, pp["w_aio"], pp["b_aio"], pp["w_d"], pp["b_d"],
      pp["w_se1"], pp["w_se2"], pp["w_dw"], pp["b_dw"])

    # TODO(synk): for images whose per-image working set exceeds VMEM, fall back
    # to a two-kernel split (pointwise+GAP, then SE+dw7 with H-tiled halos).
    return jnp.transpose(out, (0, 3, 1, 2))


# ---------------------------- parameter prep --------------------------------

def prepare_params(raw, inc, inc2, ouc):
    """One-time prep: combine AIO weights (masked mmlp/hmlp), transpose conv
    weights to (in, out) for row-major matmuls, flatten the depthwise taps and
    fold the residual into the centre tap."""
    lin = inc + inc2
    mc = inc
    # AIOLayer.set_mhmlp_w: mmlp keeps [:mc,:mc], hmlp keeps [mc:,mc:]; then
    # mlp(x)+mmlp(x)+hmlp(x) == one 1x1 conv with summed weights/biases.
    wm = raw["mmlp_w"].at[mc:, :].set(0.0).at[:, mc:].set(0.0)
    wh = raw["hmlp_w"].at[:mc, :].set(0.0).at[:, :mc].set(0.0)
    w_aio = raw["mlp_w"] + wm + wh                                 # (out, in)
    b_aio = raw["mlp_b"] + raw["mmlp_b"] + raw["hmlp_b"]

    # depthwise taps (ky, kx, c) flattened; +1 on the centre tap == "+ d1" residual
    dw = jnp.transpose(raw["d2_w"][:, 0], (1, 2, 0)).reshape(49, ouc)
    dw = dw.at[3 * 7 + 3].add(1.0)

    return {
        "alphas": jnp.stack([raw["d_alpha"], raw["se_alpha"]]).astype(jnp.float32),
        "w_aio": jnp.transpose(w_aio).astype(jnp.float32),          # (lin, lin)
        "b_aio": b_aio.reshape(1, lin).astype(jnp.float32),
        "w_d": jnp.transpose(raw["d_w"]).astype(jnp.float32),       # (lin, ouc)
        "b_d": raw["d_b"].reshape(1, ouc).astype(jnp.float32),
        "w_se1": jnp.transpose(raw["se_sq_w"]).astype(jnp.float32), # (ouc, ouc//4)
        "w_se2": jnp.transpose(raw["se_ex_w"]).astype(jnp.float32), # (ouc//4, ouc)
        "w_dw": dw.astype(jnp.float32),                             # (49, ouc)
        "b_dw": raw["d2_b"].reshape(1, ouc).astype(jnp.float32),
    }


def init_raw_params(key, inc, inc2, ouc):
    """Deterministic params in PyTorch (out, in) conv layouts."""
    lin = inc + inc2
    keys = iter(jax.random.split(key, 32))

    def nrm(shape, fan_in, fan_out):
        std = (2.0 / (fan_in + fan_out)) ** 0.5      # xavier-normal style
        return std * jax.random.normal(next(keys), shape, jnp.float32)

    def bias(shape, fan_in):
        b = 1.0 / (fan_in ** 0.5)
        return jax.random.uniform(next(keys), shape, jnp.float32, -b, b)

    p = {}
    for name in ("mlp", "mmlp", "hmlp"):
        p[name + "_w"] = nrm((lin, lin), lin, lin)
        p[name + "_b"] = bias((lin,), lin)
    p["d_w"] = nrm((ouc, lin), lin, ouc)
    p["d_b"] = bias((ouc,), lin)
    p["d_alpha"] = jnp.float32(0.25)                 # nn.PReLU default
    p["d2_w"] = nrm((ouc, 1, 7, 7), 49, 49)          # depthwise 7x7, groups=ouc
    p["d2_b"] = bias((ouc,), 49)
    p["se_sq_w"] = nrm((ouc // 4, ouc), ouc, ouc // 4)
    p["se_alpha"] = jnp.float32(0.25)
    p["se_ex_w"] = nrm((ouc, ouc // 4), ouc // 4, ouc)
    return p


# ------------------------- pure-JAX reference (check) ------------------------

def aio_block_reference(x, raw, inc):
    """Direct port of PyTorch AIOBlock.forward (train-mode AIOLayer), NCHW."""
    mc = inc
    wm = raw["mmlp_w"].at[mc:, :].set(0.0).at[:, mc:].set(0.0)
    wh = raw["hmlp_w"].at[:mc, :].set(0.0).at[:, :mc].set(0.0)
    w_aio = raw["mlp_w"] + wm + wh
    b_aio = raw["mlp_b"] + raw["mmlp_b"] + raw["hmlp_b"]
    y = jnp.einsum("oi,bihw->bohw", w_aio, x) + b_aio[None, :, None, None]
    z = jnp.einsum("oi,bihw->bohw", raw["d_w"], y) + raw["d_b"][None, :, None, None]
    d1 = jnp.where(z > 0, z, raw["d_alpha"] * z)
    gap = jnp.mean(d1, axis=(2, 3))
    s = gap @ raw["se_sq_w"].T
    s = jnp.where(s > 0, s, raw["se_alpha"] * s)
    gate = jax.nn.sigmoid(s @ raw["se_ex_w"].T)[:, :, None, None]
    g = d1 * gate
    gp = jnp.pad(g, ((0, 0), (0, 0), (3, 3), (3, 3)))
    h, w = g.shape[2], g.shape[3]
    out = jnp.zeros_like(g)
    for ky in range(7):
        for kx in range(7):
            out = out + gp[:, :, ky:ky + h, kx:kx + w] * \
                raw["d2_w"][None, :, 0, ky, kx, None, None]
    return out + raw["d2_b"][None, :, None, None] + g


# ----------------------------------- main ------------------------------------

if __name__ == "__main__":
    key = jax.random.PRNGKey(0)
    k_x, k_p = jax.random.split(key)

    inc, inc2, ouc = 16, 16, 32          # AIOBlock(inc, inc2, ouc); lin = 32
    B, H, W = 2, 16, 16
    x = jax.random.normal(k_x, (B, inc + inc2, H, W), jnp.float32)
    raw = init_raw_params(k_p, inc, inc2, ouc)
    pp = prepare_params(raw, inc, inc2, ouc)

    fwd = jax.jit(aio_block_forward)
    out = jax.block_until_ready(fwd(x, pp))
    assert out.shape == (B, ouc, H, W), out.shape
    assert out.dtype == jnp.float32

    ref = aio_block_reference(x, raw, inc)
    err = float(jnp.max(jnp.abs(out - ref)))
    assert err < 5e-2, f"max abs diff vs pure-JAX reference: {err}"
    print("KERNEL_OK")
</pallas_src>

<mosaic_0001>
module attributes {stable_mosaic.version = 11 : i64} {
  func.func @_aio_block_kernel(%arg0: i32, %arg1: memref<2xf32, #tpu.memory_space<smem>>, %arg2: memref<1x256x32xf32, #tpu.memory_space<vmem>>, %arg3: memref<32x32xf32, #tpu.memory_space<vmem>>, %arg4: memref<1x32xf32, #tpu.memory_space<vmem>>, %arg5: memref<32x32xf32, #tpu.memory_space<vmem>>, %arg6: memref<1x32xf32, #tpu.memory_space<vmem>>, %arg7: memref<32x8xf32, #tpu.memory_space<vmem>>, %arg8: memref<8x32xf32, #tpu.memory_space<vmem>>, %arg9: memref<49x32xf32, #tpu.memory_space<vmem>>, %arg10: memref<1x32xf32, #tpu.memory_space<vmem>>, %arg11: memref<1x16x16x32xf32, #tpu.memory_space<vmem>>, %arg12: memref<22x24x32xf32, #tpu.memory_space<vmem>>) attributes {dimension_semantics = [#tpu.dimension_semantics<parallel>], iteration_bounds = array<i64: 2>, scalar_prefetch = 0 : i64, scratch_operands = 1 : i64, tpu.core_type = #tpu.core_type<tc>, window_params = [{transform_indices = @transform_0, window_bounds = array<i64: 2>}, {transform_indices = @transform_1, window_bounds = array<i64: 1, 256, 32>}, {pipeline_mode = #tpu.pipeline_mode<synchronous>, transform_indices = @transform_2, window_bounds = array<i64: 32, 32>}, {pipeline_mode = #tpu.pipeline_mode<synchronous>, transform_indices = @transform_3, window_bounds = array<i64: 1, 32>}, {pipeline_mode = #tpu.pipeline_mode<synchronous>, transform_indices = @transform_4, window_bounds = array<i64: 32, 32>}, {pipeline_mode = #tpu.pipeline_mode<synchronous>, transform_indices = @transform_5, window_bounds = array<i64: 1, 32>}, {pipeline_mode = #tpu.pipeline_mode<synchronous>, transform_indices = @transform_6, window_bounds = array<i64: 32, 8>}, {pipeline_mode = #tpu.pipeline_mode<synchronous>, transform_indices = @transform_7, window_bounds = array<i64: 8, 32>}, {pipeline_mode = #tpu.pipeline_mode<synchronous>, transform_indices = @transform_8, window_bounds = array<i64: 49, 32>}, {pipeline_mode = #tpu.pipeline_mode<synchronous>, transform_indices = @transform_9, window_bounds = array<i64: 1, 32>}, {transform_indices = @transform_10, window_bounds = array<i64: 1, 16, 16, 32>}]} {
    %c0 = arith.constant 0 : index
    %c0_0 = arith.constant 0 : index
    %c0_1 = arith.constant 0 : index
    %0 = vector.load %arg2[%c0, %c0_0, %c0_1] : memref<1x256x32xf32, #tpu.memory_space<vmem>>, vector<1x256x32xf32>
    %1 = vector.shape_cast %0 : vector<1x256x32xf32> to vector<256x32xf32>
    %c0_2 = arith.constant 0 : index
    %c0_3 = arith.constant 0 : index
    %2 = vector.load %arg3[%c0_2, %c0_3] : memref<32x32xf32, #tpu.memory_space<vmem>>, vector<32x32xf32>
    %cst = arith.constant dense<0.000000e+00> : vector<256x32xf32>
    %3 = tpu.matmul %1, %2, %cst {dimension_numbers = #tpu.dot_dimension_numbers<[1], [0], [0], [1], [0, 0, 1, 1], [], []>} : vector<256x32xf32>, vector<32x32xf32>, vector<256x32xf32> -> vector<256x32xf32>
    %c0_4 = arith.constant 0 : index
    %c0_5 = arith.constant 0 : index
    %4 = vector.load %arg4[%c0_4, %c0_5] : memref<1x32xf32, #tpu.memory_space<vmem>>, vector<1x32xf32>
    %5 = vector.broadcast %4 : vector<1x32xf32> to vector<256x32xf32>
    %6 = arith.addf %3, %5 : vector<256x32xf32>
    %c0_6 = arith.constant 0 : index
    %c0_7 = arith.constant 0 : index
    %7 = vector.load %arg5[%c0_6, %c0_7] : memref<32x32xf32, #tpu.memory_space<vmem>>, vector<32x32xf32>
    %cst_8 = arith.constant dense<0.000000e+00> : vector<256x32xf32>
    %8 = tpu.matmul %6, %7, %cst_8 {dimension_numbers = #tpu.dot_dimension_numbers<[1], [0], [0], [1], [0, 0, 1, 1], [], []>} : vector<256x32xf32>, vector<32x32xf32>, vector<256x32xf32> -> vector<256x32xf32>
    %c0_9 = arith.constant 0 : index
    %c0_10 = arith.constant 0 : index
    %9 = vector.load %arg6[%c0_9, %c0_10] : memref<1x32xf32, #tpu.memory_space<vmem>>, vector<1x32xf32>
    %10 = vector.broadcast %9 : vector<1x32xf32> to vector<256x32xf32>
    %11 = arith.addf %8, %10 : vector<256x32xf32>
    %c0_11 = arith.constant 0 : index
    %12 = memref.load %arg1[%c0_11] : memref<2xf32, #tpu.memory_space<smem>>
    %cst_12 = arith.constant 0.000000e+00 : f32
    %13 = vector.broadcast %cst_12 : f32 to vector<256x32xf32>
    %14 = arith.cmpf ogt, %11, %13 : vector<256x32xf32>
    %15 = vector.broadcast %12 : f32 to vector<256x32xf32>
    %16 = arith.mulf %15, %11 : vector<256x32xf32>
    %17 = arith.select %14, %11, %16 : vector<256x32xi1>, vector<256x32xf32>
    %cst_13 = arith.constant dense<0.000000e+00> : vector<32xf32>
    %18 = vector.multi_reduction <add>, %17, %cst_13 [0] : vector<256x32xf32> to vector<32xf32>
    %19 = vector.shape_cast %18 : vector<32xf32> to vector<1x32xf32>
    %cst_14 = arith.constant 3.906250e-03 : f32
    %20 = vector.broadcast %cst_14 : f32 to vector<1x32xf32>
    %21 = arith.mulf %19, %20 : vector<1x32xf32>
    %c0_15 = arith.constant 0 : index
    %c0_16 = arith.constant 0 : index
    %22 = vector.load %arg7[%c0_15, %c0_16] : memref<32x8xf32, #tpu.memory_space<vmem>>, vector<32x8xf32>
    %cst_17 = arith.constant dense<0.000000e+00> : vector<1x8xf32>
    %23 = tpu.matmul %21, %22, %cst_17 {dimension_numbers = #tpu.dot_dimension_numbers<[1], [0], [0], [1], [0, 0, 1, 1], [], []>} : vector<1x32xf32>, vector<32x8xf32>, vector<1x8xf32> -> vector<1x8xf32>
    %c1 = arith.constant 1 : index
    %24 = memref.load %arg1[%c1] : memref<2xf32, #tpu.memory_space<smem>>
    %cst_18 = arith.constant 0.000000e+00 : f32
    %25 = vector.broadcast %cst_18 : f32 to vector<1x8xf32>
    %26 = arith.cmpf ogt, %23, %25 : vector<1x8xf32>
    %27 = vector.broadcast %24 : f32 to vector<1x8xf32>
    %28 = arith.mulf %27, %23 : vector<1x8xf32>
    %29 = arith.select %26, %23, %28 : vector<1x8xi1>, vector<1x8xf32>
    %c0_19 = arith.constant 0 : index
    %c0_20 = arith.constant 0 : index
    %30 = vector.load %arg8[%c0_19, %c0_20] : memref<8x32xf32, #tpu.memory_space<vmem>>, vector<8x32xf32>
    %cst_21 = arith.constant dense<0.000000e+00> : vector<1x32xf32>
    %31 = tpu.matmul %29, %30, %cst_21 {dimension_numbers = #tpu.dot_dimension_numbers<[1], [0], [0], [1], [0, 0, 1, 1], [], []>} : vector<1x8xf32>, vector<8x32xf32>, vector<1x32xf32> -> vector<1x32xf32>
    %32 = arith.negf %31 : vector<1x32xf32>
    %33 = math.exp %32 : vector<1x32xf32>
    %cst_22 = arith.constant 1.000000e+00 : f32
    %34 = vector.broadcast %cst_22 : f32 to vector<1x32xf32>
    %35 = arith.addf %34, %33 : vector<1x32xf32>
    %36 = arith.divf %34, %35 : vector<1x32xf32>
    %37 = vector.broadcast %36 : vector<1x32xf32> to vector<256x32xf32>
    %38 = arith.mulf %17, %37 : vector<256x32xf32>
    %39 = vector.shape_cast %38 : vector<256x32xf32> to vector<16x16x32xf32>
    %cst_23 = arith.constant 0.000000e+00 : f32
    %40 = vector.broadcast %cst_23 : f32 to vector<22x24x32xf32>
    %c0_24 = arith.constant 0 : index
    %c0_25 = arith.constant 0 : index
    %c0_26 = arith.constant 0 : index
    %41 = vector.load %arg12[%c0_24, %c0_25, %c0_26] : memref<22x24x32xf32, #tpu.memory_space<vmem>>, vector<22x24x32xf32>
    tpu.vector_store %arg12[%c0_24, %c0_25, %c0_26], %40 {strides = array<i32>} : memref<22x24x32xf32, #tpu.memory_space<vmem>>, vector<22x24x32xf32>,
    %c3 = arith.constant 3 : index
    %c0_27 = arith.constant 0 : index
    %c0_28 = arith.constant 0 : index
    %42 = vector.load %arg12[%c3, %c0_27, %c0_28] : memref<22x24x32xf32, #tpu.memory_space<vmem>>, vector<16x16x32xf32>
    tpu.vector_store %arg12[%c3, %c0_27, %c0_28], %39 {strides = array<i32>} : memref<22x24x32xf32, #tpu.memory_space<vmem>>, vector<16x16x32xf32>,
    %c0_29 = arith.constant 0 : index
    %c0_30 = arith.constant 0 : index
    %c0_31 = arith.constant 0 : index
    %43 = vector.load %arg12[%c0_29, %c0_30, %c0_31] : memref<22x24x32xf32, #tpu.memory_space<vmem>>, vector<22x24x32xf32>
    %c0_32 = arith.constant 0 : index
    %c0_33 = arith.constant 0 : index
    %44 = vector.load %arg9[%c0_32, %c0_33] : memref<49x32xf32, #tpu.memory_space<vmem>>, vector<49x32xf32>
    %cst_34 = arith.constant 0.000000e+00 : f32
    %45 = vector.broadcast %cst_34 : f32 to vector<16x16x32xf32>
    %c3_i32 = arith.constant 3 : i32
    %46 = tpu.dynamic_rotate %43 by %c3_i32 dim 1 : vector<22x24x32xf32>, i32 -> vector<22x24x32xf32>
    %47 = vector.extract_strided_slice %46 {offsets = [0, 0, 0], sizes = [22, 16, 32], strides = [1, 1, 1]} : vector<22x24x32xf32> to vector<22x16x32xf32>
    %48 = vector.extract_strided_slice %47 {offsets = [0, 0, 0], sizes = [16, 16, 32], strides = [1, 1, 1]} : vector<22x16x32xf32> to vector<16x16x32xf32>
    %49 = vector.extract_strided_slice %44 {offsets = [0, 0], sizes = [1, 32], strides = [1, 1]} : vector<49x32xf32> to vector<1x32xf32>
    %50 = vector.shape_cast %49 : vector<1x32xf32> to vector<32xf32>
    %51 = vector.shape_cast %50 : vector<32xf32> to vector<1x1x32xf32>
    %52 = vector.broadcast %51 : vector<1x1x32xf32> to vector<16x16x32xf32>
    %53 = arith.mulf %48, %52 : vector<16x16x32xf32>
    %54 = arith.addf %45, %53 : vector<16x16x32xf32>
    %55 = vector.extract_strided_slice %47 {offsets = [1, 0, 0], sizes = [16, 16, 32], strides = [1, 1, 1]} : vector<22x16x32xf32> to vector<16x16x32xf32>
    %56 = vector.extract_strided_slice %44 {offsets = [7, 0], sizes = [1, 32], strides = [1, 1]} : vector<49x32xf32> to vector<1x32xf32>
    %57 = vector.shape_cast %56 : vector<1x32xf32> to vector<32xf32>
    %58 = vector.shape_cast %57 : vector<32xf32> to vector<1x1x32xf32>
    %59 = vector.broadcast %58 : vector<1x1x32xf32> to vector<16x16x32xf32>
    %60 = arith.mulf %55, %59 : vector<16x16x32xf32>
    %61 = arith.addf %54, %60 : vector<16x16x32xf32>
    %62 = vector.extract_strided_slice %47 {offsets = [2, 0, 0], sizes = [16, 16, 32], strides = [1, 1, 1]} : vector<22x16x32xf32> to vector<16x16x32xf32>
    %63 = vector.extract_strided_slice %44 {offsets = [14, 0], sizes = [1, 32], strides = [1, 1]} : vector<49x32xf32> to vector<1x32xf32>
    %64 = vector.shape_cast %63 : vector<1x32xf32> to vector<32xf32>
    %65 = vector.shape_cast %64 : vector<32xf32> to vector<1x1x32xf32>
    %66 = vector.broadcast %65 : vector<1x1x32xf32> to vector<16x16x32xf32>
    %67 = arith.mulf %62, %66 : vector<16x16x32xf32>
    %68 = arith.addf %61, %67 : vector<16x16x32xf32>
    %69 = vector.extract_strided_slice %47 {offsets = [3, 0, 0], sizes = [16, 16, 32], strides = [1, 1, 1]} : vector<22x16x32xf32> to vector<16x16x32xf32>
    %70 = vector.extract_strided_slice %44 {offsets = [21, 0], sizes = [1, 32], strides = [1, 1]} : vector<49x32xf32> to vector<1x32xf32>
    %71 = vector.shape_cast %70 : vector<1x32xf32> to vector<32xf32>
    %72 = vector.shape_cast %71 : vector<32xf32> to vector<1x1x32xf32>
    %73 = vector.broadcast %72 : vector<1x1x32xf32> to vector<16x16x32xf32>
    %74 = arith.mulf %69, %73 : vector<16x16x32xf32>
    %75 = arith.addf %68, %74 : vector<16x16x32xf32>
    %76 = vector.extract_strided_slice %47 {offsets = [4, 0, 0], sizes = [16, 16, 32], strides = [1, 1, 1]} : vector<22x16x32xf32> to vector<16x16x32xf32>
    %77 = vector.extract_strided_slice %44 {offsets = [28, 0], sizes = [1, 32], strides = [1, 1]} : vector<49x32xf32> to vector<1x32xf32>
    %78 = vector.shape_cast %77 : vector<1x32xf32> to vector<32xf32>
    %79 = vector.shape_cast %78 : vector<32xf32> to vector<1x1x32xf32>
    %80 = vector.broadcast %79 : vector<1x1x32xf32> to vector<16x16x32xf32>
    %81 = arith.mulf %76, %80 : vector<16x16x32xf32>
    %82 = arith.addf %75, %81 : vector<16x16x32xf32>
    %83 = vector.extract_strided_slice %47 {offsets = [5, 0, 0], sizes = [16, 16, 32], strides = [1, 1, 1]} : vector<22x16x32xf32> to vector<16x16x32xf32>
    %84 = vector.extract_strided_slice %44 {offsets = [35, 0], sizes = [1, 32], strides = [1, 1]} : vector<49x32xf32> to vector<1x32xf32>
    %85 = vector.shape_cast %84 : vector<1x32xf32> to vector<32xf32>
    %86 = vector.shape_cast %85 : vector<32xf32> to vector<1x1x32xf32>
    %87 = vector.broadcast %86 : vector<1x1x32xf32> to vector<16x16x32xf32>
    %88 = arith.mulf %83, %87 : vector<16x16x32xf32>
    %89 = arith.addf %82, %88 : vector<16x16x32xf32>
    %90 = vector.extract_strided_slice %47 {offsets = [6, 0, 0], sizes = [16, 16, 32], strides = [1, 1, 1]} : vector<22x16x32xf32> to vector<16x16x32xf32>
    %91 = vector.extract_strided_slice %44 {offsets = [42, 0], sizes = [1, 32], strides = [1, 1]} : vector<49x32xf32> to vector<1x32xf32>
    %92 = vector.shape_cast %91 : vector<1x32xf32> to vector<32xf32>
    %93 = vector.shape_cast %92 : vector<32xf32> to vector<1x1x32xf32>
    %94 = vector.broadcast %93 : vector<1x1x32xf32> to vector<16x16x32xf32>
    %95 = arith.mulf %90, %94 : vector<16x16x32xf32>
    %96 = arith.addf %89, %95 : vector<16x16x32xf32>
    %c2_i32 = arith.constant 2 : i32
    %97 = tpu.dynamic_rotate %43 by %c2_i32 dim 1 : vector<22x24x32xf32>, i32 -> vector<22x24x32xf32>
    %98 = vector.extract_strided_slice %97 {offsets = [0, 0, 0], sizes = [22, 16, 32], strides = [1, 1, 1]} : vector<22x24x32xf32> to vector<22x16x32xf32>
    %99 = vector.extract_strided_slice %98 {offsets = [0, 0, 0], sizes = [16, 16, 32], strides = [1, 1, 1]} : vector<22x16x32xf32> to vector<16x16x32xf32>
    %100 = vector.extract_strided_slice %44 {offsets = [1, 0], sizes = [1, 32], strides = [1, 1]} : vector<49x32xf32> to vector<1x32xf32>
    %101 = vector.shape_cast %100 : vector<1x32xf32> to vector<32xf32>
    %102 = vector.shape_cast %101 : vector<32xf32> to vector<1x1x32xf32>
    %103 = vector.broadcast %102 : vector<1x1x32xf32> to vector<16x16x32xf32>
    %104 = arith.mulf %99, %103 : vector<16x16x32xf32>
    %105 = arith.addf %96, %104 : vector<16x16x32xf32>
    %106 = vector.extract_strided_slice %98 {offsets = [1, 0, 0], sizes = [16, 16, 32], strides = [1, 1, 1]} : vector<22x16x32xf32> to vector<16x16x32xf32>
    %107 = vector.extract_strided_slice %44 {offsets = [8, 0], sizes = [1, 32], strides = [1, 1]} : vector<49x32xf32> to vector<1x32xf32>
    %108 = vector.shape_cast %107 : vector<1x32xf32> to vector<32xf32>
    %109 = vector.shape_cast %108 : vector<32xf32> to vector<1x1x32xf32>
    %110 = vector.broadcast %109 : vector<1x1x32xf32> to vector<16x16x32xf32>
    %111 = arith.mulf %106, %110 : vector<16x16x32xf32>
    %112 = arith.addf %105, %111 : vector<16x16x32xf32>
    %113 = vector.extract_strided_slice %98 {offsets = [2, 0, 0], sizes = [16, 16, 32], strides = [1, 1, 1]} : vector<22x16x32xf32> to vector<16x16x32xf32>
    %114 = vector.extract_strided_slice %44 {offsets = [15, 0], sizes = [1, 32], strides = [1, 1]} : vector<49x32xf32> to vector<1x32xf32>
    %115 = vector.shape_cast %114 : vector<1x32xf32> to vector<32xf32>
    %116 = vector.shape_cast %115 : vector<32xf32> to vector<1x1x32xf32>
    %117 = vector.broadcast %116 : vector<1x1x32xf32> to vector<16x16x32xf32>
    %118 = arith.mulf %113, %117 : vector<16x16x32xf32>
    %119 = arith.addf %112, %118 : vector<16x16x32xf32>
    %120 = vector.extract_strided_slice %98 {offsets = [3, 0, 0], sizes = [16, 16, 32], strides = [1, 1, 1]} : vector<22x16x32xf32> to vector<16x16x32xf32>
    %121 = vector.extract_strided_slice %44 {offsets = [22, 0], sizes = [1, 32], strides = [1, 1]} : vector<49x32xf32> to vector<1x32xf32>
    %122 = vector.shape_cast %121 : vector<1x32xf32> to vector<32xf32>
    %123 = vector.shape_cast %122 : vector<32xf32> to vector<1x1x32xf32>
    %124 = vector.broadcast %123 : vector<1x1x32xf32> to vector<16x16x32xf32>
    %125 = arith.mulf %120, %124 : vector<16x16x32xf32>
    %126 = arith.addf %119, %125 : vector<16x16x32xf32>
    %127 = vector.extract_strided_slice %98 {offsets = [4, 0, 0], sizes = [16, 16, 32], strides = [1, 1, 1]} : vector<22x16x32xf32> to vector<16x16x32xf32>
    %128 = vector.extract_strided_slice %44 {offsets = [29, 0], sizes = [1, 32], strides = [1, 1]} : vector<49x32xf32> to vector<1x32xf32>
    %129 = vector.shape_cast %128 : vector<1x32xf32> to vector<32xf32>
    %130 = vector.shape_cast %129 : vector<32xf32> to vector<1x1x32xf32>
    %131 = vector.broadcast %130 : vector<1x1x32xf32> to vector<16x16x32xf32>
    %132 = arith.mulf %127, %131 : vector<16x16x32xf32>
    %133 = arith.addf %126, %132 : vector<16x16x32xf32>
    %134 = vector.extract_strided_slice %98 {offsets = [5, 0, 0], sizes = [16, 16, 32], strides = [1, 1, 1]} : vector<22x16x32xf32> to vector<16x16x32xf32>
    %135 = vector.extract_strided_slice %44 {offsets = [36, 0], sizes = [1, 32], strides = [1, 1]} : vector<49x32xf32> to vector<1x32xf32>
    %136 = vector.shape_cast %135 : vector<1x32xf32> to vector<32xf32>
    %137 = vector.shape_cast %136 : vector<32xf32> to vector<1x1x32xf32>
    %138 = vector.broadcast %137 : vector<1x1x32xf32> to vector<16x16x32xf32>
    %139 = arith.mulf %134, %138 : vector<16x16x32xf32>
    %140 = arith.addf %133, %139 : vector<16x16x32xf32>
    %141 = vector.extract_strided_slice %98 {offsets = [6, 0, 0], sizes = [16, 16, 32], strides = [1, 1, 1]} : vector<22x16x32xf32> to vector<16x16x32xf32>
    %142 = vector.extract_strided_slice %44 {offsets = [43, 0], sizes = [1, 32], strides = [1, 1]} : vector<49x32xf32> to vector<1x32xf32>
    %143 = vector.shape_cast %142 : vector<1x32xf32> to vector<32xf32>
    %144 = vector.shape_cast %143 : vector<32xf32> to vector<1x1x32xf32>
    %145 = vector.broadcast %144 : vector<1x1x32xf32> to vector<16x16x32xf32>
    %146 = arith.mulf %141, %145 : vector<16x16x32xf32>
    %147 = arith.addf %140, %146 : vector<16x16x32xf32>
    %c1_i32 = arith.constant 1 : i32
    %148 = tpu.dynamic_rotate %43 by %c1_i32 dim 1 : vector<22x24x32xf32>, i32 -> vector<22x24x32xf32>
    %149 = vector.extract_strided_slice %148 {offsets = [0, 0, 0], sizes = [22, 16, 32], strides = [1, 1, 1]} : vector<22x24x32xf32> to vector<22x16x32xf32>
    %150 = vector.extract_strided_slice %149 {offsets = [0, 0, 0], sizes = [16, 16, 32], strides = [1, 1, 1]} : vector<22x16x32xf32> to vector<16x16x32xf32>
    %151 = vector.extract_strided_slice %44 {offsets = [2, 0], sizes = [1, 32], strides = [1, 1]} : vector<49x32xf32> to vector<1x32xf32>
    %152 = vector.shape_cast %151 : vector<1x32xf32> to vector<32xf32>
    %153 = vector.shape_cast %152 : vector<32xf32> to vector<1x1x32xf32>
    %154 = vector.broadcast %153 : vector<1x1x32xf32> to vector<16x16x32xf32>
    %155 = arith.mulf %150, %154 : vector<16x16x32xf32>
    %156 = arith.addf %147, %155 : vector<16x16x32xf32>
    %157 = vector.extract_strided_slice %149 {offsets = [1, 0, 0], sizes = [16, 16, 32], strides = [1, 1, 1]} : vector<22x16x32xf32> to vector<16x16x32xf32>
    %158 = vector.extract_strided_slice %44 {offsets = [9, 0], sizes = [1, 32], strides = [1, 1]} : vector<49x32xf32> to vector<1x32xf32>
    %159 = vector.shape_cast %158 : vector<1x32xf32> to vector<32xf32>
    %160 = vector.shape_cast %159 : vector<32xf32> to vector<1x1x32xf32>
    %161 = vector.broadcast %160 : vector<1x1x32xf32> to vector<16x16x32xf32>
    %162 = arith.mulf %157, %161 : vector<16x16x32xf32>
    %163 = arith.addf %156, %162 : vector<16x16x32xf32>
    %164 = vector.extract_strided_slice %149 {offsets = [2, 0, 0], sizes = [16, 16, 32], strides = [1, 1, 1]} : vector<22x16x32xf32> to vector<16x16x32xf32>
    %165 = vector.extract_strided_slice %44 {offsets = [16, 0], sizes = [1, 32], strides = [1, 1]} : vector<49x32xf32> to vector<1x32xf32>
    %166 = vector.shape_cast %165 : vector<1x32xf32> to vector<32xf32>
    %167 = vector.shape_cast %166 : vector<32xf32> to vector<1x1x32xf32>
    %168 = vector.broadcast %167 : vector<1x1x32xf32> to vector<16x16x32xf32>
    %169 = arith.mulf %164, %168 : vector<16x16x32xf32>
    %170 = arith.addf %163, %169 : vector<16x16x32xf32>
    %171 = vector.extract_strided_slice %149 {offsets = [3, 0, 0], sizes = [16, 16, 32], strides = [1, 1, 1]} : vector<22x16x32xf32> to vector<16x16x32xf32>
    %172 = vector.extract_strided_slice %44 {offsets = [23, 0], sizes = [1, 32], strides = [1, 1]} : vector<49x32xf32> to vector<1x32xf32>
    %173 = vector.shape_cast %172 : vector<1x32xf32> to vector<32xf32>
    %174 = vector.shape_cast %173 : vector<32xf32> to vector<1x1x32xf32>
    %175 = vector.broadcast %174 : vector<1x1x32xf32> to vector<16x16x32xf32>
    %176 = arith.mulf %171, %175 : vector<16x16x32xf32>
    %177 = arith.addf %170, %176 : vector<16x16x32xf32>
    %178 = vector.extract_strided_slice %149 {offsets = [4, 0, 0], sizes = [16, 16, 32], strides = [1, 1, 1]} : vector<22x16x32xf32> to vector<16x16x32xf32>
    %179 = vector.extract_strided_slice %44 {offsets = [30, 0], sizes = [1, 32], strides = [1, 1]} : vector<49x32xf32> to vector<1x32xf32>
    %180 = vector.shape_cast %179 : vector<1x32xf32> to vector<32xf32>
    %181 = vector.shape_cast %180 : vector<32xf32> to vector<1x1x32xf32>
    %182 = vector.broadcast %181 : vector<1x1x32xf32> to vector<16x16x32xf32>
    %183 = arith.mulf %178, %182 : vector<16x16x32xf32>
    %184 = arith.addf %177, %183 : vector<16x16x32xf32>
    %185 = vector.extract_strided_slice %149 {offsets = [5, 0, 0], sizes = [16, 16, 32], strides = [1, 1, 1]} : vector<22x16x32xf32> to vector<16x16x32xf32>
    %186 = vector.extract_strided_slice %44 {offsets = [37, 0], sizes = [1, 32], strides = [1, 1]} : vector<49x32xf32> to vector<1x32xf32>
    %187 = vector.shape_cast %186 : vector<1x32xf32> to vector<32xf32>
    %188 = vector.shape_cast %187 : vector<32xf32> to vector<1x1x32xf32>
    %189 = vector.broadcast %188 : vector<1x1x32xf32> to vector<16x16x32xf32>
    %190 = arith.mulf %185, %189 : vector<16x16x32xf32>
    %191 = arith.addf %184, %190 : vector<16x16x32xf32>
    %192 = vector.extract_strided_slice %149 {offsets = [6, 0, 0], sizes = [16, 16, 32], strides = [1, 1, 1]} : vector<22x16x32xf32> to vector<16x16x32xf32>
    %193 = vector.extract_strided_slice %44 {offsets = [44, 0], sizes = [1, 32], strides = [1, 1]} : vector<49x32xf32> to vector<1x32xf32>
    %194 = vector.shape_cast %193 : vector<1x32xf32> to vector<32xf32>
    %195 = vector.shape_cast %194 : vector<32xf32> to vector<1x1x32xf32>
    %196 = vector.broadcast %195 : vector<1x1x32xf32> to vector<16x16x32xf32>
    %197 = arith.mulf %192, %196 : vector<16x16x32xf32>
    %198 = arith.addf %191, %197 : vector<16x16x32xf32>
    %199 = vector.extract_strided_slice %43 {offsets = [0, 0, 0], sizes = [22, 16, 32], strides = [1, 1, 1]} : vector<22x24x32xf32> to vector<22x16x32xf32>
    %200 = vector.extract_strided_slice %199 {offsets = [0, 0, 0], sizes = [16, 16, 32], strides = [1, 1, 1]} : vector<22x16x32xf32> to vector<16x16x32xf32>
    %201 = vector.extract_strided_slice %44 {offsets = [3, 0], sizes = [1, 32], strides = [1, 1]} : vector<49x32xf32> to vector<1x32xf32>
    %202 = vector.shape_cast %201 : vector<1x32xf32> to vector<32xf32>
    %203 = vector.shape_cast %202 : vector<32xf32> to vector<1x1x32xf32>
    %204 = vector.broadcast %203 : vector<1x1x32xf32> to vector<16x16x32xf32>
    %205 = arith.mulf %200, %204 : vector<16x16x32xf32>
    %206 = arith.addf %198, %205 : vector<16x16x32xf32>
    %207 = vector.extract_strided_slice %199 {offsets = [1, 0, 0], sizes = [16, 16, 32], strides = [1, 1, 1]} : vector<22x16x32xf32> to vector<16x16x32xf32>
    %208 = vector.extract_strided_slice %44 {offsets = [10, 0], sizes = [1, 32], strides = [1, 1]} : vector<49x32xf32> to vector<1x32xf32>
    %209 = vector.shape_cast %208 : vector<1x32xf32> to vector<32xf32>
    %210 = vector.shape_cast %209 : vector<32xf32> to vector<1x1x32xf32>
    %211 = vector.broadcast %210 : vector<1x1x32xf32> to vector<16x16x32xf32>
    %212 = arith.mulf %207, %211 : vector<16x16x32xf32>
    %213 = arith.addf %206, %212 : vector<16x16x32xf32>
    %214 = vector.extract_strided_slice %199 {offsets = [2, 0, 0], sizes = [16, 16, 32], strides = [1, 1, 1]} : vector<22x16x32xf32> to vector<16x16x32xf32>
    %215 = vector.extract_strided_slice %44 {offsets = [17, 0], sizes = [1, 32], strides = [1, 1]} : vector<49x32xf32> to vector<1x32xf32>
    %216 = vector.shape_cast %215 : vector<1x32xf32> to vector<32xf32>
    %217 = vector.shape_cast %216 : vector<32xf32> to vector<1x1x32xf32>
    %218 = vector.broadcast %217 : vector<1x1x32xf32> to vector<16x16x32xf32>
    %219 = arith.mulf %214, %218 : vector<16x16x32xf32>
    %220 = arith.addf %213, %219 : vector<16x16x32xf32>
    %221 = vector.extract_strided_slice %199 {offsets = [3, 0, 0], sizes = [16, 16, 32], strides = [1, 1, 1]} : vector<22x16x32xf32> to vector<16x16x32xf32>
    %222 = vector.extract_strided_slice %44 {offsets = [24, 0], sizes = [1, 32], strides = [1, 1]} : vector<49x32xf32> to vector<1x32xf32>
    %223 = vector.shape_cast %222 : vector<1x32xf32> to vector<32xf32>
    %224 = vector.shape_cast %223 : vector<32xf32> to vector<1x1x32xf32>
    %225 = vector.broadcast %224 : vector<1x1x32xf32> to vector<16x16x32xf32>
    %226 = arith.mulf %221, %225 : vector<16x16x32xf32>
    %227 = arith.addf %220, %226 : vector<16x16x32xf32>
    %228 = vector.extract_strided_slice %199 {offsets = [4, 0, 0], sizes = [16, 16, 32], strides = [1, 1, 1]} : vector<22x16x32xf32> to vector<16x16x32xf32>
    %229 = vector.extract_strided_slice %44 {offsets = [31, 0], sizes = [1, 32], strides = [1, 1]} : vector<49x32xf32> to vector<1x32xf32>
    %230 = vector.shape_cast %229 : vector<1x32xf32> to vector<32xf32>
    %231 = vector.shape_cast %230 : vector<32xf32> to vector<1x1x32xf32>
    %232 = vector.broadcast %231 : vector<1x1x32xf32> to vector<16x16x32xf32>
    %233 = arith.mulf %228, %232 : vector<16x16x32xf32>
    %234 = arith.addf %227, %233 : vector<16x16x32xf32>
    %235 = vector.extract_strided_slice %199 {offsets = [5, 0, 0], sizes = [16, 16, 32], strides = [1, 1, 1]} : vector<22x16x32xf32> to vector<16x16x32xf32>
    %236 = vector.extract_strided_slice %44 {offsets = [38, 0], sizes = [1, 32], strides = [1, 1]} : vector<49x32xf32> to vector<1x32xf32>
    %237 = vector.shape_cast %236 : vector<1x32xf32> to vector<32xf32>
    %238 = vector.shape_cast %237 : vector<32xf32> to vector<1x1x32xf32>
    %239 = vector.broadcast %238 : vector<1x1x32xf32> to vector<16x16x32xf32>
    %240 = arith.mulf %235, %239 : vector<16x16x32xf32>
    %241 = arith.addf %234, %240 : vector<16x16x32xf32>
    %242 = vector.extract_strided_slice %199 {offsets = [6, 0, 0], sizes = [16, 16, 32], strides = [1, 1, 1]} : vector<22x16x32xf32> to vector<16x16x32xf32>
    %243 = vector.extract_strided_slice %44 {offsets = [45, 0], sizes = [1, 32], strides = [1, 1]} : vector<49x32xf32> to vector<1x32xf32>
    %244 = vector.shape_cast %243 : vector<1x32xf32> to vector<32xf32>
    %245 = vector.shape_cast %244 : vector<32xf32> to vector<1x1x32xf32>
    %246 = vector.broadcast %245 : vector<1x1x32xf32> to vector<16x16x32xf32>
    %247 = arith.mulf %242, %246 : vector<16x16x32xf32>
    %248 = arith.addf %241, %247 : vector<16x16x32xf32>
    %c23_i32 = arith.constant 23 : i32
    %249 = tpu.dynamic_rotate %43 by %c23_i32 dim 1 : vector<22x24x32xf32>, i32 -> vector<22x24x32xf32>
    %250 = vector.extract_strided_slice %249 {offsets = [0, 0, 0], sizes = [22, 16, 32], strides = [1, 1, 1]} : vector<22x24x32xf32> to vector<22x16x32xf32>
    %251 = vector.extract_strided_slice %250 {offsets = [0, 0, 0], sizes = [16, 16, 32], strides = [1, 1, 1]} : vector<22x16x32xf32> to vector<16x16x32xf32>
    %252 = vector.extract_strided_slice %44 {offsets = [4, 0], sizes = [1, 32], strides = [1, 1]} : vector<49x32xf32> to vector<1x32xf32>
    %253 = vector.shape_cast %252 : vector<1x32xf32> to vector<32xf32>
    %254 = vector.shape_cast %253 : vector<32xf32> to vector<1x1x32xf32>
    %255 = vector.broadcast %254 : vector<1x1x32xf32> to vector<16x16x32xf32>
    %256 = arith.mulf %251, %255 : vector<16x16x32xf32>
    %257 = arith.addf %248, %256 : vector<16x16x32xf32>
    %258 = vector.extract_strided_slice %250 {offsets = [1, 0, 0], sizes = [16, 16, 32], strides = [1, 1, 1]} : vector<22x16x32xf32> to vector<16x16x32xf32>
    %259 = vector.extract_strided_slice %44 {offsets = [11, 0], sizes = [1, 32], strides = [1, 1]} : vector<49x32xf32> to vector<1x32xf32>
    %260 = vector.shape_cast %259 : vector<1x32xf32> to vector<32xf32>
    %261 = vector.shape_cast %260 : vector<32xf32> to vector<1x1x32xf32>
    %262 = vector.broadcast %261 : vector<1x1x32xf32> to vector<16x16x32xf32>
    %263 = arith.mulf %258, %262 : vector<16x16x32xf32>
    %264 = arith.addf %257, %263 : vector<16x16x32xf32>
    %265 = vector.extract_strided_slice %250 {offsets = [2, 0, 0], sizes = [16, 16, 32], strides = [1, 1, 1]} : vector<22x16x32xf32> to vector<16x16x32xf32>
    %266 = vector.extract_strided_slice %44 {offsets = [18, 0], sizes = [1, 32], strides = [1, 1]} : vector<49x32xf32> to vector<1x32xf32>
    %267 = vector.shape_cast %266 : vector<1x32xf32> to vector<32xf32>
    %268 = vector.shape_cast %267 : vector<32xf32> to vector<1x1x32xf32>
    %269 = vector.broadcast %268 : vector<1x1x32xf32> to vector<16x16x32xf32>
    %270 = arith.mulf %265, %269 : vector<16x16x32xf32>
    %271 = arith.addf %264, %270 : vector<16x16x32xf32>
    %272 = vector.extract_strided_slice %250 {offsets = [3, 0, 0], sizes = [16, 16, 32], strides = [1, 1, 1]} : vector<22x16x32xf32> to vector<16x16x32xf32>
    %273 = vector.extract_strided_slice %44 {offsets = [25, 0], sizes = [1, 32], strides = [1, 1]} : vector<49x32xf32> to vector<1x32xf32>
    %274 = vector.shape_cast %273 : vector<1x32xf32> to vector<32xf32>
    %275 = vector.shape_cast %274 : vector<32xf32> to vector<1x1x32xf32>
    %276 = vector.broadcast %275 : vector<1x1x32xf32> to vector<16x16x32xf32>
    %277 = arith.mulf %272, %276 : vector<16x16x32xf32>
    %278 = arith.addf %271, %277 : vector<16x16x32xf32>
    %279 = vector.extract_strided_slice %250 {offsets = [4, 0, 0], sizes = [16, 16, 32], strides = [1, 1, 1]} : vector<22x16x32xf32> to vector<16x16x32xf32>
    %280 = vector.extract_strided_slice %44 {offsets = [32, 0], sizes = [1, 32], strides = [1, 1]} : vector<49x32xf32> to vector<1x32xf32>
    %281 = vector.shape_cast %280 : vector<1x32xf32> to vector<32xf32>
    %282 = vector.shape_cast %281 : vector<32xf32> to vector<1x1x32xf32>
    %283 = vector.broadcast %282 : vector<1x1x32xf32> to vector<16x16x32xf32>
    %284 = arith.mulf %279, %283 : vector<16x16x32xf32>
    %285 = arith.addf %278, %284 : vector<16x16x32xf32>
    %286 = vector.extract_strided_slice %250 {offsets = [5, 0, 0], sizes = [16, 16, 32], strides = [1, 1, 1]} : vector<22x16x32xf32> to vector<16x16x32xf32>
    %287 = vector.extract_strided_slice %44 {offsets = [39, 0], sizes = [1, 32], strides = [1, 1]} : vector<49x32xf32> to vector<1x32xf32>
    %288 = vector.shape_cast %287 : vector<1x32xf32> to vector<32xf32>
    %289 = vector.shape_cast %288 : vector<32xf32> to vector<1x1x32xf32>
    %290 = vector.broadcast %289 : vector<1x1x32xf32> to vector<16x16x32xf32>
    %291 = arith.mulf %286, %290 : vector<16x16x32xf32>
    %292 = arith.addf %285, %291 : vector<16x16x32xf32>
    %293 = vector.extract_strided_slice %250 {offsets = [6, 0, 0], sizes = [16, 16, 32], strides = [1, 1, 1]} : vector<22x16x32xf32> to vector<16x16x32xf32>
    %294 = vector.extract_strided_slice %44 {offsets = [46, 0], sizes = [1, 32], strides = [1, 1]} : vector<49x32xf32> to vector<1x32xf32>
    %295 = vector.shape_cast %294 : vector<1x32xf32> to vector<32xf32>
    %296 = vector.shape_cast %295 : vector<32xf32> to vector<1x1x32xf32>
    %297 = vector.broadcast %296 : vector<1x1x32xf32> to vector<16x16x32xf32>
    %298 = arith.mulf %293, %297 : vector<16x16x32xf32>
    %299 = arith.addf %292, %298 : vector<16x16x32xf32>
    %c22_i32 = arith.constant 22 : i32
    %300 = tpu.dynamic_rotate %43 by %c22_i32 dim 1 : vector<22x24x32xf32>, i32 -> vector<22x24x32xf32>
    %301 = vector.extract_strided_slice %300 {offsets = [0, 0, 0], sizes = [22, 16, 32], strides = [1, 1, 1]} : vector<22x24x32xf32> to vector<22x16x32xf32>
    %302 = vector.extract_strided_slice %301 {offsets = [0, 0, 0], sizes = [16, 16, 32], strides = [1, 1, 1]} : vector<22x16x32xf32> to vector<16x16x32xf32>
    %303 = vector.extract_strided_slice %44 {offsets = [5, 0], sizes = [1, 32], strides = [1, 1]} : vector<49x32xf32> to vector<1x32xf32>
    %304 = vector.shape_cast %303 : vector<1x32xf32> to vector<32xf32>
    %305 = vector.shape_cast %304 : vector<32xf32> to vector<1x1x32xf32>
    %306 = vector.broadcast %305 : vector<1x1x32xf32> to vector<16x16x32xf32>
    %307 = arith.mulf %302, %306 : vector<16x16x32xf32>
    %308 = arith.addf %299, %307 : vector<16x16x32xf32>
    %309 = vector.extract_strided_slice %301 {offsets = [1, 0, 0], sizes = [16, 16, 32], strides = [1, 1, 1]} : vector<22x16x32xf32> to vector<16x16x32xf32>
    %310 = vector.extract_strided_slice %44 {offsets = [12, 0], sizes = [1, 32], strides = [1, 1]} : vector<49x32xf32> to vector<1x32xf32>
    %311 = vector.shape_cast %310 : vector<1x32xf32> to vector<32xf32>
    %312 = vector.shape_cast %311 : vector<32xf32> to vector<1x1x32xf32>
    %313 = vector.broadcast %312 : vector<1x1x32xf32> to vector<16x16x32xf32>
    %314 = arith.mulf %309, %313 : vector<16x16x32xf32>
    %315 = arith.addf %308, %314 : vector<16x16x32xf32>
    %316 = vector.extract_strided_slice %301 {offsets = [2, 0, 0], sizes = [16, 16, 32], strides = [1, 1, 1]} : vector<22x16x32xf32> to vector<16x16x32xf32>
    %317 = vector.extract_strided_slice %44 {offsets = [19, 0], sizes = [1, 32], strides = [1, 1]} : vector<49x32xf32> to vector<1x32xf32>
    %318 = vector.shape_cast %317 : vector<1x32xf32> to vector<32xf32>
    %319 = vector.shape_cast %318 : vector<32xf32> to vector<1x1x32xf32>
    %320 = vector.broadcast %319 : vector<1x1x32xf32> to vector<16x16x32xf32>
    %321 = arith.mulf %316, %320 : vector<16x16x32xf32>
    %322 = arith.addf %315, %321 : vector<16x16x32xf32>
    %323 = vector.extract_strided_slice %301 {offsets = [3, 0, 0], sizes = [16, 16, 32], strides = [1, 1, 1]} : vector<22x16x32xf32> to vector<16x16x32xf32>
    %324 = vector.extract_strided_slice %44 {offsets = [26, 0], sizes = [1, 32], strides = [1, 1]} : vector<49x32xf32> to vector<1x32xf32>
    %325 = vector.shape_cast %324 : vector<1x32xf32> to vector<32xf32>
    %326 = vector.shape_cast %325 : vector<32xf32> to vector<1x1x32xf32>
    %327 = vector.broadcast %326 : vector<1x1x32xf32> to vector<16x16x32xf32>
    %328 = arith.mulf %323, %327 : vector<16x16x32xf32>
    %329 = arith.addf %322, %328 : vector<16x16x32xf32>
    %330 = vector.extract_strided_slice %301 {offsets = [4, 0, 0], sizes = [16, 16, 32], strides = [1, 1, 1]} : vector<22x16x32xf32> to vector<16x16x32xf32>
    %331 = vector.extract_strided_slice %44 {offsets = [33, 0], sizes = [1, 32], strides = [1, 1]} : vector<49x32xf32> to vector<1x32xf32>
    %332 = vector.shape_cast %331 : vector<1x32xf32> to vector<32xf32>
    %333 = vector.shape_cast %332 : vector<32xf32> to vector<1x1x32xf32>
    %334 = vector.broadcast %333 : vector<1x1x32xf32> to vector<16x16x32xf32>
    %335 = arith.mulf %330, %334 : vector<16x16x32xf32>
    %336 = arith.addf %329, %335 : vector<16x16x32xf32>
    %337 = vector.extract_strided_slice %301 {offsets = [5, 0, 0], sizes = [16, 16, 32], strides = [1, 1, 1]} : vector<22x16x32xf32> to vector<16x16x32xf32>
    %338 = vector.extract_strided_slice %44 {offsets = [40, 0], sizes = [1, 32], strides = [1, 1]} : vector<49x32xf32> to vector<1x32xf32>
    %339 = vector.shape_cast %338 : vector<1x32xf32> to vector<32xf32>
    %340 = vector.shape_cast %339 : vector<32xf32> to vector<1x1x32xf32>
    %341 = vector.broadcast %340 : vector<1x1x32xf32> to vector<16x16x32xf32>
    %342 = arith.mulf %337, %341 : vector<16x16x32xf32>
    %343 = arith.addf %336, %342 : vector<16x16x32xf32>
    %344 = vector.extract_strided_slice %301 {offsets = [6, 0, 0], sizes = [16, 16, 32], strides = [1, 1, 1]} : vector<22x16x32xf32> to vector<16x16x32xf32>
    %345 = vector.extract_strided_slice %44 {offsets = [47, 0], sizes = [1, 32], strides = [1, 1]} : vector<49x32xf32> to vector<1x32xf32>
    %346 = vector.shape_cast %345 : vector<1x32xf32> to vector<32xf32>
    %347 = vector.shape_cast %346 : vector<32xf32> to vector<1x1x32xf32>
    %348 = vector.broadcast %347 : vector<1x1x32xf32> to vector<16x16x32xf32>
    %349 = arith.mulf %344, %348 : vector<16x16x32xf32>
    %350 = arith.addf %343, %349 : vector<16x16x32xf32>
    %c21_i32 = arith.constant 21 : i32
    %351 = tpu.dynamic_rotate %43 by %c21_i32 dim 1 : vector<22x24x32xf32>, i32 -> vector<22x24x32xf32>
    %352 = vector.extract_strided_slice %351 {offsets = [0, 0, 0], sizes = [22, 16, 32], strides = [1, 1, 1]} : vector<22x24x32xf32> to vector<22x16x32xf32>
    %353 = vector.extract_strided_slice %352 {offsets = [0, 0, 0], sizes = [16, 16, 32], strides = [1, 1, 1]} : vector<22x16x32xf32> to vector<16x16x32xf32>
    %354 = vector.extract_strided_slice %44 {offsets = [6, 0], sizes = [1, 32], strides = [1, 1]} : vector<49x32xf32> to vector<1x32xf32>
    %355 = vector.shape_cast %354 : vector<1x32xf32> to vector<32xf32>
    %356 = vector.shape_cast %355 : vector<32xf32> to vector<1x1x32xf32>
    %357 = vector.broadcast %356 : vector<1x1x32xf32> to vector<16x16x32xf32>
    %358 = arith.mulf %353, %357 : vector<16x16x32xf32>
    %359 = arith.addf %350, %358 : vector<16x16x32xf32>
    %360 = vector.extract_strided_slice %352 {offsets = [1, 0, 0], sizes = [16, 16, 32], strides = [1, 1, 1]} : vector<22x16x32xf32> to vector<16x16x32xf32>
    %361 = vector.extract_strided_slice %44 {offsets = [13, 0], sizes = [1, 32], strides = [1, 1]} : vector<49x32xf32> to vector<1x32xf32>
    %362 = vector.shape_cast %361 : vector<1x32xf32> to vector<32xf32>
    %363 = vector.shape_cast %362 : vector<32xf32> to vector<1x1x32xf32>
    %364 = vector.broadcast %363 : vector<1x1x32xf32> to vector<16x16x32xf32>
    %365 = arith.mulf %360, %364 : vector<16x16x32xf32>
    %366 = arith.addf %359, %365 : vector<16x16x32xf32>
    %367 = vector.extract_strided_slice %352 {offsets = [2, 0, 0], sizes = [16, 16, 32], strides = [1, 1, 1]} : vector<22x16x32xf32> to vector<16x16x32xf32>
    %368 = vector.extract_strided_slice %44 {offsets = [20, 0], sizes = [1, 32], strides = [1, 1]} : vector<49x32xf32> to vector<1x32xf32>
    %369 = vector.shape_cast %368 : vector<1x32xf32> to vector<32xf32>
    %370 = vector.shape_cast %369 : vector<32xf32> to vector<1x1x32xf32>
    %371 = vector.broadcast %370 : vector<1x1x32xf32> to vector<16x16x32xf32>
    %372 = arith.mulf %367, %371 : vector<16x16x32xf32>
    %373 = arith.addf %366, %372 : vector<16x16x32xf32>
    %374 = vector.extract_strided_slice %352 {offsets = [3, 0, 0], sizes = [16, 16, 32], strides = [1, 1, 1]} : vector<22x16x32xf32> to vector<16x16x32xf32>
    %375 = vector.extract_strided_slice %44 {offsets = [27, 0], sizes = [1, 32], strides = [1, 1]} : vector<49x32xf32> to vector<1x32xf32>
    %376 = vector.shape_cast %375 : vector<1x32xf32> to vector<32xf32>
    %377 = vector.shape_cast %376 : vector<32xf32> to vector<1x1x32xf32>
    %378 = vector.broadcast %377 : vector<1x1x32xf32> to vector<16x16x32xf32>
    %379 = arith.mulf %374, %378 : vector<16x16x32xf32>
    %380 = arith.addf %373, %379 : vector<16x16x32xf32>
    %381 = vector.extract_strided_slice %352 {offsets = [4, 0, 0], sizes = [16, 16, 32], strides = [1, 1, 1]} : vector<22x16x32xf32> to vector<16x16x32xf32>
    %382 = vector.extract_strided_slice %44 {offsets = [34, 0], sizes = [1, 32], strides = [1, 1]} : vector<49x32xf32> to vector<1x32xf32>
    %383 = vector.shape_cast %382 : vector<1x32xf32> to vector<32xf32>
    %384 = vector.shape_cast %383 : vector<32xf32> to vector<1x1x32xf32>
    %385 = vector.broadcast %384 : vector<1x1x32xf32> to vector<16x16x32xf32>
    %386 = arith.mulf %381, %385 : vector<16x16x32xf32>
    %387 = arith.addf %380, %386 : vector<16x16x32xf32>
    %388 = vector.extract_strided_slice %352 {offsets = [5, 0, 0], sizes = [16, 16, 32], strides = [1, 1, 1]} : vector<22x16x32xf32> to vector<16x16x32xf32>
    %389 = vector.extract_strided_slice %44 {offsets = [41, 0], sizes = [1, 32], strides = [1, 1]} : vector<49x32xf32> to vector<1x32xf32>
    %390 = vector.shape_cast %389 : vector<1x32xf32> to vector<32xf32>
    %391 = vector.shape_cast %390 : vector<32xf32> to vector<1x1x32xf32>
    %392 = vector.broadcast %391 : vector<1x1x32xf32> to vector<16x16x32xf32>
    %393 = arith.mulf %388, %392 : vector<16x16x32xf32>
    %394 = arith.addf %387, %393 : vector<16x16x32xf32>
    %395 = vector.extract_strided_slice %352 {offsets = [6, 0, 0], sizes = [16, 16, 32], strides = [1, 1, 1]} : vector<22x16x32xf32> to vector<16x16x32xf32>
    %396 = vector.extract_strided_slice %44 {offsets = [48, 0], sizes = [1, 32], strides = [1, 1]} : vector<49x32xf32> to vector<1x32xf32>
    %397 = vector.shape_cast %396 : vector<1x32xf32> to vector<32xf32>
    %398 = vector.shape_cast %397 : vector<32xf32> to vector<1x1x32xf32>
    %399 = vector.broadcast %398 : vector<1x1x32xf32> to vector<16x16x32xf32>
    %400 = arith.mulf %395, %399 : vector<16x16x32xf32>
    %401 = arith.addf %394, %400 : vector<16x16x32xf32>
    %c0_35 = arith.constant 0 : index
    %c0_36 = arith.constant 0 : index
    %402 = vector.load %arg10[%c0_35, %c0_36] : memref<1x32xf32, #tpu.memory_space<vmem>>, vector<1x32xf32>
    %403 = vector.shape_cast %402 : vector<1x32xf32> to vector<1x1x32xf32>
    %404 = vector.broadcast %403 : vector<1x1x32xf32> to vector<16x16x32xf32>
    %405 = arith.addf %401, %404 : vector<16x16x32xf32>
    %c0_37 = arith.constant 0 : index
    %c0_38 = arith.constant 0 : index
    %c0_39 = arith.constant 0 : index
    %c0_40 = arith.constant 0 : index
    %406 = vector.load %arg11[%c0_37, %c0_38, %c0_39, %c0_40] : memref<1x16x16x32xf32, #tpu.memory_space<vmem>>, vector<1x16x16x32xf32>
    %407 = vector.shape_cast %406 : vector<1x16x16x32xf32> to vector<16x16x32xf32>
    %408 = vector.shape_cast %405 : vector<16x16x32xf32> to vector<1x16x16x32xf32>
    tpu.vector_store %arg11[%c0_37, %c0_38, %c0_39, %c0_40], %408 {strides = array<i32>} : memref<1x16x16x32xf32, #tpu.memory_space<vmem>>, vector<1x16x16x32xf32>,
    return
  }
  func.func @transform_0(%arg0: i32) -> i32 {
    %c0_i32 = arith.constant 0 : i32
    %c0_i32_0 = arith.constant 0 : i32
    return %c0_i32 : i32
  }
  func.func @transform_1(%arg0: i32) -> (i32, i32, i32) {
    %c0_i32 = arith.constant 0 : i32
    %c0_i32_0 = arith.constant 0 : i32
    %c0_i32_1 = arith.constant 0 : i32
    return %arg0, %c0_i32, %c0_i32_0 : i32, i32, i32
  }
  func.func @transform_2(%arg0: i32) -> (i32, i32) {
    %c0_i32 = arith.constant 0 : i32
    %c0_i32_0 = arith.constant 0 : i32
    %c0_i32_1 = arith.constant 0 : i32
    return %c0_i32, %c0_i32_0 : i32, i32
  }
  func.func @transform_3(%arg0: i32) -> (i32, i32) {
    %c0_i32 = arith.constant 0 : i32
    %c0_i32_0 = arith.constant 0 : i32
    %c0_i32_1 = arith.constant 0 : i32
    return %c0_i32, %c0_i32_0 : i32, i32
  }
  func.func @transform_4(%arg0: i32) -> (i32, i32) {
    %c0_i32 = arith.constant 0 : i32
    %c0_i32_0 = arith.constant 0 : i32
    %c0_i32_1 = arith.constant 0 : i32
    return %c0_i32, %c0_i32_0 : i32, i32
  }
  func.func @transform_5(%arg0: i32) -> (i32, i32) {
    %c0_i32 = arith.constant 0 : i32
    %c0_i32_0 = arith.constant 0 : i32
    %c0_i32_1 = arith.constant 0 : i32
    return %c0_i32, %c0_i32_0 : i32, i32
  }
  func.func @transform_6(%arg0: i32) -> (i32, i32) {
    %c0_i32 = arith.constant 0 : i32
    %c0_i32_0 = arith.constant 0 : i32
    %c0_i32_1 = arith.constant 0 : i32
    return %c0_i32, %c0_i32_0 : i32, i32
  }
  func.func @transform_7(%arg0: i32) -> (i32, i32) {
    %c0_i32 = arith.constant 0 : i32
    %c0_i32_0 = arith.constant 0 : i32
    %c0_i32_1 = arith.constant 0 : i32
    return %c0_i32, %c0_i32_0 : i32, i32
  }
  func.func @transform_8(%arg0: i32) -> (i32, i32) {
    %c0_i32 = arith.constant 0 : i32
    %c0_i32_0 = arith.constant 0 : i32
    %c0_i32_1 = arith.constant 0 : i32
    return %c0_i32, %c0_i32_0 : i32, i32
  }
  func.func @transform_9(%arg0: i32) -> (i32, i32) {
    %c0_i32 = arith.constant 0 : i32
    %c0_i32_0 = arith.constant 0 : i32
    %c0_i32_1 = arith.constant 0 : i32
    return %c0_i32, %c0_i32_0 : i32, i32
  }
  func.func @transform_10(%arg0: i32) -> (i32, i32, i32, i32) {
    %c0_i32 = arith.constant 0 : i32
    %c0_i32_0 = arith.constant 0 : i32
    %c0_i32_1 = arith.constant 0 : i32
    %c0_i32_2 = arith.constant 0 : i32
    return %arg0, %c0_i32, %c0_i32_0, %c0_i32_1 : i32, i32, i32, i32
  }
}

</mosaic_0001>

<llo_original>
// kernel: aio_block_forward.1
$region0: #{aio_block_forward.1}
  #allocation0 [shape = 'u32[]', space=smem, size = 0x4, offset = 0x4, fixed_abs, tag = 'smem constant byte address 0x4 - core index']
  #allocation1 [shape = 'u32[72,128]{1,0:T(1,128)}', space=vmem, size = 0x9000, scoped, tag = 'internal scratch']
  #allocation2 [shape = 'f32[22,24,32]{2,1,0:T(8,128)}', space=vmem, size = 0x42000, scoped, tag = 'scratch operand']
  %s0 = inlined_call_operand.vmem [shape: f32[2], index: 0, kind: input, shape index: {}]
  %s1 = inlined_call_operand.hbm [shape: f32[2,256,32], index: 1, kind: input, shape index: {}]
  %s2 = inlined_call_operand.vmem [shape: f32[32,32], index: 2, kind: input, shape index: {}]
  %s3 = inlined_call_operand.vmem [shape: f32[1,32], index: 3, kind: input, shape index: {}]
  %s4 = inlined_call_operand.vmem [shape: f32[32,32], index: 4, kind: input, shape index: {}]
  %s5 = inlined_call_operand.vmem [shape: f32[1,32], index: 5, kind: input, shape index: {}]
  %s6 = inlined_call_operand.vmem [shape: f32[32,8], index: 6, kind: input, shape index: {}]
  %s7 = inlined_call_operand.vmem [shape: f32[8,32], index: 7, kind: input, shape index: {}]
  %s8 = inlined_call_operand.vmem [shape: f32[49,32], index: 8, kind: input, shape index: {}]
  %s9 = inlined_call_operand.vmem [shape: f32[1,32], index: 9, kind: input, shape index: {}]
  %s10 = inlined_call_operand.hbm [shape: f32[2,16,16,32], index: 10, kind: output, shape index: {}]
  %s11 = sld [smem:[#allocation0]]
  $region81: #{aio_block_forward.1} parent=0
    _
  %s13 = ssub.s32 1, %s11
  %s14 = scalar_select 0, %s13, %s11
  $region1: #{aio_block_forward.1} parent=0
    #allocation3 [shape = 'u8[512]{0}', space=smem, size = 0x200, scoped, tag = 'input window, operand 0, single buffered']
    #allocation4 [shape = 's32[2]{0}', space=sflag, size = 0x8, scoped, tag = 'scoped memory for aio_block_forward.1']
    #allocation5 [shape = 's32[2]{0}', space=sflag, size = 0x8, scoped, tag = 'scoped memory for aio_block_forward.1']
    #allocation6 [shape = 's32[2]{0}', space=sflag, size = 0x8, scoped, tag = 'scoped memory for aio_block_forward.1']
    #allocation7 [shape = 'u8[262144]{0}', space=vmem, size = 0x40000, scoped, tag = 'input window, operand 1']
    #allocation8 [shape = 'u8[262144]{0}', space=vmem, size = 0x40000, scoped, tag = 'output window, operand 0']
    %15 = vsyncpa [#allocation6], 0
    %16 = vsyncpa [#allocation4], 0
    %s17 = scalar_lea.sflag [#allocation4], 1
    %18 = vsyncpa %s17, 0
    %19 = vsyncpa [#allocation5], 0
    %s20 = scalar_lea.sflag [#allocation5], 1
    %21 = vsyncpa %s20, 0
    loop: start=0, step=1, limit=4
    $region2: #{aio_block_forward.1} parent=1 // loop_pre_header
      _
    $region3: #{aio_block_forward.1} parent=1 // loop_header
      %s23 = sphi 0, %s27
      %p24 = scmp.ge.s32.totalorder %s23, 4
      %s31 = sphi 0, %s31
      %s33 = sphi 0, %s31
      %s34 = sphi 0, %s33
      %s48 = sphi 0, %s34
      %s54 = sphi 0, %s56
      %s57 = sphi 0, %s54
      %s58 = sphi 0, %s57
      %s74 = sphi 0, %s58
      %s78 = sphi 0, %s78
      %s80 = sphi 0, %s78
      %s81 = sphi 0, %s80
      %s95 = sphi 0, %s81
      %s99 = sphi 0, %s99
      %s101 = sphi 0, %s99
      %s102 = sphi 0, %s101
      %s116 = sphi 0, %s102
      %s120 = sphi 0, %s120
      %s122 = sphi 0, %s120
      %s123 = sphi 0, %s122
      %s137 = sphi 0, %s123
      %s141 = sphi 0, %s141
      %s143 = sphi 0, %s141
      %s144 = sphi 0, %s143
      %s158 = sphi 0, %s144
      %s162 = sphi 0, %s162
      %s164 = sphi 0, %s162
      %s165 = sphi 0, %s164
      %s179 = sphi 0, %s165
      %s183 = sphi 0, %s183
      %s185 = sphi 0, %s183
      %s186 = sphi 0, %s185
      %s200 = sphi 0, %s186
      %s204 = sphi 0, %s204
      %s206 = sphi 0, %s204
      %s207 = sphi 0, %s206
      %s221 = sphi 0, %s207
      %s225 = sphi 0, %s225
      %s227 = sphi 0, %s225
      %s228 = sphi 0, %s227
      %s242 = sphi 0, %s228
      %s248 = sphi 0, %s250
      %s251 = sphi 0, %s248
      %s252 = sphi 0, %s251
      %s268 = sphi 0, %s252
    $region4: #{aio_block_forward.1} parent=1 // loop_header_branch
      %26 = sbr.rel (%p24) target = $region8
    $region5: #{aio_block_forward.1} parent=1 // loop_body
      %s28 = ssub.s32 %s23, 1
      %s29 = ssub.s32 %s23, 2
      %s30 = sadd.s32 %s23, 1
      %s32 = sadd.s32 %s31, 1
      %p35 = scmp.eq.s32.totalorder %s23, 1
      %p36 = scmp.ne.s32.totalorder %s31, %s33
      %p37 = scmp.eq.s32.totalorder %s23, 0
      %p38 = por %p36, %p37
      %p39 = scmp.ne.s32.totalorder %s31, %s33
      %p40 = scmp.eq.s32.totalorder %s28, 1
      %p41 = por %p39, %p40
      %p42 = scmp.ne.s32.totalorder %s33, %s34
      %p43 = scmp.eq.s32.totalorder %s28, 0
      %p44 = por %p42, %p43
      %p45 = scmp.ne.s32.totalorder %s33, %s34
      %p46 = scmp.eq.s32.totalorder %s29, 1
      %p47 = por %p45, %p46
      %p49 = scmp.ne.s32.totalorder %s34, %s48
      %p50 = scmp.eq.s32.totalorder %s29, 0
      %p51 = por %p49, %p50
      %s52 = ssub.s32 %s23, %s30
      %p53 = scmp.eq.s32.totalorder %s52, 0
      %s55 = sadd.s32 %s54, 1
      %s56 = scalar_select %p53, %s54, %s55
      %p59 = pneg %p53
      %p60 = scmp.eq.s32.totalorder %s23, 1
      %p61 = por %p59, %p60
      %p62 = scmp.ne.s32.totalorder %s54, %s57
      %p63 = scmp.eq.s32.totalorder %s23, 0
      %p64 = por %p62, %p63
      %p65 = scmp.ne.s32.totalorder %s54, %s57
      %p66 = scmp.eq.s32.totalorder %s28, 1
      %p67 = por %p65, %p66
      %p68 = scmp.ne.s32.totalorder %s57, %s58
      %p69 = scmp.eq.s32.totalorder %s28, 0
      %p70 = por %p68, %p69
      %p71 = scmp.ne.s32.totalorder %s57, %s58
      %p72 = scmp.eq.s32.totalorder %s29, 1
      %p73 = por %p71, %p72
      %p75 = scmp.ne.s32.totalorder %s58, %s74
      %p76 = scmp.eq.s32.totalorder %s29, 0
      %p77 = por %p75, %p76
      %s79 = sadd.s32 %s78, 1
      %p82 = scmp.eq.s32.totalorder %s23, 1
      %p83 = scmp.ne.s32.totalorder %s78, %s80
      %p84 = scmp.eq.s32.totalorder %s23, 0
      %p85 = por %p83, %p84
      %p86 = scmp.ne.s32.totalorder %s78, %s80
      %p87 = scmp.eq.s32.totalorder %s28, 1
      %p88 = por %p86, %p87
      %p89 = scmp.ne.s32.totalorder %s80, %s81
      %p90 = scmp.eq.s32.totalorder %s28, 0
      %p91 = por %p89, %p90
      %p92 = scmp.ne.s32.totalorder %s80, %s81
      %p93 = scmp.eq.s32.totalorder %s29, 1
      %p94 = por %p92, %p93
      %p96 = scmp.ne.s32.totalorder %s81, %s95
      %p97 = scmp.eq.s32.totalorder %s29, 0
      %p98 = por %p96, %p97
      %s100 = sadd.s32 %s99, 1
      %p103 = scmp.eq.s32.totalorder %s23, 1
      %p104 = scmp.ne.s32.totalorder %s99, %s101
      %p105 = scmp.eq.s32.totalorder %s23, 0
      %p106 = por %p104, %p105
      %p107 = scmp.ne.s32.totalorder %s99, %s101
      %p108 = scmp.eq.s32.totalorder %s28, 1
      %p109 = por %p107, %p108
      %p110 = scmp.ne.s32.totalorder %s101, %s102
      %p111 = scmp.eq.s32.totalorder %s28, 0
      %p112 = por %p110, %p111
      %p113 = scmp.ne.s32.totalorder %s101, %s102
      %p114 = scmp.eq.s32.totalorder %s29, 1
      %p115 = por %p113, %p114
      %p117 = scmp.ne.s32.totalorder %s102, %s116
      %p118 = scmp.eq.s32.totalorder %s29, 0
      %p119 = por %p117, %p118
      %s121 = sadd.s32 %s120, 1
      %p124 = scmp.eq.s32.totalorder %s23, 1
      %p125 = scmp.ne.s32.totalorder %s120, %s122
      %p126 = scmp.eq.s32.totalorder %s23, 0
      %p127 = por %p125, %p126
      %p128 = scmp.ne.s32.totalorder %s120, %s122
      %p129 = scmp.eq.s32.totalorder %s28, 1
      %p130 = por %p128, %p129
      %p131 = scmp.ne.s32.totalorder %s122, %s123
      %p132 = scmp.eq.s32.totalorder %s28, 0
      %p133 = por %p131, %p132
      %p134 = scmp.ne.s32.totalorder %s122, %s123
      %p135 = scmp.eq.s32.totalorder %s29, 1
      %p136 = por %p134, %p135
      %p138 = scmp.ne.s32.totalorder %s123, %s137
      %p139 = scmp.eq.s32.totalorder %s29, 0
      %p140 = por %p138, %p139
      %s142 = sadd.s32 %s141, 1
      %p145 = scmp.eq.s32.totalorder %s23, 1
      %p146 = scmp.ne.s32.totalorder %s141, %s143
      %p147 = scmp.eq.s32.totalorder %s23, 0
      %p148 = por %p146, %p147
      %p149 = scmp.ne.s32.totalorder %s141, %s143
      %p150 = scmp.eq.s32.totalorder %s28, 1
      %p151 = por %p149, %p150
      %p152 = scmp.ne.s32.totalorder %s143, %s144
      %p153 = scmp.eq.s32.totalorder %s28, 0
      %p154 = por %p152, %p153
      %p155 = scmp.ne.s32.totalorder %s143, %s144
      %p156 = scmp.eq.s32.totalorder %s29, 1
      %p157 = por %p155, %p156
      %p159 = scmp.ne.s32.totalorder %s144, %s158
      %p160 = scmp.eq.s32.totalorder %s29, 0
      %p161 = por %p159, %p160
      %s163 = sadd.s32 %s162, 1
      %p166 = scmp.eq.s32.totalorder %s23, 1
      %p167 = scmp.ne.s32.totalorder %s162, %s164
      %p168 = scmp.eq.s32.totalorder %s23, 0
      %p169 = por %p167, %p168
      %p170 = scmp.ne.s32.totalorder %s162, %s164
      %p171 = scmp.eq.s32.totalorder %s28, 1
      %p172 = por %p170, %p171
      %p173 = scmp.ne.s32.totalorder %s164, %s165
      %p174 = scmp.eq.s32.totalorder %s28, 0
      %p175 = por %p173, %p174
      %p176 = scmp.ne.s32.totalorder %s164, %s165
      %p177 = scmp.eq.s32.totalorder %s29, 1
      %p178 = por %p176, %p177
      %p180 = scmp.ne.s32.totalorder %s165, %s179
      %p181 = scmp.eq.s32.totalorder %s29, 0
      %p182 = por %p180, %p181
      %s184 = sadd.s32 %s183, 1
      %p187 = scmp.eq.s32.totalorder %s23, 1
      %p188 = scmp.ne.s32.totalorder %s183, %s185
      %p189 = scmp.eq.s32.totalorder %s23, 0
      %p190 = por %p188, %p189
      %p191 = scmp.ne.s32.totalorder %s183, %s185
      %p192 = scmp.eq.s32.totalorder %s28, 1
      %p193 = por %p191, %p192
      %p194 = scmp.ne.s32.totalorder %s185, %s186
      %p195 = scmp.eq.s32.totalorder %s28, 0
      %p196 = por %p194, %p195
      %p197 = scmp.ne.s32.totalorder %s185, %s186
      %p198 = scmp.eq.s32.totalorder %s29, 1
      %p199 = por %p197, %p198
      %p201 = scmp.ne.s32.totalorder %s186, %s200
      %p202 = scmp.eq.s32.totalorder %s29, 0
      %p203 = por %p201, %p202
      %s205 = sadd.s32 %s204, 1
      %p208 = scmp.eq.s32.totalorder %s23, 1
      %p209 = scmp.ne.s32.totalorder %s204, %s206
      %p210 = scmp.eq.s32.totalorder %s23, 0
      %p211 = por %p209, %p210
      %p212 = scmp.ne.s32.totalorder %s204, %s206
      %p213 = scmp.eq.s32.totalorder %s28, 1
      %p214 = por %p212, %p213
      %p215 = scmp.ne.s32.totalorder %s206, %s207
      %p216 = scmp.eq.s32.totalorder %s28, 0
      %p217 = por %p215, %p216
      %p218 = scmp.ne.s32.totalorder %s206, %s207
      %p219 = scmp.eq.s32.totalorder %s29, 1
      %p220 = por %p218, %p219
      %p222 = scmp.ne.s32.totalorder %s207, %s221
      %p223 = scmp.eq.s32.totalorder %s29, 0
      %p224 = por %p222, %p223
      %s226 = sadd.s32 %s225, 1
      %p229 = scmp.eq.s32.totalorder %s23, 1
      %p230 = scmp.ne.s32.totalorder %s225, %s227
      %p231 = scmp.eq.s32.totalorder %s23, 0
      %p232 = por %p230, %p231
      %p233 = scmp.ne.s32.totalorder %s225, %s227
      %p234 = scmp.eq.s32.totalorder %s28, 1
      %p235 = por %p233, %p234
      %p236 = scmp.ne.s32.totalorder %s227, %s228
      %p237 = scmp.eq.s32.totalorder %s28, 0
      %p238 = por %p236, %p237
      %p239 = scmp.ne.s32.totalorder %s227, %s228
      %p240 = scmp.eq.s32.totalorder %s29, 1
      %p241 = por %p239, %p240
      %p243 = scmp.ne.s32.totalorder %s228, %s242
      %p244 = scmp.eq.s32.totalorder %s29, 0
      %p245 = por %p243, %p244
      %s246 = ssub.s32 %s23, %s30
      %p247 = scmp.eq.s32.totalorder %s246, 0
      %s249 = sadd.s32 %s248, 1
      %s250 = scalar_select %p247, %s248, %s249
      %p253 = pneg %p247
      %p254 = scmp.eq.s32.totalorder %s23, 1
      %p255 = por %p253, %p254
      %p256 = scmp.ne.s32.totalorder %s248, %s251
      %p257 = scmp.eq.s32.totalorder %s23, 0
      %p258 = por %p256, %p257
      %p259 = scmp.ne.s32.totalorder %s248, %s251
      %p260 = scmp.eq.s32.totalorder %s28, 1
      %p261 = por %p259, %p260
      %p262 = scmp.ne.s32.totalorder %s251, %s252
      %p263 = scmp.eq.s32.totalorder %s28, 0
      %p264 = por %p262, %p263
      %p265 = scmp.ne.s32.totalorder %s251, %s252
      %p266 = scmp.eq.s32.totalorder %s29, 1
      %p267 = por %p265, %p266
      %p269 = scmp.ne.s32.totalorder %s252, %s268
      %p270 = scmp.eq.s32.totalorder %s29, 0
      %p271 = por %p269, %p270
      %p272 = scmp.le.s32.totalorder 1, %s23
      %p273 = scmp.lt.s32.totalorder %s23, 3
      %p274 = pnand %p272, %p273
      %p275 = pneg %p274
      // Predicated region
      $region9: #{aio_block_forward.1} parent=5 // pred_check
        _
      $region10: #{aio_block_forward.1} parent=5 // pred_check_branch
        %277 = sbr.rel (%p274) target = $region12
      $region11: #{aio_block_forward.1} parent=5 // pred_region
        %s278 = ssub.s32 %s23, 1
        // Predicated region
        $region13: #{aio_block_forward.1} parent=11 // pred_check
          %p279 = pneg %p44
        $region14: #{aio_block_forward.1} parent=11 // pred_check_branch
          %281 = sbr.rel (%p279) target = $region16
        $region15: #{aio_block_forward.1} parent=11 // pred_region
          %283 = vsyncadd [#allocation6], 0
          %s285 = sshll.u32 %s0, 4
          %s286 = int_to_ptr.vmem [resolvable:$true] %s285
          %288 = dma.vmem_to_smem %s286, 16, [#allocation3], [#allocation6]
        $region16: #{aio_block_forward.1} parent=11 // pred_fallthru
          _
        // Predicated region
        $region17: #{aio_block_forward.1} parent=11 // pred_check
          %p289 = pneg %p91
        $region18: #{aio_block_forward.1} parent=11 // pred_check_branch
          %291 = sbr.rel (%p289) target = $region20
        $region19: #{aio_block_forward.1} parent=11 // pred_region
          _
        $region20: #{aio_block_forward.1} parent=11 // pred_fallthru
          _
        // Predicated region
        $region21: #{aio_block_forward.1} parent=11 // pred_check
          %p292 = pneg %p112
        $region22: #{aio_block_forward.1} parent=11 // pred_check_branch
          %294 = sbr.rel (%p292) target = $region24
        $region23: #{aio_block_forward.1} parent=11 // pred_region
          _
        $region24: #{aio_block_forward.1} parent=11 // pred_fallthru
          _
        // Predicated region
        $region25: #{aio_block_forward.1} parent=11 // pred_check
          %p295 = pneg %p133
        $region26: #{aio_block_forward.1} parent=11 // pred_check_branch
          %297 = sbr.rel (%p295) target = $region28
        $region27: #{aio_block_forward.1} parent=11 // pred_region
          _
        $region28: #{aio_block_forward.1} parent=11 // pred_fallthru
          _
        // Predicated region
        $region29: #{aio_block_forward.1} parent=11 // pred_check
          %p298 = pneg %p154
        $region30: #{aio_block_forward.1} parent=11 // pred_check_branch
          %300 = sbr.rel (%p298) target = $region32
        $region31: #{aio_block_forward.1} parent=11 // pred_region
          _
        $region32: #{aio_block_forward.1} parent=11 // pred_fallthru
          _
        // Predicated region
        $region33: #{aio_block_forward.1} parent=11 // pred_check
          %p301 = pneg %p175
        $region34: #{aio_block_forward.1} parent=11 // pred_check_branch
          %303 = sbr.rel (%p301) target = $region36
        $region35: #{aio_block_forward.1} parent=11 // pred_region
          _
        $region36: #{aio_block_forward.1} parent=11 // pred_fallthru
          _
        // Predicated region
        $region37: #{aio_block_forward.1} parent=11 // pred_check
          %p304 = pneg %p196
        $region38: #{aio_block_forward.1} parent=11 // pred_check_branch
          %306 = sbr.rel (%p304) target = $region40
        $region39: #{aio_block_forward.1} parent=11 // pred_region
          _
        $region40: #{aio_block_forward.1} parent=11 // pred_fallthru
          _
        // Predicated region
        $region41: #{aio_block_forward.1} parent=11 // pred_check
          %p307 = pneg %p217
        $region42: #{aio_block_forward.1} parent=11 // pred_check_branch
          %309 = sbr.rel (%p307) target = $region44
        $region43: #{aio_block_forward.1} parent=11 // pred_region
          _
        $region44: #{aio_block_forward.1} parent=11 // pred_fallthru
          _
        // Predicated region
        $region45: #{aio_block_forward.1} parent=11 // pred_check
          %p310 = pneg %p238
        $region46: #{aio_block_forward.1} parent=11 // pred_check_branch
          %312 = sbr.rel (%p310) target = $region48
        $region47: #{aio_block_forward.1} parent=11 // pred_region
          _
        $region48: #{aio_block_forward.1} parent=11 // pred_fallthru
          _
      $region12: #{aio_block_forward.1} parent=5 // pred_fallthru
        _
      %p313 = scmp.lt.s32.totalorder %s23, 2
      // Predicated region
      $region49: #{aio_block_forward.1} parent=5 // pred_check
        %p314 = pneg %p313
      $region50: #{aio_block_forward.1} parent=5 // pred_check_branch
        %316 = sbr.rel (%p314) target = $region52
      $region51: #{aio_block_forward.1} parent=5 // pred_region
        // Predicated region
        $region53: #{aio_block_forward.1} parent=51 // pred_check
          %p317 = pneg %p64
        $region54: #{aio_block_forward.1} parent=51 // pred_check_branch
          %319 = sbr.rel (%p317) target = $region56
        $region55: #{aio_block_forward.1} parent=51 // pred_region
          %s320 = sand.u32 %s54, 1
          %s321 = scalar_lea.sflag [#allocation4], %s320
          %s322 = sand.u32 %s54, 1
          %s323 = smul.addr %s322, 256
          %s324 = scalar_lea.vmem [#allocation7], %s323
          %326 = vsyncadd %s321, 0
          %s327 = smul.addr %s23, 32
          %s328 = smul.addr %s327, 8
          %s329 = scalar_lea.hbm %s1, %s328
          %s330 = sshll.u32 %s329, 4
          %s331 = int_to_ptr.hbm [resolvable:$true] %s330
          %s332 = sshll.u32 %s324, 4
          %s333 = int_to_ptr.vmem [resolvable:$true] %s332
          %338 = dma.hbm_to_vmem [thread:$0]  %s331, 4096, %s333, %s321, 128, 128, 8
        $region56: #{aio_block_forward.1} parent=51 // pred_fallthru
          _
      $region52: #{aio_block_forward.1} parent=5 // pred_fallthru
        _
      %p339 = scmp.le.s32.totalorder 1, %s23
      %p340 = scmp.lt.s32.totalorder %s23, 3
      %p341 = pnand %p339, %p340
      %p342 = pneg %p341
      // Predicated region
      $region57: #{aio_block_forward.1} parent=5 // pred_check
        _
      $region58: #{aio_block_forward.1} parent=5 // pred_check_branch
        %344 = sbr.rel (%p341) target = $region60
      $region59: #{aio_block_forward.1} parent=5 // pred_region
        %s345 = ssub.s32 %s23, 1
        // Predicated region
        $region61: #{aio_block_forward.1} parent=59 // pred_check
          %p346 = pneg %p44
        $region62: #{aio_block_forward.1} parent=59 // pred_check_branch
          %348 = sbr.rel (%p346) target = $region64
        $region63: #{aio_block_forward.1} parent=59 // pred_region
          %350 = dma.done [#allocation6], 16
        $region64: #{aio_block_forward.1} parent=59 // pred_fallthru
          _
        %s351 = sand.u32 %s57, 1
        %s352 = scalar_lea.sflag [#allocation4], %s351
        %s353 = sand.u32 %s57, 1
        %s354 = smul.addr %s353, 256
        %s355 = scalar_lea.vmem [#allocation7], %s354
        // Predicated region
        $region65: #{aio_block_forward.1} parent=59 // pred_check
          %p356 = pneg %p70
        $region66: #{aio_block_forward.1} parent=59 // pred_check_branch
          %358 = sbr.rel (%p356) target = $region68
        $region67: #{aio_block_forward.1} parent=59 // pred_region
          %360 = dma.done %s352, 4096
        $region68: #{aio_block_forward.1} parent=59 // pred_fallthru
          _
        %361 = sfence
        %p362 = pneg %p44
        %p363 = pneg %p41
        %s364 = sand.u32 %s57, 1
        %s365 = scalar_lea.sflag [#allocation4], %s364
        %s366 = sand.u32 %s57, 1
        %s367 = smul.addr %s366, 256
        %s368 = scalar_lea.vmem [#allocation7], %s367
        %p369 = pneg %p70
        %p370 = pneg %p67
        %p371 = pneg %p91
        %p372 = pneg %p88
        %p373 = pneg %p112
        %p374 = pneg %p109
        %p375 = pneg %p133
        %p376 = pneg %p130
        %p377 = pneg %p154
        %p378 = pneg %p151
        %p379 = pneg %p175
        %p380 = pneg %p172
        %p381 = pneg %p196
        %p382 = pneg %p193
        %p383 = pneg %p217
        %p384 = pneg %p214
        %p385 = pneg %p238
        %p386 = pneg %p235
        %p387 = pneg %p264
        %p388 = pneg %p261
        %s389 = sand.u32 %s251, 1
        %s390 = scalar_lea.sflag [#allocation5], %s389
        %s391 = sand.u32 %s251, 1
        %s392 = smul.addr %s391, 256
        %s393 = scalar_lea.vmem [#allocation8], %s392
        %v394 = vld [vmem:[%s355] sm:$0xff]
        %v395 = vld [vmem:[%s355 + $0x8] sm:$0xff]
        %v396 = vld [vmem:[%s355 + $0x10] sm:$0xff]
        %v397 = vld [vmem:[%s355 + $0x18] sm:$0xff]
        %v398 = vld [vmem:[%s355 + $0x20] sm:$0xff]
        %v399 = vld [vmem:[%s355 + $0x28] sm:$0xff]
        %v400 = vld [vmem:[%s355 + $0x30] sm:$0xff]
        %v401 = vld [vmem:[%s355 + $0x38] sm:$0xff]
        %v402 = vld [vmem:[%s355 + $0x40] sm:$0xff]
        %v403 = vld [vmem:[%s355 + $0x48] sm:$0xff]
        %v404 = vld [vmem:[%s355 + $0x50] sm:$0xff]
        %v405 = vld [vmem:[%s355 + $0x58] sm:$0xff]
        %v406 = vld [vmem:[%s355 + $0x60] sm:$0xff]
        %v407 = vld [vmem:[%s355 + $0x68] sm:$0xff]
        %v408 = vld [vmem:[%s355 + $0x70] sm:$0xff]
        %v409 = vld [vmem:[%s355 + $0x78] sm:$0xff]
        %v410 = vld [vmem:[%s355 + $0x80] sm:$0xff]
        %v411 = vld [vmem:[%s355 + $0x88] sm:$0xff]
        %v412 = vld [vmem:[%s355 + $0x90] sm:$0xff]
        %v413 = vld [vmem:[%s355 + $0x98] sm:$0xff]
        %v414 = vld [vmem:[%s355 + $0xa0] sm:$0xff]
        %v415 = vld [vmem:[%s355 + $0xa8] sm:$0xff]
        %v416 = vld [vmem:[%s355 + $0xb0] sm:$0xff]
        %v417 = vld [vmem:[%s355 + $0xb8] sm:$0xff]
        %v418 = vld [vmem:[%s355 + $0xc0] sm:$0xff]
        %v419 = vld [vmem:[%s355 + $0xc8] sm:$0xff]
        %v420 = vld [vmem:[%s355 + $0xd0] sm:$0xff]
        %v421 = vld [vmem:[%s355 + $0xd8] sm:$0xff]
        %v422 = vld [vmem:[%s355 + $0xe0] sm:$0xff]
        %v423 = vld [vmem:[%s355 + $0xe8] sm:$0xff]
        %v424 = vld [vmem:[%s355 + $0xf0] sm:$0xff]
        %v425 = vld [vmem:[%s355 + $0xf8] sm:$0xff]
        %v426 = vld [vmem:[%s2] sm:$0xff]
        %v427 = vld [vmem:[%s2 + $0x8] sm:$0xff]
        %v428 = vld [vmem:[%s2 + $0x10] sm:$0xff]
        %v429 = vld [vmem:[%s2 + $0x18] sm:$0xff]
        %v430 = vld [vmem:[%s3] sm:$0x1]
        %v432 = vperm.slane %v430, 0
        %vm434 = vcmask 261120
        %v436 = vsel %vm434, %v394, 0
        %v439 = vsel %vm434, %v395, 0
        %v442 = vsel %vm434, %v396, 0
        %v445 = vsel %vm434, %v397, 0
        %v448 = vsel %vm434, %v398, 0
        %v451 = vsel %vm434, %v399, 0
        %v454 = vsel %vm434, %v400, 0
        %v457 = vsel %vm434, %v401, 0
        %v460 = vsel %vm434, %v402, 0
        %v463 = vsel %vm434, %v403, 0
        %v466 = vsel %vm434, %v404, 0
        %v469 = vsel %vm434, %v405, 0
        %v472 = vsel %vm434, %v406, 0
        %v475 = vsel %vm434, %v407, 0
        %v478 = vsel %vm434, %v408, 0
        %v481 = vsel %vm434, %v409, 0
        %v484 = vsel %vm434, %v410, 0
        %v487 = vsel %vm434, %v411, 0
        %v490 = vsel %vm434, %v412, 0
        %v493 = vsel %vm434, %v413, 0
        %v496 = vsel %vm434, %v414, 0
        %v499 = vsel %vm434, %v415, 0
        %v502 = vsel %vm434, %v416, 0
        %v505 = vsel %vm434, %v417, 0
        %v508 = vsel %vm434, %v418, 0
        %v511 = vsel %vm434, %v419, 0
        %v514 = vsel %vm434, %v420, 0
        %v517 = vsel %vm434, %v421, 0
        %v520 = vsel %vm434, %v422, 0
        %v523 = vsel %vm434, %v423, 0
        %v526 = vsel %vm434, %v424, 0
        %v529 = vsel %vm434, %v425, 0
        %531 = vmatpush.msra.mxu0 0.0
        %532 = vmatpush.msra.mxu0 0.0
        %533 = vmatpush.msra.mxu0 0.0
        %534 = vmatpush.msra.mxu0 0.0
        %535 = vmatpush.msra.mxu0 0.0
        %536 = vmatpush.msra.mxu0 0.0
        %537 = vmatpush.msra.mxu0 0.0
        %538 = vmatpush.msra.mxu0 0.0
        %539 = vmatpush.msra.mxu0 0.0
        %540 = vmatpush.msra.mxu0 0.0
        %541 = vmatpush.msra.mxu0 0.0
        %542 = vmatpush.msra.mxu0 0.0
        %543 = vmatpush.msra.mxu0 %v429
        %544 = vmatpush.msra.mxu0 %v428
        %545 = vmatpush.msra.mxu0 %v427
        %546 = vmatpush.msra.mxu0 %v426
        %547 = vmatmul.f32.gmra.mxu0 %v436
        %v548 = vpop.f32.mrf.mxu0
        %v549 = vadd.f32 %v432, %v548
        %550 = vmatmul.f32.gmra.mxu0 %v439
        %v551 = vpop.f32.mrf.mxu0
        %v552 = vadd.f32 %v432, %v551
        %553 = vmatmul.f32.gmra.mxu0 %v442
        %v554 = vpop.f32.mrf.mxu0
        %v555 = vadd.f32 %v432, %v554
        %556 = vmatmul.f32.gmra.mxu0 %v445
        %v557 = vpop.f32.mrf.mxu0
        %v558 = vadd.f32 %v432, %v557
        %559 = vmatmul.f32.gmra.mxu0 %v448
        %v560 = vpop.f32.mrf.mxu0
        %v561 = vadd.f32 %v432, %v560
        %562 = vmatmul.f32.gmra.mxu0 %v451
        %v563 = vpop.f32.mrf.mxu0
        %v564 = vadd.f32 %v432, %v563
        %565 = vmatmul.f32.gmra.mxu0 %v454
        %v566 = vpop.f32.mrf.mxu0
        %v567 = vadd.f32 %v432, %v566
        %568 = vmatmul.f32.gmra.mxu0 %v457
        %v569 = vpop.f32.mrf.mxu0
        %v570 = vadd.f32 %v432, %v569
        %571 = vmatmul.f32.gmra.mxu0 %v460
        %v572 = vpop.f32.mrf.mxu0
        %v573 = vadd.f32 %v432, %v572
        %574 = vmatmul.f32.gmra.mxu0 %v463
        %v575 = vpop.f32.mrf.mxu0
        %v576 = vadd.f32 %v432, %v575
        %577 = vmatmul.f32.gmra.mxu0 %v466
        %v578 = vpop.f32.mrf.mxu0
        %v579 = vadd.f32 %v432, %v578
        %580 = vmatmul.f32.gmra.mxu0 %v469
        %v581 = vpop.f32.mrf.mxu0
        %v582 = vadd.f32 %v432, %v581
        %583 = vmatmul.f32.gmra.mxu0 %v472
        %v584 = vpop.f32.mrf.mxu0
        %v585 = vadd.f32 %v432, %v584
        %586 = vmatmul.f32.gmra.mxu0 %v475
        %v587 = vpop.f32.mrf.mxu0
        %v588 = vadd.f32 %v432, %v587
        %589 = vmatmul.f32.gmra.mxu0 %v478
        %v590 = vpop.f32.mrf.mxu0
        %v591 = vadd.f32 %v432, %v590
        %592 = vmatmul.f32.gmra.mxu0 %v481
        %v593 = vpop.f32.mrf.mxu0
        %v594 = vadd.f32 %v432, %v593
        %595 = vmatmul.f32.gmra.mxu0 %v484
        %v596 = vpop.f32.mrf.mxu0
        %v597 = vadd.f32 %v432, %v596
        %598 = vmatmul.f32.gmra.mxu0 %v487
        %v599 = vpop.f32.mrf.mxu0
        %v600 = vadd.f32 %v432, %v599
        %601 = vmatmul.f32.gmra.mxu0 %v490
        %v602 = vpop.f32.mrf.mxu0
        %v603 = vadd.f32 %v432, %v602
        %604 = vmatmul.f32.gmra.mxu0 %v493
        %v605 = vpop.f32.mrf.mxu0
        %v606 = vadd.f32 %v432, %v605
        %607 = vmatmul.f32.gmra.mxu0 %v496
        %v608 = vpop.f32.mrf.mxu0
        %v609 = vadd.f32 %v432, %v608
        %610 = vmatmul.f32.gmra.mxu0 %v499
        %v611 = vpop.f32.mrf.mxu0
        %v612 = vadd.f32 %v432, %v611
        %613 = vmatmul.f32.gmra.mxu0 %v502
        %v614 = vpop.f32.mrf.mxu0
        %v615 = vadd.f32 %v432, %v614
        %616 = vmatmul.f32.gmra.mxu0 %v505
        %v617 = vpop.f32.mrf.mxu0
        %v618 = vadd.f32 %v432, %v617
        %619 = vmatmul.f32.gmra.mxu0 %v508
        %v620 = vpop.f32.mrf.mxu0
        %v621 = vadd.f32 %v432, %v620
        %622 = vmatmul.f32.gmra.mxu0 %v511
        %v623 = vpop.f32.mrf.mxu0
        %v624 = vadd.f32 %v432, %v623
        %625 = vmatmul.f32.gmra.mxu0 %v514
        %v626 = vpop.f32.mrf.mxu0
        %v627 = vadd.f32 %v432, %v626
        %628 = vmatmul.f32.gmra.mxu0 %v517
        %v629 = vpop.f32.mrf.mxu0
        %v630 = vadd.f32 %v432, %v629
        %631 = vmatmul.f32.gmra.mxu0 %v520
        %v632 = vpop.f32.mrf.mxu0
        %v633 = vadd.f32 %v432, %v632
        %634 = vmatmul.f32.gmra.mxu0 %v523
        %v635 = vpop.f32.mrf.mxu0
        %v636 = vadd.f32 %v432, %v635
        %637 = vmatmul.f32.gmra.mxu0 %v526
        %v638 = vpop.f32.mrf.mxu0
        %v639 = vadd.f32 %v432, %v638
        %640 = vmatmul.f32.gmra.mxu0 %v529
        %v641 = vpop.f32.mrf.mxu0
        %v642 = vadd.f32 %v432, %v641
        %643 = vdwg.mxu0
        %v644 = vld [vmem:[%s4] sm:$0xff]
        %v645 = vld [vmem:[%s4 + $0x8] sm:$0xff]
        %v646 = vld [vmem:[%s4 + $0x10] sm:$0xff]
        %v647 = vld [vmem:[%s4 + $0x18] sm:$0xff]
        %v648 = vld [vmem:[%s5] sm:$0x1]
        %v650 = vperm.slane %v648, 0
        %v653 = vsel %vm434, %v549, 0
        %v656 = vsel %vm434, %v552, 0
        %v659 = vsel %vm434, %v555, 0
        %v662 = vsel %vm434, %v558, 0
        %v665 = vsel %vm434, %v561, 0
        %v668 = vsel %vm434, %v564, 0
        %v671 = vsel %vm434, %v567, 0
        %v674 = vsel %vm434, %v570, 0
        %v677 = vsel %vm434, %v573, 0
        %v680 = vsel %vm434, %v576, 0
        %v683 = vsel %vm434, %v579, 0
        %v686 = vsel %vm434, %v582, 0
        %v689 = vsel %vm434, %v585, 0
        %v692 = vsel %vm434, %v588, 0
        %v695 = vsel %vm434, %v591, 0
        %v698 = vsel %vm434, %v594, 0
        %v701 = vsel %vm434, %v597, 0
        %v704 = vsel %vm434, %v600, 0
        %v707 = vsel %vm434, %v603, 0
        %v710 = vsel %vm434, %v606, 0
        %v713 = vsel %vm434, %v609, 0
        %v716 = vsel %vm434, %v612, 0
        %v719 = vsel %vm434, %v615, 0
        %v722 = vsel %vm434, %v618, 0
        %v725 = vsel %vm434, %v621, 0
        %v728 = vsel %vm434, %v624, 0
        %v731 = vsel %vm434, %v627, 0
        %v734 = vsel %vm434, %v630, 0
        %v737 = vsel %vm434, %v633, 0
        %v740 = vsel %vm434, %v636, 0
        %v743 = vsel %vm434, %v639, 0
        %v746 = vsel %vm434, %v642, 0
        %748 = vmatpush.msra.mxu0 0.0
        %749 = vmatpush.msra.mxu0 0.0
        %750 = vmatpush.msra.mxu0 0.0
        %751 = vmatpush.msra.mxu0 0.0
        %752 = vmatpush.msra.mxu0 0.0
        %753 = vmatpush.msra.mxu0 0.0
        %754 = vmatpush.msra.mxu0 0.0
        %755 = vmatpush.msra.mxu0 0.0
        %756 = vmatpush.msra.mxu0 0.0
        %757 = vmatpush.msra.mxu0 0.0
        %758 = vmatpush.msra.mxu0 0.0
        %759 = vmatpush.msra.mxu0 0.0
        %760 = vmatpush.msra.mxu0 %v647
        %761 = vmatpush.msra.mxu0 %v646
        %762 = vmatpush.msra.mxu0 %v645
        %763 = vmatpush.msra.mxu0 %v644
        %764 = vmatmul.f32.gmra.mxu0 %v653
        %v765 = vpop.f32.mrf.mxu0
        %v766 = vadd.f32 %v650, %v765
        %767 = vmatmul.f32.gmra.mxu0 %v656
        %v768 = vpop.f32.mrf.mxu0
        %v769 = vadd.f32 %v650, %v768
        %770 = vmatmul.f32.gmra.mxu0 %v659
        %v771 = vpop.f32.mrf.mxu0
        %v772 = vadd.f32 %v650, %v771
        %773 = vmatmul.f32.gmra.mxu0 %v662
        %v774 = vpop.f32.mrf.mxu0
        %v775 = vadd.f32 %v650, %v774
        %776 = vmatmul.f32.gmra.mxu0 %v665
        %v777 = vpop.f32.mrf.mxu0
        %v778 = vadd.f32 %v650, %v777
        %779 = vmatmul.f32.gmra.mxu0 %v668
        %v780 = vpop.f32.mrf.mxu0
        %v781 = vadd.f32 %v650, %v780
        %782 = vmatmul.f32.gmra.mxu0 %v671
        %v783 = vpop.f32.mrf.mxu0
        %v784 = vadd.f32 %v650, %v783
        %785 = vmatmul.f32.gmra.mxu0 %v674
        %v786 = vpop.f32.mrf.mxu0
        %v787 = vadd.f32 %v650, %v786
        %788 = vmatmul.f32.gmra.mxu0 %v677
        %v789 = vpop.f32.mrf.mxu0
        %v790 = vadd.f32 %v650, %v789
        %791 = vmatmul.f32.gmra.mxu0 %v680
        %v792 = vpop.f32.mrf.mxu0
        %v793 = vadd.f32 %v650, %v792
        %794 = vmatmul.f32.gmra.mxu0 %v683
        %v795 = vpop.f32.mrf.mxu0
        %v796 = vadd.f32 %v650, %v795
        %797 = vmatmul.f32.gmra.mxu0 %v686
        %v798 = vpop.f32.mrf.mxu0
        %v799 = vadd.f32 %v650, %v798
        %800 = vmatmul.f32.gmra.mxu0 %v689
        %v801 = vpop.f32.mrf.mxu0
        %v802 = vadd.f32 %v650, %v801
        %803 = vmatmul.f32.gmra.mxu0 %v692
        %v804 = vpop.f32.mrf.mxu0
        %v805 = vadd.f32 %v650, %v804
        %806 = vmatmul.f32.gmra.mxu0 %v695
        %v807 = vpop.f32.mrf.mxu0
        %v808 = vadd.f32 %v650, %v807
        %809 = vmatmul.f32.gmra.mxu0 %v698
        %v810 = vpop.f32.mrf.mxu0
        %v811 = vadd.f32 %v650, %v810
        %812 = vmatmul.f32.gmra.mxu0 %v701
        %v813 = vpop.f32.mrf.mxu0
        %v814 = vadd.f32 %v650, %v813
        %815 = vmatmul.f32.gmra.mxu0 %v704
        %v816 = vpop.f32.mrf.mxu0
        %v817 = vadd.f32 %v650, %v816
        %818 = vmatmul.f32.gmra.mxu0 %v707
        %v819 = vpop.f32.mrf.mxu0
        %v820 = vadd.f32 %v650, %v819
        %821 = vmatmul.f32.gmra.mxu0 %v710
        %v822 = vpop.f32.mrf.mxu0
        %v823 = vadd.f32 %v650, %v822
        %824 = vmatmul.f32.gmra.mxu0 %v713
        %v825 = vpop.f32.mrf.mxu0
        %v826 = vadd.f32 %v650, %v825
        %827 = vmatmul.f32.gmra.mxu0 %v716
        %v828 = vpop.f32.mrf.mxu0
        %v829 = vadd.f32 %v650, %v828
        %830 = vmatmul.f32.gmra.mxu0 %v719
        %v831 = vpop.f32.mrf.mxu0
        %v832 = vadd.f32 %v650, %v831
        %833 = vmatmul.f32.gmra.mxu0 %v722
        %v834 = vpop.f32.mrf.mxu0
        %v835 = vadd.f32 %v650, %v834
        %836 = vmatmul.f32.gmra.mxu0 %v725
        %v837 = vpop.f32.mrf.mxu0
        %v838 = vadd.f32 %v650, %v837
        %839 = vmatmul.f32.gmra.mxu0 %v728
        %v840 = vpop.f32.mrf.mxu0
        %v841 = vadd.f32 %v650, %v840
        %842 = vmatmul.f32.gmra.mxu0 %v731
        %v843 = vpop.f32.mrf.mxu0
        %v844 = vadd.f32 %v650, %v843
        %845 = vmatmul.f32.gmra.mxu0 %v734
        %v846 = vpop.f32.mrf.mxu0
        %v847 = vadd.f32 %v650, %v846
        %848 = vmatmul.f32.gmra.mxu0 %v737
        %v849 = vpop.f32.mrf.mxu0
        %v850 = vadd.f32 %v650, %v849
        %851 = vmatmul.f32.gmra.mxu0 %v740
        %v852 = vpop.f32.mrf.mxu0
        %v853 = vadd.f32 %v650, %v852
        %854 = vmatmul.f32.gmra.mxu0 %v743
        %v855 = vpop.f32.mrf.mxu0
        %v856 = vadd.f32 %v650, %v855
        %857 = vmatmul.f32.gmra.mxu0 %v746
        %v858 = vpop.f32.mrf.mxu0
        %v859 = vadd.f32 %v650, %v858
        %860 = vdwg.mxu0
        %s861 = sld [smem:[#allocation3]]
        %vm862 = vcmp.gt.f32.partialorder %v766, 0.0
        %vm863 = vcmp.gt.f32.partialorder %v769, 0.0
        %vm864 = vcmp.gt.f32.partialorder %v772, 0.0
        %vm865 = vcmp.gt.f32.partialorder %v775, 0.0
        %vm866 = vcmp.gt.f32.partialorder %v778, 0.0
        %vm867 = vcmp.gt.f32.partialorder %v781, 0.0
        %vm868 = vcmp.gt.f32.partialorder %v784, 0.0
        %vm869 = vcmp.gt.f32.partialorder %v787, 0.0
        %vm870 = vcmp.gt.f32.partialorder %v790, 0.0
        %vm871 = vcmp.gt.f32.partialorder %v793, 0.0
        %vm872 = vcmp.gt.f32.partialorder %v796, 0.0
        %vm873 = vcmp.gt.f32.partialorder %v799, 0.0
        %vm874 = vcmp.gt.f32.partialorder %v802, 0.0
        %vm875 = vcmp.gt.f32.partialorder %v805, 0.0
        %vm876 = vcmp.gt.f32.partialorder %v808, 0.0
        %vm877 = vcmp.gt.f32.partialorder %v811, 0.0
        %vm878 = vcmp.gt.f32.partialorder %v814, 0.0
        %vm879 = vcmp.gt.f32.partialorder %v817, 0.0
        %vm880 = vcmp.gt.f32.partialorder %v820, 0.0
        %vm881 = vcmp.gt.f32.partialorder %v823, 0.0
        %vm882 = vcmp.gt.f32.partialorder %v826, 0.0
        %vm883 = vcmp.gt.f32.partialorder %v829, 0.0
        %vm884 = vcmp.gt.f32.partialorder %v832, 0.0
        %vm885 = vcmp.gt.f32.partialorder %v835, 0.0
        %vm886 = vcmp.gt.f32.partialorder %v838, 0.0
        %vm887 = vcmp.gt.f32.partialorder %v841, 0.0
        %vm888 = vcmp.gt.f32.partialorder %v844, 0.0
        %vm889 = vcmp.gt.f32.partialorder %v847, 0.0
        %vm890 = vcmp.gt.f32.partialorder %v850, 0.0
        %vm891 = vcmp.gt.f32.partialorder %v853, 0.0
        %vm892 = vcmp.gt.f32.partialorder %v856, 0.0
        %vm893 = vcmp.gt.f32.partialorder %v859, 0.0
        %v894 = vstv %s861
        %v895 = vmul.f32 %v894, %v766
        %v896 = vmul.f32 %v894, %v769
        %v897 = vmul.f32 %v894, %v772
        %v898 = vmul.f32 %v894, %v775
        %v899 = vmul.f32 %v894, %v778
        %v900 = vmul.f32 %v894, %v781
        %v901 = vmul.f32 %v894, %v784
        %v902 = vmul.f32 %v894, %v787
        %v903 = vmul.f32 %v894, %v790
        %v904 = vmul.f32 %v894, %v793
        %v905 = vmul.f32 %v894, %v796
        %v906 = vmul.f32 %v894, %v799
        %v907 = vmul.f32 %v894, %v802
        %v908 = vmul.f32 %v894, %v805
        %v909 = vmul.f32 %v894, %v808
        %v910 = vmul.f32 %v894, %v811
        %v911 = vmul.f32 %v894, %v814
        %v912 = vmul.f32 %v894, %v817
        %v913 = vmul.f32 %v894, %v820
        %v914 = vmul.f32 %v894, %v823
        %v915 = vmul.f32 %v894, %v826
        %v916 = vmul.f32 %v894, %v829
        %v917 = vmul.f32 %v894, %v832
        %v918 = vmul.f32 %v894, %v835
        %v919 = vmul.f32 %v894, %v838
        %v920 = vmul.f32 %v894, %v841
        %v921 = vmul.f32 %v894, %v844
        %v922 = vmul.f32 %v894, %v847
        %v923 = vmul.f32 %v894, %v850
        %v924 = vmul.f32 %v894, %v853
        %v925 = vmul.f32 %v894, %v856
        %v926 = vmul.f32 %v894, %v859
        %v927 = vsel %vm862, %v766, %v895
        %v928 = vsel %vm863, %v769, %v896
        %v929 = vsel %vm864, %v772, %v897
        %v930 = vsel %vm865, %v775, %v898
        %v931 = vsel %vm866, %v778, %v899
        %v932 = vsel %vm867, %v781, %v900
        %v933 = vsel %vm868, %v784, %v901
        %v934 = vsel %vm869, %v787, %v902
        %v935 = vsel %vm870, %v790, %v903
        %v936 = vsel %vm871, %v793, %v904
        %v937 = vsel %vm872, %v796, %v905
        %v938 = vsel %vm873, %v799, %v906
        %v939 = vsel %vm874, %v802, %v907
        %v940 = vsel %vm875, %v805, %v908
        %v941 = vsel %vm876, %v808, %v909
        %v942 = vsel %vm877, %v811, %v910
        %v943 = vsel %vm878, %v814, %v911
        %v944 = vsel %vm879, %v817, %v912
        %v945 = vsel %vm880, %v820, %v913
        %v946 = vsel %vm881, %v823, %v914
        %v947 = vsel %vm882, %v826, %v915
        %v948 = vsel %vm883, %v829, %v916
        %v949 = vsel %vm884, %v832, %v917
        %v950 = vsel %vm885, %v835, %v918
        %v951 = vsel %vm886, %v838, %v919
        %v952 = vsel %vm887, %v841, %v920
        %v953 = vsel %vm888, %v844, %v921
        %v954 = vsel %vm889, %v847, %v922
        %v955 = vsel %vm890, %v850, %v923
        %v956 = vsel %vm891, %v853, %v924
        %v957 = vsel %vm892, %v856, %v925
        %v958 = vsel %vm893, %v859, %v926
        %v959 = vsel %vm434, %v927, 0.0
        %v960 = vsel %vm434, %v928, 0.0
        %v961 = vadd.f32 %v959, %v960
        %v962 = vsel %vm434, %v929, 0.0
        %v963 = vadd.f32 %v961, %v962
        %v964 = vsel %vm434, %v930, 0.0
        %v965 = vadd.f32 %v963, %v964
        %v966 = vsel %vm434, %v931, 0.0
        %v967 = vadd.f32 %v965, %v966
        %v968 = vsel %vm434, %v932, 0.0
        %v969 = vadd.f32 %v967, %v968
        %v970 = vsel %vm434, %v933, 0.0
        %v971 = vadd.f32 %v969, %v970
        %v972 = vsel %vm434, %v934, 0.0
        %v973 = vadd.f32 %v971, %v972
        %v974 = vsel %vm434, %v935, 0.0
        %v975 = vadd.f32 %v973, %v974
        %v976 = vsel %vm434, %v936, 0.0
        %v977 = vadd.f32 %v975, %v976
        %v978 = vsel %vm434, %v937, 0.0
        %v979 = vadd.f32 %v977, %v978
        %v980 = vsel %vm434, %v938, 0.0
        %v981 = vadd.f32 %v979, %v980
        %v982 = vsel %vm434, %v939, 0.0
        %v983 = vadd.f32 %v981, %v982
        %v984 = vsel %vm434, %v940, 0.0
        %v985 = vadd.f32 %v983, %v984
        %v986 = vsel %vm434, %v941, 0.0
        %v987 = vadd.f32 %v985, %v986
        %v988 = vsel %vm434, %v942, 0.0
        %v989 = vadd.f32 %v987, %v988
        %v990 = vsel %vm434, %v943, 0.0
        %v991 = vadd.f32 %v989, %v990
        %v992 = vsel %vm434, %v944, 0.0
        %v993 = vadd.f32 %v991, %v992
        %v994 = vsel %vm434, %v945, 0.0
        %v995 = vadd.f32 %v993, %v994
        %v996 = vsel %vm434, %v946, 0.0
        %v997 = vadd.f32 %v995, %v996
        %v998 = vsel %vm434, %v947, 0.0
        %v999 = vadd.f32 %v997, %v998
        %v1000 = vsel %vm434, %v948, 0.0
        %v1001 = vadd.f32 %v999, %v1000
        %v1002 = vsel %vm434, %v949, 0.0
        %v1003 = vadd.f32 %v1001, %v1002
        %v1004 = vsel %vm434, %v950, 0.0
        %v1005 = vadd.f32 %v1003, %v1004
        %v1006 = vsel %vm434, %v951, 0.0
        %v1007 = vadd.f32 %v1005, %v1006
        %v1008 = vsel %vm434, %v952, 0.0
        %v1009 = vadd.f32 %v1007, %v1008
        %v1010 = vsel %vm434, %v953, 0.0
        %v1011 = vadd.f32 %v1009, %v1010
        %v1012 = vsel %vm434, %v954, 0.0
        %v1013 = vadd.f32 %v1011, %v1012
        %v1014 = vsel %vm434, %v955, 0.0
        %v1015 = vadd.f32 %v1013, %v1014
        %v1016 = vsel %vm434, %v956, 0.0
        %v1017 = vadd.f32 %v1015, %v1016
        %v1018 = vsel %vm434, %v957, 0.0
        %v1019 = vadd.f32 %v1017, %v1018
        %v1020 = vsel %vm434, %v958, 0.0
        %v1021 = vadd.f32 %v1019, %v1020
        %v1022 = vrot.slane %v1021, 4
        %v1023 = vadd.f32 %v1021, %v1022
        %v1024 = vrot.slane %v1023, 2
        %v1025 = vadd.f32 %v1023, %v1024
        %v1026 = vrot.slane %v1025, 1
        %v1027 = vadd.f32 %v1025, %v1026
        %v1028 = vmul.f32 %v1027, 0.00390625
        %v1029 = vld [vmem:[%s6] sm:$0xff]
        %v1030 = vld [vmem:[%s6 + $0x8] sm:$0xff]
        %v1031 = vld [vmem:[%s6 + $0x10] sm:$0xff]
        %v1032 = vld [vmem:[%s6 + $0x18] sm:$0xff]
        %v1034 = vsel %vm434, %v1028, 0
        %1036 = vmatpush.msra.mxu0 0.0
        %1037 = vmatpush.msra.mxu0 0.0
        %1038 = vmatpush.msra.mxu0 0.0
        %1039 = vmatpush.msra.mxu0 0.0
        %1040 = vmatpush.msra.mxu0 0.0
        %1041 = vmatpush.msra.mxu0 0.0
        %1042 = vmatpush.msra.mxu0 0.0
        %1043 = vmatpush.msra.mxu0 0.0
        %1044 = vmatpush.msra.mxu0 0.0
        %1045 = vmatpush.msra.mxu0 0.0
        %1046 = vmatpush.msra.mxu0 0.0
        %1047 = vmatpush.msra.mxu0 0.0
        %1048 = vmatpush.msra.mxu0 %v1032
        %1049 = vmatpush.msra.mxu0 %v1031
        %1050 = vmatpush.msra.mxu0 %v1030
        %1051 = vmatpush.msra.mxu0 %v1029
        %1052 = vmatmul.f32.gmra.mxu0 %v1034
        %v1053 = vpop.f32.mrf.mxu0
        %v1054 = vadd.f32 0.0, %v1053
        %1055 = vdwg.mxu0
        %s1056 = sld [smem:[#allocation3 + $0x1]]
        %vm1057 = vcmp.gt.f32.partialorder %v1054, 0.0
        %v1058 = vstv %s1056
        %v1059 = vmul.f32 %v1058, %v1054
        %v1060 = vsel %vm1057, %v1054, %v1059
        %v1061 = vld [vmem:[%s7] sm:$0xff]
        %vm1062 = vcmask 64512
        %v1064 = vsel %vm1062, %v1060, 0
        %1066 = vmatpush.msra.mxu0 0.0
        %1067 = vmatpush.msra.mxu0 0.0
        %1068 = vmatpush.msra.mxu0 0.0
        %1069 = vmatpush.msra.mxu0 0.0
        %1070 = vmatpush.msra.mxu0 0.0
        %1071 = vmatpush.msra.mxu0 0.0
        %1072 = vmatpush.msra.mxu0 0.0
        %1073 = vmatpush.msra.mxu0 0.0
        %1074 = vmatpush.msra.mxu0 0.0
        %1075 = vmatpush.msra.mxu0 0.0
        %1076 = vmatpush.msra.mxu0 0.0
        %1077 = vmatpush.msra.mxu0 0.0
        %1078 = vmatpush.msra.mxu0 0.0
        %1079 = vmatpush.msra.mxu0 0.0
        %1080 = vmatpush.msra.mxu0 0.0
        %1081 = vmatpush.msra.mxu0 %v1061
        %1082 = vmatmul.f32.gmra.mxu0 %v1064
        %v1083 = vpop.f32.mrf.mxu0
        %v1084 = vadd.f32 0.0, %v1083
        %1085 = vdwg.mxu0
        %v1086 = vxor.u32 %v1084, 2147483648
        %v1087 = vmul.f32 %v1086, 1.442695
        %v1088 = vpow.pop %v1087
        %v1089 = vadd.f32 %v1088, 1.0
        %v1090 = vrcp.pop %v1089
        %v1091 = vmul.f32 %v1089, %v1090
        %v1092 = vsub.f32 1.0, %v1091
        %v1093 = vmul.f32 %v1090, %v1092
        %v1094 = vadd.f32 %v1090, %v1093
        %vm1095 = vweird.f32 %v1089
        %vm1096 = vweird.f32 %v1090
        %vm1097 = vmor %vm1095, %vm1096
        %v1098 = vsel %vm1097, %v1090, %v1094
        %v1099 = vand.u32 2147483647, %v1089
        %vm1100 = vcmp.eq.f32.partialorder %v1099, 8.507059e+37
        %v1101 = vand.u32 %v1089, 2147483648
        %v1102 = vor.u32 1.1754944e-38, %v1101
        %v1103 = vsel %vm1100, %v1102, %v1098
        %v1104 = vmul.f32 1.0, %v1103
        %v1105 = vperm.slane %v1104, 0
        %v1106 = vmul.f32 %v927, %v1105
        %v1107 = vmul.f32 %v928, %v1105
        %v1108 = vmul.f32 %v929, %v1105
        %v1109 = vmul.f32 %v930, %v1105
        %v1110 = vmul.f32 %v931, %v1105
        %v1111 = vmul.f32 %v932, %v1105
        %v1112 = vmul.f32 %v933, %v1105
        %v1113 = vmul.f32 %v934, %v1105
        %v1114 = vmul.f32 %v935, %v1105
        %v1115 = vmul.f32 %v936, %v1105
        %v1116 = vmul.f32 %v937, %v1105
        %v1117 = vmul.f32 %v938, %v1105
        %v1118 = vmul.f32 %v939, %v1105
        %v1119 = vmul.f32 %v940, %v1105
        %v1120 = vmul.f32 %v941, %v1105
        %v1121 = vmul.f32 %v942, %v1105
        %v1122 = vmul.f32 %v943, %v1105
        %v1123 = vmul.f32 %v944, %v1105
        %v1124 = vmul.f32 %v945, %v1105
        %v1125 = vmul.f32 %v946, %v1105
        %v1126 = vmul.f32 %v947, %v1105
        %v1127 = vmul.f32 %v948, %v1105
        %v1128 = vmul.f32 %v949, %v1105
        %v1129 = vmul.f32 %v950, %v1105
        %v1130 = vmul.f32 %v951, %v1105
        %v1131 = vmul.f32 %v952, %v1105
        %v1132 = vmul.f32 %v953, %v1105
        %v1133 = vmul.f32 %v954, %v1105
        %v1134 = vmul.f32 %v955, %v1105
        %v1135 = vmul.f32 %v956, %v1105
        %v1136 = vmul.f32 %v957, %v1105
        %v1137 = vmul.f32 %v958, %v1105
        %1138 = vst.msk [vmem:[#allocation2] sm:$0xff] %vm434, 0.0
        %1139 = vst.msk [vmem:[#allocation2 + $0x8] sm:$0xff] %vm434, 0.0
        %1140 = vst.msk [vmem:[#allocation2 + $0x10] sm:$0xff] %vm434, 0.0
        %1141 = vst.msk [vmem:[#allocation2 + $0x18] sm:$0xff] %vm434, 0.0
        %1142 = vst.msk [vmem:[#allocation2 + $0x20] sm:$0xff] %vm434, 0.0
        %1143 = vst.msk [vmem:[#allocation2 + $0x28] sm:$0xff] %vm434, 0.0
        %1144 = vst.msk [vmem:[#allocation2 + $0x30] sm:$0xff] %vm434, 0.0
        %1145 = vst.msk [vmem:[#allocation2 + $0x38] sm:$0xff] %vm434, 0.0
        %1146 = vst.msk [vmem:[#allocation2 + $0x40] sm:$0xff] %vm434, 0.0
        %1147 = vst.msk [vmem:[#allocation2 + $0x48] sm:$0xff] %vm434, 0.0
        %1148 = vst.msk [vmem:[#allocation2 + $0x50] sm:$0xff] %vm434, 0.0
        %1149 = vst.msk [vmem:[#allocation2 + $0x58] sm:$0xff] %vm434, 0.0
        %1150 = vst.msk [vmem:[#allocation2 + $0x60] sm:$0xff] %vm434, 0.0
        %1151 = vst.msk [vmem:[#allocation2 + $0x68] sm:$0xff] %vm434, 0.0
        %1152 = vst.msk [vmem:[#allocation2 + $0x70] sm:$0xff] %vm434, 0.0
        %1153 = vst.msk [vmem:[#allocation2 + $0x78] sm:$0xff] %vm434, 0.0
        %1154 = vst.msk [vmem:[#allocation2 + $0x80] sm:$0xff] %vm434, 0.0
        %1155 = vst.msk [vmem:[#allocation2 + $0x88] sm:$0xff] %vm434, 0.0
        %1156 = vst.msk [vmem:[#allocation2 + $0x90] sm:$0xff] %vm434, 0.0
        %1157 = vst.msk [vmem:[#allocation2 + $0x98] sm:$0xff] %vm434, 0.0
        %1158 = vst.msk [vmem:[#allocation2 + $0xa0] sm:$0xff] %vm434, 0.0
        %1159 = vst.msk [vmem:[#allocation2 + $0xa8] sm:$0xff] %vm434, 0.0
        %1160 = vst.msk [vmem:[#allocation2 + $0xb0] sm:$0xff] %vm434, 0.0
        %1161 = vst.msk [vmem:[#allocation2 + $0xb8] sm:$0xff] %vm434, 0.0
        %1162 = vst.msk [vmem:[#allocation2 + $0xc0] sm:$0xff] %vm434, 0.0
        %1163 = vst.msk [vmem:[#allocation2 + $0xc8] sm:$0xff] %vm434, 0.0
        %1164 = vst.msk [vmem:[#allocation2 + $0xd0] sm:$0xff] %vm434, 0.0
        %1165 = vst.msk [vmem:[#allocation2 + $0xd8] sm:$0xff] %vm434, 0.0
        %1166 = vst.msk [vmem:[#allocation2 + $0xe0] sm:$0xff] %vm434, 0.0
        %1167 = vst.msk [vmem:[#allocation2 + $0xe8] sm:$0xff] %vm434, 0.0
        %1168 = vst.msk [vmem:[#allocation2 + $0xf0] sm:$0xff] %vm434, 0.0
        %1169 = vst.msk [vmem:[#allocation2 + $0xf8] sm:$0xff] %vm434, 0.0
        %1170 = vst.msk [vmem:[#allocation2 + $0x100] sm:$0xff] %vm434, 0.0
        %1171 = vst.msk [vmem:[#allocation2 + $0x108] sm:$0xff] %vm434, 0.0
        %1172 = vst.msk [vmem:[#allocation2 + $0x110] sm:$0xff] %vm434, 0.0
        %1173 = vst.msk [vmem:[#allocation2 + $0x118] sm:$0xff] %vm434, 0.0
        %1174 = vst.msk [vmem:[#allocation2 + $0x120] sm:$0xff] %vm434, 0.0
        %1175 = vst.msk [vmem:[#allocation2 + $0x128] sm:$0xff] %vm434, 0.0
        %1176 = vst.msk [vmem:[#allocation2 + $0x130] sm:$0xff] %vm434, 0.0
        %1177 = vst.msk [vmem:[#allocation2 + $0x138] sm:$0xff] %vm434, 0.0
        %1178 = vst.msk [vmem:[#allocation2 + $0x140] sm:$0xff] %vm434, 0.0
        %1179 = vst.msk [vmem:[#allocation2 + $0x148] sm:$0xff] %vm434, 0.0
        %1180 = vst.msk [vmem:[#allocation2 + $0x150] sm:$0xff] %vm434, 0.0
        %1181 = vst.msk [vmem:[#allocation2 + $0x158] sm:$0xff] %vm434, 0.0
        %1182 = vst.msk [vmem:[#allocation2 + $0x160] sm:$0xff] %vm434, 0.0
        %1183 = vst.msk [vmem:[#allocation2 + $0x168] sm:$0xff] %vm434, 0.0
        %1184 = vst.msk [vmem:[#allocation2 + $0x170] sm:$0xff] %vm434, 0.0
        %1185 = vst.msk [vmem:[#allocation2 + $0x178] sm:$0xff] %vm434, 0.0
        %1186 = vst.msk [vmem:[#allocation2 + $0x180] sm:$0xff] %vm434, 0.0
        %1187 = vst.msk [vmem:[#allocation2 + $0x188] sm:$0xff] %vm434, 0.0
        %1188 = vst.msk [vmem:[#allocation2 + $0x190] sm:$0xff] %vm434, 0.0
        %1189 = vst.msk [vmem:[#allocation2 + $0x198] sm:$0xff] %vm434, 0.0
        %1190 = vst.msk [vmem:[#allocation2 + $0x1a0] sm:$0xff] %vm434, 0.0
        %1191 = vst.msk [vmem:[#allocation2 + $0x1a8] sm:$0xff] %vm434, 0.0
        %1192 = vst.msk [vmem:[#allocation2 + $0x1b0] sm:$0xff] %vm434, 0.0
        %1193 = vst.msk [vmem:[#allocation2 + $0x1b8] sm:$0xff] %vm434, 0.0
        %1194 = vst.msk [vmem:[#allocation2 + $0x1c0] sm:$0xff] %vm434, 0.0
        %1195 = vst.msk [vmem:[#allocation2 + $0x1c8] sm:$0xff] %vm434, 0.0
        %1196 = vst.msk [vmem:[#allocation2 + $0x1d0] sm:$0xff] %vm434, 0.0
        %1197 = vst.msk [vmem:[#allocation2 + $0x1d8] sm:$0xff] %vm434, 0.0
        %1198 = vst.msk [vmem:[#allocation2 + $0x1e0] sm:$0xff] %vm434, 0.0
        %1199 = vst.msk [vmem:[#allocation2 + $0x1e8] sm:$0xff] %vm434, 0.0
        %1200 = vst.msk [vmem:[#allocation2 + $0x1f0] sm:$0xff] %vm434, 0.0
        %1201 = vst.msk [vmem:[#allocation2 + $0x1f8] sm:$0xff] %vm434, 0.0
        %1202 = vst.msk [vmem:[#allocation2 + $0x200] sm:$0xff] %vm434, 0.0
        %1203 = vst.msk [vmem:[#allocation2 + $0x208] sm:$0xff] %vm434, 0.0
        %s1204 = scalar_lea.vmem [#allocation2], 72
        %1205 = vst.msk [vmem:[%s1204] sm:$0xff] %vm434, %v1106
        %1206 = vst.msk [vmem:[%s1204 + $0x8] sm:$0xff] %vm434, %v1107
        %1207 = vst.msk [vmem:[%s1204 + $0x18] sm:$0xff] %vm434, %v1108
        %1208 = vst.msk [vmem:[%s1204 + $0x20] sm:$0xff] %vm434, %v1109
        %1209 = vst.msk [vmem:[%s1204 + $0x30] sm:$0xff] %vm434, %v1110
        %1210 = vst.msk [vmem:[%s1204 + $0x38] sm:$0xff] %vm434, %v1111
        %1211 = vst.msk [vmem:[%s1204 + $0x48] sm:$0xff] %vm434, %v1112
        %1212 = vst.msk [vmem:[%s1204 + $0x50] sm:$0xff] %vm434, %v1113
        %1213 = vst.msk [vmem:[%s1204 + $0x60] sm:$0xff] %vm434, %v1114
        %1214 = vst.msk [vmem:[%s1204 + $0x68] sm:$0xff] %vm434, %v1115
        %1215 = vst.msk [vmem:[%s1204 + $0x78] sm:$0xff] %vm434, %v1116
        %1216 = vst.msk [vmem:[%s1204 + $0x80] sm:$0xff] %vm434, %v1117
        %1217 = vst.msk [vmem:[%s1204 + $0x90] sm:$0xff] %vm434, %v1118
        %1218 = vst.msk [vmem:[%s1204 + $0x98] sm:$0xff] %vm434, %v1119
        %1219 = vst.msk [vmem:[%s1204 + $0xa8] sm:$0xff] %vm434, %v1120
        %1220 = vst.msk [vmem:[%s1204 + $0xb0] sm:$0xff] %vm434, %v1121
        %1221 = vst.msk [vmem:[%s1204 + $0xc0] sm:$0xff] %vm434, %v1122
        %1222 = vst.msk [vmem:[%s1204 + $0xc8] sm:$0xff] %vm434, %v1123
        %1223 = vst.msk [vmem:[%s1204 + $0xd8] sm:$0xff] %vm434, %v1124
        %1224 = vst.msk [vmem:[%s1204 + $0xe0] sm:$0xff] %vm434, %v1125
        %1225 = vst.msk [vmem:[%s1204 + $0xf0] sm:$0xff] %vm434, %v1126
        %1226 = vst.msk [vmem:[%s1204 + $0xf8] sm:$0xff] %vm434, %v1127
        %1227 = vst.msk [vmem:[%s1204 + $0x108] sm:$0xff] %vm434, %v1128
        %1228 = vst.msk [vmem:[%s1204 + $0x110] sm:$0xff] %vm434, %v1129
        %1229 = vst.msk [vmem:[%s1204 + $0x120] sm:$0xff] %vm434, %v1130
        %1230 = vst.msk [vmem:[%s1204 + $0x128] sm:$0xff] %vm434, %v1131
        %1231 = vst.msk [vmem:[%s1204 + $0x138] sm:$0xff] %vm434, %v1132
        %1232 = vst.msk [vmem:[%s1204 + $0x140] sm:$0xff] %vm434, %v1133
        %1233 = vst.msk [vmem:[%s1204 + $0x150] sm:$0xff] %vm434, %v1134
        %1234 = vst.msk [vmem:[%s1204 + $0x158] sm:$0xff] %vm434, %v1135
        %1235 = vst.msk [vmem:[%s1204 + $0x168] sm:$0xff] %vm434, %v1136
        %1236 = vst.msk [vmem:[%s1204 + $0x170] sm:$0xff] %vm434, %v1137
        %v1237 = vld [vmem:[#allocation2] sm:$0xff]
        %v1238 = vld [vmem:[#allocation2 + $0x8] sm:$0xff]
        %v1239 = vld [vmem:[#allocation2 + $0x10] sm:$0xff]
        %v1240 = vld [vmem:[#allocation2 + $0x18] sm:$0xff]
        %v1241 = vld [vmem:[#allocation2 + $0x20] sm:$0xff]
        %v1242 = vld [vmem:[#allocation2 + $0x28] sm:$0xff]
        %v1243 = vld [vmem:[#allocation2 + $0x30] sm:$0xff]
        %v1244 = vld [vmem:[#allocation2 + $0x38] sm:$0xff]
        %v1245 = vld [vmem:[#allocation2 + $0x40] sm:$0xff]
        %v1246 = vld [vmem:[#allocation2 + $0x48] sm:$0xff]
        %v1247 = vld [vmem:[#allocation2 + $0x50] sm:$0xff]
        %v1248 = vld [vmem:[#allocation2 + $0x58] sm:$0xff]
        %v1249 = vld [vmem:[#allocation2 + $0x60] sm:$0xff]
        %v1250 = vld [vmem:[#allocation2 + $0x68] sm:$0xff]
        %v1251 = vld [vmem:[#allocation2 + $0x70] sm:$0xff]
        %v1252 = vld [vmem:[#allocation2 + $0x78] sm:$0xff]
        %v1253 = vld [vmem:[#allocation2 + $0x80] sm:$0xff]
        %v1254 = vld [vmem:[#allocation2 + $0x88] sm:$0xff]
        %v1255 = vld [vmem:[#allocation2 + $0x90] sm:$0xff]
        %v1256 = vld [vmem:[#allocation2 + $0x98] sm:$0xff]
        %v1257 = vld [vmem:[#allocation2 + $0xa0] sm:$0xff]
        %v1258 = vld [vmem:[#allocation2 + $0xa8] sm:$0xff]
        %v1259 = vld [vmem:[#allocation2 + $0xb0] sm:$0xff]
        %v1260 = vld [vmem:[#allocation2 + $0xb8] sm:$0xff]
        %v1261 = vld [vmem:[#allocation2 + $0xc0] sm:$0xff]
        %v1262 = vld [vmem:[#allocation2 + $0xc8] sm:$0xff]
        %v1263 = vld [vmem:[#allocation2 + $0xd0] sm:$0xff]
        %v1264 = vld [vmem:[#allocation2 + $0xd8] sm:$0xff]
        %v1265 = vld [vmem:[#allocation2 + $0xe0] sm:$0xff]
        %v1266 = vld [vmem:[#allocation2 + $0xe8] sm:$0xff]
        %v1267 = vld [vmem:[#allocation2 + $0xf0] sm:$0xff]
        %v1268 = vld [vmem:[#allocation2 + $0xf8] sm:$0xff]
        %v1269 = vld [vmem:[#allocation2 + $0x100] sm:$0xff]
        %v1270 = vld [vmem:[#allocation2 + $0x108] sm:$0xff]
        %v1271 = vld [vmem:[#allocation2 + $0x110] sm:$0xff]
        %v1272 = vld [vmem:[#allocation2 + $0x118] sm:$0xff]
        %v1273 = vld [vmem:[#allocation2 + $0x120] sm:$0xff]
        %v1274 = vld [vmem:[#allocation2 + $0x128] sm:$0xff]
        %v1275 = vld [vmem:[#allocation2 + $0x130] sm:$0xff]
        %v1276 = vld [vmem:[#allocation2 + $0x138] sm:$0xff]
        %v1277 = vld [vmem:[#allocation2 + $0x140] sm:$0xff]
        %v1278 = vld [vmem:[#allocation2 + $0x148] sm:$0xff]
        %v1279 = vld [vmem:[#allocation2 + $0x150] sm:$0xff]
        %v1280 = vld [vmem:[#allocation2 + $0x158] sm:$0xff]
        %v1281 = vld [vmem:[#allocation2 + $0x160] sm:$0xff]
        %v1282 = vld [vmem:[#allocation2 + $0x168] sm:$0xff]
        %v1283 = vld [vmem:[#allocation2 + $0x170] sm:$0xff]
        %v1284 = vld [vmem:[#allocation2 + $0x178] sm:$0xff]
        %v1285 = vld [vmem:[#allocation2 + $0x180] sm:$0xff]
        %v1286 = vld [vmem:[#allocation2 + $0x188] sm:$0xff]
        %v1287 = vld [vmem:[#allocation2 + $0x190] sm:$0xff]
        %v1288 = vld [vmem:[#allocation2 + $0x198] sm:$0xff]
        %v1289 = vld [vmem:[#allocation2 + $0x1a0] sm:$0xff]
        %v1290 = vld [vmem:[#allocation2 + $0x1a8] sm:$0xff]
        %v1291 = vld [vmem:[#allocation2 + $0x1b0] sm:$0xff]
        %v1292 = vld [vmem:[#allocation2 + $0x1b8] sm:$0xff]
        %v1293 = vld [vmem:[#allocation2 + $0x1c0] sm:$0xff]
        %v1294 = vld [vmem:[#allocation2 + $0x1c8] sm:$0xff]
        %v1295 = vld [vmem:[#allocation2 + $0x1d0] sm:$0xff]
        %v1296 = vld [vmem:[#allocation2 + $0x1d8] sm:$0xff]
        %v1297 = vld [vmem:[#allocation2 + $0x1e0] sm:$0xff]
        %v1298 = vld [vmem:[#allocation2 + $0x1e8] sm:$0xff]
        %v1299 = vld [vmem:[#allocation2 + $0x1f0] sm:$0xff]
        %v1300 = vld [vmem:[#allocation2 + $0x1f8] sm:$0xff]
        %v1301 = vld [vmem:[#allocation2 + $0x200] sm:$0xff]
        %v1302 = vld [vmem:[#allocation2 + $0x208] sm:$0xff]
        %v1303 = vld [vmem:[%s8] sm:$0xff]
        %v1304 = vld [vmem:[%s8 + $0x8] sm:$0xff]
        %v1305 = vld [vmem:[%s8 + $0x10] sm:$0xff]
        %v1306 = vld [vmem:[%s8 + $0x18] sm:$0xff]
        %v1307 = vld [vmem:[%s8 + $0x20] sm:$0xff]
        %v1308 = vld [vmem:[%s8 + $0x28] sm:$0xff]
        %v1309 = vld [vmem:[%s8 + $0x30] sm:$0x1]
        %v1310 = vrot.slane %v1237, 5
        %v1311 = vrot.slane %v1240, 5
        %v1312 = vrot.slane %v1243, 5
        %v1313 = vrot.slane %v1246, 5
        %v1314 = vrot.slane %v1249, 5
        %v1315 = vrot.slane %v1252, 5
        %v1316 = vrot.slane %v1255, 5
        %v1317 = vrot.slane %v1258, 5
        %v1318 = vrot.slane %v1261, 5
        %v1319 = vrot.slane %v1264, 5
        %v1320 = vrot.slane %v1267, 5
        %v1321 = vrot.slane %v1270, 5
        %v1322 = vrot.slane %v1273, 5
        %v1323 = vrot.slane %v1276, 5
        %v1324 = vrot.slane %v1279, 5
        %v1325 = vrot.slane %v1282, 5
        %v1326 = vrot.slane %v1285, 5
        %v1327 = vrot.slane %v1288, 5
        %v1328 = vrot.slane %v1291, 5
        %v1329 = vrot.slane %v1294, 5
        %v1330 = vrot.slane %v1297, 5
        %v1331 = vrot.slane %v1300, 5
        %v1332 = vrot.slane %v1238, 5
        %v1333 = vrot.slane %v1241, 5
        %v1334 = vrot.slane %v1244, 5
        %v1335 = vrot.slane %v1247, 5
        %v1336 = vrot.slane %v1250, 5
        %v1337 = vrot.slane %v1253, 5
        %v1338 = vrot.slane %v1256, 5
        %v1339 = vrot.slane %v1259, 5
        %v1340 = vrot.slane %v1262, 5
        %v1341 = vrot.slane %v1265, 5
        %v1342 = vrot.slane %v1268, 5
        %v1343 = vrot.slane %v1271, 5
        %v1344 = vrot.slane %v1274, 5
        %v1345 = vrot.slane %v1277, 5
        %v1346 = vrot.slane %v1280, 5
        %v1347 = vrot.slane %v1283, 5
        %v1348 = vrot.slane %v1286, 5
        %v1349 = vrot.slane %v1289, 5
        %v1350 = vrot.slane %v1292, 5
        %v1351 = vrot.slane %v1295, 5
        %v1352 = vrot.slane %v1298, 5
        %v1353 = vrot.slane %v1301, 5
        %v1354 = vrot.slane %v1239, 5
        %v1355 = vrot.slane %v1242, 5
        %v1356 = vrot.slane %v1245, 5
        %v1357 = vrot.slane %v1248, 5
        %v1358 = vrot.slane %v1251, 5
        %v1359 = vrot.slane %v1254, 5
        %v1360 = vrot.slane %v1257, 5
        %v1361 = vrot.slane %v1260, 5
        %v1362 = vrot.slane %v1263, 5
        %v1363 = vrot.slane %v1266, 5
        %v1364 = vrot.slane %v1269, 5
        %v1365 = vrot.slane %v1272, 5
        %v1366 = vrot.slane %v1275, 5
        %v1367 = vrot.slane %v1278, 5
        %v1368 = vrot.slane %v1281, 5
        %v1369 = vrot.slane %v1284, 5
        %v1370 = vrot.slane %v1287, 5
        %v1371 = vrot.slane %v1290, 5
        %v1372 = vrot.slane %v1293, 5
        %v1373 = vrot.slane %v1296, 5
        %v1374 = vrot.slane %v1299, 5
        %v1375 = vrot.slane %v1302, 5
        %v1376 = vlaneseq
        %v1377 = vshrl.u32 %v1376, 7
        %vm1378 = vcmp.lt.s32.totalorder %v1377, 3
        %v1379 = vsel %vm1378, %v1310, %v1332
        %v1380 = vsel %vm1378, %v1311, %v1333
        %v1381 = vsel %vm1378, %v1312, %v1334
        %v1382 = vsel %vm1378, %v1313, %v1335
        %v1383 = vsel %vm1378, %v1314, %v1336
        %v1384 = vsel %vm1378, %v1315, %v1337
        %v1385 = vsel %vm1378, %v1316, %v1338
        %v1386 = vsel %vm1378, %v1317, %v1339
        %v1387 = vsel %vm1378, %v1318, %v1340
        %v1388 = vsel %vm1378, %v1319, %v1341
        %v1389 = vsel %vm1378, %v1320, %v1342
        %v1390 = vsel %vm1378, %v1321, %v1343
        %v1391 = vsel %vm1378, %v1322, %v1344
        %v1392 = vsel %vm1378, %v1323, %v1345
        %v1393 = vsel %vm1378, %v1324, %v1346
        %v1394 = vsel %vm1378, %v1325, %v1347
        %v1395 = vsel %vm1378, %v1326, %v1348
        %v1396 = vsel %vm1378, %v1327, %v1349
        %v1397 = vsel %vm1378, %v1328, %v1350
        %v1398 = vsel %vm1378, %v1329, %v1351
        %v1399 = vsel %vm1378, %v1330, %v1352
        %v1400 = vsel %vm1378, %v1331, %v1353
        %v1401 = vsel %vm1378, %v1354, %v1310
        %v1402 = vsel %vm1378, %v1355, %v1311
        %v1403 = vsel %vm1378, %v1356, %v1312
        %v1404 = vsel %vm1378, %v1357, %v1313
        %v1405 = vsel %vm1378, %v1358, %v1314
        %v1406 = vsel %vm1378, %v1359, %v1315
        %v1407 = vsel %vm1378, %v1360, %v1316
        %v1408 = vsel %vm1378, %v1361, %v1317
        %v1409 = vsel %vm1378, %v1362, %v1318
        %v1410 = vsel %vm1378, %v1363, %v1319
        %v1411 = vsel %vm1378, %v1364, %v1320
        %v1412 = vsel %vm1378, %v1365, %v1321
        %v1413 = vsel %vm1378, %v1366, %v1322
        %v1414 = vsel %vm1378, %v1367, %v1323
        %v1415 = vsel %vm1378, %v1368, %v1324
        %v1416 = vsel %vm1378, %v1369, %v1325
        %v1417 = vsel %vm1378, %v1370, %v1326
        %v1418 = vsel %vm1378, %v1371, %v1327
        %v1419 = vsel %vm1378, %v1372, %v1328
        %v1420 = vsel %vm1378, %v1373, %v1329
        %v1421 = vsel %vm1378, %v1374, %v1330
        %v1422 = vsel %vm1378, %v1375, %v1331
        %v1423 = vperm.slane %v1303, 0
        %v1424 = vmul.f32 %v1401, %v1423
        %v1425 = vmul.f32 %v1379, %v1423
        %v1426 = vmul.f32 %v1402, %v1423
        %v1427 = vmul.f32 %v1380, %v1423
        %v1428 = vmul.f32 %v1403, %v1423
        %v1429 = vmul.f32 %v1381, %v1423
        %v1430 = vmul.f32 %v1404, %v1423
        %v1431 = vmul.f32 %v1382, %v1423
        %v1432 = vmul.f32 %v1405, %v1423
        %v1433 = vmul.f32 %v1383, %v1423
        %v1434 = vmul.f32 %v1406, %v1423
        %v1435 = vmul.f32 %v1384, %v1423
        %v1436 = vmul.f32 %v1407, %v1423
        %v1437 = vmul.f32 %v1385, %v1423
        %v1438 = vmul.f32 %v1408, %v1423
        %v1439 = vmul.f32 %v1386, %v1423
        %v1440 = vmul.f32 %v1409, %v1423
        %v1441 = vmul.f32 %v1387, %v1423
        %v1442 = vmul.f32 %v1410, %v1423
        %v1443 = vmul.f32 %v1388, %v1423
        %v1444 = vmul.f32 %v1411, %v1423
        %v1445 = vmul.f32 %v1389, %v1423
        %v1446 = vmul.f32 %v1412, %v1423
        %v1447 = vmul.f32 %v1390, %v1423
        %v1448 = vmul.f32 %v1413, %v1423
        %v1449 = vmul.f32 %v1391, %v1423
        %v1450 = vmul.f32 %v1414, %v1423
        %v1451 = vmul.f32 %v1392, %v1423
        %v1452 = vmul.f32 %v1415, %v1423
        %v1453 = vmul.f32 %v1393, %v1423
        %v1454 = vmul.f32 %v1416, %v1423
        %v1455 = vmul.f32 %v1394, %v1423
        %v1456 = vadd.f32 %v1424, 0.0
        %v1457 = vadd.f32 %v1425, 0.0
        %v1458 = vadd.f32 %v1426, 0.0
        %v1459 = vadd.f32 %v1427, 0.0
        %v1460 = vadd.f32 %v1428, 0.0
        %v1461 = vadd.f32 %v1429, 0.0
        %v1462 = vadd.f32 %v1430, 0.0
        %v1463 = vadd.f32 %v1431, 0.0
        %v1464 = vadd.f32 %v1432, 0.0
        %v1465 = vadd.f32 %v1433, 0.0
        %v1466 = vadd.f32 %v1434, 0.0
        %v1467 = vadd.f32 %v1435, 0.0
        %v1468 = vadd.f32 %v1436, 0.0
        %v1469 = vadd.f32 %v1437, 0.0
        %v1470 = vadd.f32 %v1438, 0.0
        %v1471 = vadd.f32 %v1439, 0.0
        %v1472 = vadd.f32 %v1440, 0.0
        %v1473 = vadd.f32 %v1441, 0.0
        %v1474 = vadd.f32 %v1442, 0.0
        %v1475 = vadd.f32 %v1443, 0.0
        %v1476 = vadd.f32 %v1444, 0.0
        %v1477 = vadd.f32 %v1445, 0.0
        %v1478 = vadd.f32 %v1446, 0.0
        %v1479 = vadd.f32 %v1447, 0.0
        %v1480 = vadd.f32 %v1448, 0.0
        %v1481 = vadd.f32 %v1449, 0.0
        %v1482 = vadd.f32 %v1450, 0.0
        %v1483 = vadd.f32 %v1451, 0.0
        %v1484 = vadd.f32 %v1452, 0.0
        %v1485 = vadd.f32 %v1453, 0.0
        %v1486 = vadd.f32 %v1454, 0.0
        %v1487 = vadd.f32 %v1455, 0.0
        %v1488 = vperm.slane %v1303, 7
        %v1489 = vmul.f32 %v1402, %v1488
        %v1490 = vmul.f32 %v1380, %v1488
        %v1491 = vmul.f32 %v1403, %v1488
        %v1492 = vmul.f32 %v1381, %v1488
        %v1493 = vmul.f32 %v1404, %v1488
        %v1494 = vmul.f32 %v1382, %v1488
        %v1495 = vmul.f32 %v1405, %v1488
        %v1496 = vmul.f32 %v1383, %v1488
        %v1497 = vmul.f32 %v1406, %v1488
        %v1498 = vmul.f32 %v1384, %v1488
        %v1499 = vmul.f32 %v1407, %v1488
        %v1500 = vmul.f32 %v1385, %v1488
        %v1501 = vmul.f32 %v1408, %v1488
        %v1502 = vmul.f32 %v1386, %v1488
        %v1503 = vmul.f32 %v1409, %v1488
        %v1504 = vmul.f32 %v1387, %v1488
        %v1505 = vmul.f32 %v1410, %v1488
        %v1506 = vmul.f32 %v1388, %v1488
        %v1507 = vmul.f32 %v1411, %v1488
        %v1508 = vmul.f32 %v1389, %v1488
        %v1509 = vmul.f32 %v1412, %v1488
        %v1510 = vmul.f32 %v1390, %v1488
        %v1511 = vmul.f32 %v1413, %v1488
        %v1512 = vmul.f32 %v1391, %v1488
        %v1513 = vmul.f32 %v1414, %v1488
        %v1514 = vmul.f32 %v1392, %v1488
        %v1515 = vmul.f32 %v1415, %v1488
        %v1516 = vmul.f32 %v1393, %v1488
        %v1517 = vmul.f32 %v1416, %v1488
        %v1518 = vmul.f32 %v1394, %v1488
        %v1519 = vmul.f32 %v1417, %v1488
        %v1520 = vmul.f32 %v1395, %v1488
        %v1521 = vadd.f32 %v1456, %v1489
        %v1522 = vadd.f32 %v1457, %v1490
        %v1523 = vadd.f32 %v1458, %v1491
        %v1524 = vadd.f32 %v1459, %v1492
        %v1525 = vadd.f32 %v1460, %v1493
        %v1526 = vadd.f32 %v1461, %v1494
        %v1527 = vadd.f32 %v1462, %v1495
        %v1528 = vadd.f32 %v1463, %v1496
        %v1529 = vadd.f32 %v1464, %v1497
        %v1530 = vadd.f32 %v1465, %v1498
        %v1531 = vadd.f32 %v1466, %v1499
        %v1532 = vadd.f32 %v1467, %v1500
        %v1533 = vadd.f32 %v1468, %v1501
        %v1534 = vadd.f32 %v1469, %v1502
        %v1535 = vadd.f32 %v1470, %v1503
        %v1536 = vadd.f32 %v1471, %v1504
        %v1537 = vadd.f32 %v1472, %v1505
        %v1538 = vadd.f32 %v1473, %v1506
        %v1539 = vadd.f32 %v1474, %v1507
        %v1540 = vadd.f32 %v1475, %v1508
        %v1541 = vadd.f32 %v1476, %v1509
        %v1542 = vadd.f32 %v1477, %v1510
        %v1543 = vadd.f32 %v1478, %v1511
        %v1544 = vadd.f32 %v1479, %v1512
        %v1545 = vadd.f32 %v1480, %v1513
        %v1546 = vadd.f32 %v1481, %v1514
        %v1547 = vadd.f32 %v1482, %v1515
        %v1548 = vadd.f32 %v1483, %v1516
        %v1549 = vadd.f32 %v1484, %v1517
        %v1550 = vadd.f32 %v1485, %v1518
        %v1551 = vadd.f32 %v1486, %v1519
        %v1552 = vadd.f32 %v1487, %v1520
        %v1553 = vperm.slane %v1304, 6
        %v1554 = vmul.f32 %v1403, %v1553
        %v1555 = vmul.f32 %v1381, %v1553
        %v1556 = vmul.f32 %v1404, %v1553
        %v1557 = vmul.f32 %v1382, %v1553
        %v1558 = vmul.f32 %v1405, %v1553
        %v1559 = vmul.f32 %v1383, %v1553
        %v1560 = vmul.f32 %v1406, %v1553
        %v1561 = vmul.f32 %v1384, %v1553
        %v1562 = vmul.f32 %v1407, %v1553
        %v1563 = vmul.f32 %v1385, %v1553
        %v1564 = vmul.f32 %v1408, %v1553
        %v1565 = vmul.f32 %v1386, %v1553
        %v1566 = vmul.f32 %v1409, %v1553
        %v1567 = vmul.f32 %v1387, %v1553
        %v1568 = vmul.f32 %v1410, %v1553
        %v1569 = vmul.f32 %v1388, %v1553
        %v1570 = vmul.f32 %v1411, %v1553
        %v1571 = vmul.f32 %v1389, %v1553
        %v1572 = vmul.f32 %v1412, %v1553
        %v1573 = vmul.f32 %v1390, %v1553
        %v1574 = vmul.f32 %v1413, %v1553
        %v1575 = vmul.f32 %v1391, %v1553
        %v1576 = vmul.f32 %v1414, %v1553
        %v1577 = vmul.f32 %v1392, %v1553
        %v1578 = vmul.f32 %v1415, %v1553
        %v1579 = vmul.f32 %v1393, %v1553
        %v1580 = vmul.f32 %v1416, %v1553
        %v1581 = vmul.f32 %v1394, %v1553
        %v1582 = vmul.f32 %v1417, %v1553
        %v1583 = vmul.f32 %v1395, %v1553
        %v1584 = vmul.f32 %v1418, %v1553
        %v1585 = vmul.f32 %v1396, %v1553
        %v1586 = vadd.f32 %v1521, %v1554
        %v1587 = vadd.f32 %v1522, %v1555
        %v1588 = vadd.f32 %v1523, %v1556
        %v1589 = vadd.f32 %v1524, %v1557
        %v1590 = vadd.f32 %v1525, %v1558
        %v1591 = vadd.f32 %v1526, %v1559
        %v1592 = vadd.f32 %v1527, %v1560
        %v1593 = vadd.f32 %v1528, %v1561
        %v1594 = vadd.f32 %v1529, %v1562
        %v1595 = vadd.f32 %v1530, %v1563
        %v1596 = vadd.f32 %v1531, %v1564
        %v1597 = vadd.f32 %v1532, %v1565
        %v1598 = vadd.f32 %v1533, %v1566
        %v1599 = vadd.f32 %v1534, %v1567
        %v1600 = vadd.f32 %v1535, %v1568
        %v1601 = vadd.f32 %v1536, %v1569
        %v1602 = vadd.f32 %v1537, %v1570
        %v1603 = vadd.f32 %v1538, %v1571
        %v1604 = vadd.f32 %v1539, %v1572
        %v1605 = vadd.f32 %v1540, %v1573
        %v1606 = vadd.f32 %v1541, %v1574
        %v1607 = vadd.f32 %v1542, %v1575
        %v1608 = vadd.f32 %v1543, %v1576
        %v1609 = vadd.f32 %v1544, %v1577
        %v1610 = vadd.f32 %v1545, %v1578
        %v1611 = vadd.f32 %v1546, %v1579
        %v1612 = vadd.f32 %v1547, %v1580
        %v1613 = vadd.f32 %v1548, %v1581
        %v1614 = vadd.f32 %v1549, %v1582
        %v1615 = vadd.f32 %v1550, %v1583
        %v1616 = vadd.f32 %v1551, %v1584
        %v1617 = vadd.f32 %v1552, %v1585
        %v1618 = vperm.slane %v1305, 5
        %v1619 = vmul.f32 %v1404, %v1618
        %v1620 = vmul.f32 %v1382, %v1618
        %v1621 = vmul.f32 %v1405, %v1618
        %v1622 = vmul.f32 %v1383, %v1618
        %v1623 = vmul.f32 %v1406, %v1618
        %v1624 = vmul.f32 %v1384, %v1618
        %v1625 = vmul.f32 %v1407, %v1618
        %v1626 = vmul.f32 %v1385, %v1618
        %v1627 = vmul.f32 %v1408, %v1618
        %v1628 = vmul.f32 %v1386, %v1618
        %v1629 = vmul.f32 %v1409, %v1618
        %v1630 = vmul.f32 %v1387, %v1618
        %v1631 = vmul.f32 %v1410, %v1618
        %v1632 = vmul.f32 %v1388, %v1618
        %v1633 = vmul.f32 %v1411, %v1618
        %v1634 = vmul.f32 %v1389, %v1618
        %v1635 = vmul.f32 %v1412, %v1618
        %v1636 = vmul.f32 %v1390, %v1618
        %v1637 = vmul.f32 %v1413, %v1618
        %v1638 = vmul.f32 %v1391, %v1618
        %v1639 = vmul.f32 %v1414, %v1618
        %v1640 = vmul.f32 %v1392, %v1618
        %v1641 = vmul.f32 %v1415, %v1618
        %v1642 = vmul.f32 %v1393, %v1618
        %v1643 = vmul.f32 %v1416, %v1618
        %v1644 = vmul.f32 %v1394, %v1618
        %v1645 = vmul.f32 %v1417, %v1618
        %v1646 = vmul.f32 %v1395, %v1618
        %v1647 = vmul.f32 %v1418, %v1618
        %v1648 = vmul.f32 %v1396, %v1618
        %v1649 = vmul.f32 %v1419, %v1618
        %v1650 = vmul.f32 %v1397, %v1618
        %v1651 = vadd.f32 %v1586, %v1619
        %v1652 = vadd.f32 %v1587, %v1620
        %v1653 = vadd.f32 %v1588, %v1621
        %v1654 = vadd.f32 %v1589, %v1622
        %v1655 = vadd.f32 %v1590, %v1623
        %v1656 = vadd.f32 %v1591, %v1624
        %v1657 = vadd.f32 %v1592, %v1625
        %v1658 = vadd.f32 %v1593, %v1626
        %v1659 = vadd.f32 %v1594, %v1627
        %v1660 = vadd.f32 %v1595, %v1628
        %v1661 = vadd.f32 %v1596, %v1629
        %v1662 = vadd.f32 %v1597, %v1630
        %v1663 = vadd.f32 %v1598, %v1631
        %v1664 = vadd.f32 %v1599, %v1632
        %v1665 = vadd.f32 %v1600, %v1633
        %v1666 = vadd.f32 %v1601, %v1634
        %v1667 = vadd.f32 %v1602, %v1635
        %v1668 = vadd.f32 %v1603, %v1636
        %v1669 = vadd.f32 %v1604, %v1637
        %v1670 = vadd.f32 %v1605, %v1638
        %v1671 = vadd.f32 %v1606, %v1639
        %v1672 = vadd.f32 %v1607, %v1640
        %v1673 = vadd.f32 %v1608, %v1641
        %v1674 = vadd.f32 %v1609, %v1642
        %v1675 = vadd.f32 %v1610, %v1643
        %v1676 = vadd.f32 %v1611, %v1644
        %v1677 = vadd.f32 %v1612, %v1645
        %v1678 = vadd.f32 %v1613, %v1646
        %v1679 = vadd.f32 %v1614, %v1647
        %v1680 = vadd.f32 %v1615, %v1648
        %v1681 = vadd.f32 %v1616, %v1649
        %v1682 = vadd.f32 %v1617, %v1650
        %v1683 = vperm.slane %v1306, 4
        %v1684 = vmul.f32 %v1405, %v1683
        %v1685 = vmul.f32 %v1383, %v1683
        %v1686 = vmul.f32 %v1406, %v1683
        %v1687 = vmul.f32 %v1384, %v1683
        %v1688 = vmul.f32 %v1407, %v1683
        %v1689 = vmul.f32 %v1385, %v1683
        %v1690 = vmul.f32 %v1408, %v1683
        %v1691 = vmul.f32 %v1386, %v1683
        %v1692 = vmul.f32 %v1409, %v1683
        %v1693 = vmul.f32 %v1387, %v1683
        %v1694 = vmul.f32 %v1410, %v1683
        %v1695 = vmul.f32 %v1388, %v1683
        %v1696 = vmul.f32 %v1411, %v1683
        %v1697 = vmul.f32 %v1389, %v1683
        %v1698 = vmul.f32 %v1412, %v1683
        %v1699 = vmul.f32 %v1390, %v1683
        %v1700 = vmul.f32 %v1413, %v1683
        %v1701 = vmul.f32 %v1391, %v1683
        %v1702 = vmul.f32 %v1414, %v1683
        %v1703 = vmul.f32 %v1392, %v1683
        %v1704 = vmul.f32 %v1415, %v1683
        %v1705 = vmul.f32 %v1393, %v1683
        %v1706 = vmul.f32 %v1416, %v1683
        %v1707 = vmul.f32 %v1394, %v1683
        %v1708 = vmul.f32 %v1417, %v1683
        %v1709 = vmul.f32 %v1395, %v1683
        %v1710 = vmul.f32 %v1418, %v1683
        %v1711 = vmul.f32 %v1396, %v1683
        %v1712 = vmul.f32 %v1419, %v1683
        %v1713 = vmul.f32 %v1397, %v1683
        %v1714 = vmul.f32 %v1420, %v1683
        %v1715 = vmul.f32 %v1398, %v1683
        %v1716 = vadd.f32 %v1651, %v1684
        %v1717 = vadd.f32 %v1652, %v1685
        %v1718 = vadd.f32 %v1653, %v1686
        %v1719 = vadd.f32 %v1654, %v1687
        %v1720 = vadd.f32 %v1655, %v1688
        %v1721 = vadd.f32 %v1656, %v1689
        %v1722 = vadd.f32 %v1657, %v1690
        %v1723 = vadd.f32 %v1658, %v1691
        %v1724 = vadd.f32 %v1659, %v1692
        %v1725 = vadd.f32 %v1660, %v1693
        %v1726 = vadd.f32 %v1661, %v1694
        %v1727 = vadd.f32 %v1662, %v1695
        %v1728 = vadd.f32 %v1663, %v1696
        %v1729 = vadd.f32 %v1664, %v1697
        %v1730 = vadd.f32 %v1665, %v1698
        %v1731 = vadd.f32 %v1666, %v1699
        %v1732 = vadd.f32 %v1667, %v1700
        %v1733 = vadd.f32 %v1668, %v1701
        %v1734 = vadd.f32 %v1669, %v1702
        %v1735 = vadd.f32 %v1670, %v1703
        %v1736 = vadd.f32 %v1671, %v1704
        %v1737 = vadd.f32 %v1672, %v1705
        %v1738 = vadd.f32 %v1673, %v1706
        %v1739 = vadd.f32 %v1674, %v1707
        %v1740 = vadd.f32 %v1675, %v1708
        %v1741 = vadd.f32 %v1676, %v1709
        %v1742 = vadd.f32 %v1677, %v1710
        %v1743 = vadd.f32 %v1678, %v1711
        %v1744 = vadd.f32 %v1679, %v1712
        %v1745 = vadd.f32 %v1680, %v1713
        %v1746 = vadd.f32 %v1681, %v1714
        %v1747 = vadd.f32 %v1682, %v1715
        %v1748 = vperm.slane %v1307, 3
        %v1749 = vmul.f32 %v1406, %v1748
        %v1750 = vmul.f32 %v1384, %v1748
        %v1751 = vmul.f32 %v1407, %v1748
        %v1752 = vmul.f32 %v1385, %v1748
        %v1753 = vmul.f32 %v1408, %v1748
        %v1754 = vmul.f32 %v1386, %v1748
        %v1755 = vmul.f32 %v1409, %v1748
        %v1756 = vmul.f32 %v1387, %v1748
        %v1757 = vmul.f32 %v1410, %v1748
        %v1758 = vmul.f32 %v1388, %v1748
        %v1759 = vmul.f32 %v1411, %v1748
        %v1760 = vmul.f32 %v1389, %v1748
        %v1761 = vmul.f32 %v1412, %v1748
        %v1762 = vmul.f32 %v1390, %v1748
        %v1763 = vmul.f32 %v1413, %v1748
        %v1764 = vmul.f32 %v1391, %v1748
        %v1765 = vmul.f32 %v1414, %v1748
        %v1766 = vmul.f32 %v1392, %v1748
        %v1767 = vmul.f32 %v1415, %v1748
        %v1768 = vmul.f32 %v1393, %v1748
        %v1769 = vmul.f32 %v1416, %v1748
        %v1770 = vmul.f32 %v1394, %v1748
        %v1771 = vmul.f32 %v1417, %v1748
        %v1772 = vmul.f32 %v1395, %v1748
        %v1773 = vmul.f32 %v1418, %v1748
        %v1774 = vmul.f32 %v1396, %v1748
        %v1775 = vmul.f32 %v1419, %v1748
        %v1776 = vmul.f32 %v1397, %v1748
        %v1777 = vmul.f32 %v1420, %v1748
        %v1778 = vmul.f32 %v1398, %v1748
        %v1779 = vmul.f32 %v1421, %v1748
        %v1780 = vmul.f32 %v1399, %v1748
        %v1781 = vadd.f32 %v1716, %v1749
        %v1782 = vadd.f32 %v1717, %v1750
        %v1783 = vadd.f32 %v1718, %v1751
        %v1784 = vadd.f32 %v1719, %v1752
        %v1785 = vadd.f32 %v1720, %v1753
        %v1786 = vadd.f32 %v1721, %v1754
        %v1787 = vadd.f32 %v1722, %v1755
        %v1788 = vadd.f32 %v1723, %v1756
        %v1789 = vadd.f32 %v1724, %v1757
        %v1790 = vadd.f32 %v1725, %v1758
        %v1791 = vadd.f32 %v1726, %v1759
        %v1792 = vadd.f32 %v1727, %v1760
        %v1793 = vadd.f32 %v1728, %v1761
        %v1794 = vadd.f32 %v1729, %v1762
        %v1795 = vadd.f32 %v1730, %v1763
        %v1796 = vadd.f32 %v1731, %v1764
        %v1797 = vadd.f32 %v1732, %v1765
        %v1798 = vadd.f32 %v1733, %v1766
        %v1799 = vadd.f32 %v1734, %v1767
        %v1800 = vadd.f32 %v1735, %v1768
        %v1801 = vadd.f32 %v1736, %v1769
        %v1802 = vadd.f32 %v1737, %v1770
        %v1803 = vadd.f32 %v1738, %v1771
        %v1804 = vadd.f32 %v1739, %v1772
        %v1805 = vadd.f32 %v1740, %v1773
        %v1806 = vadd.f32 %v1741, %v1774
        %v1807 = vadd.f32 %v1742, %v1775
        %v1808 = vadd.f32 %v1743, %v1776
        %v1809 = vadd.f32 %v1744, %v1777
        %v1810 = vadd.f32 %v1745, %v1778
        %v1811 = vadd.f32 %v1746, %v1779
        %v1812 = vadd.f32 %v1747, %v1780
        %v1813 = vperm.slane %v1308, 2
        %v1814 = vmul.f32 %v1407, %v1813
        %v1815 = vmul.f32 %v1385, %v1813
        %v1816 = vmul.f32 %v1408, %v1813
        %v1817 = vmul.f32 %v1386, %v1813
        %v1818 = vmul.f32 %v1409, %v1813
        %v1819 = vmul.f32 %v1387, %v1813
        %v1820 = vmul.f32 %v1410, %v1813
        %v1821 = vmul.f32 %v1388, %v1813
        %v1822 = vmul.f32 %v1411, %v1813
        %v1823 = vmul.f32 %v1389, %v1813
        %v1824 = vmul.f32 %v1412, %v1813
        %v1825 = vmul.f32 %v1390, %v1813
        %v1826 = vmul.f32 %v1413, %v1813
        %v1827 = vmul.f32 %v1391, %v1813
        %v1828 = vmul.f32 %v1414, %v1813
        %v1829 = vmul.f32 %v1392, %v1813
        %v1830 = vmul.f32 %v1415, %v1813
        %v1831 = vmul.f32 %v1393, %v1813
        %v1832 = vmul.f32 %v1416, %v1813
        %v1833 = vmul.f32 %v1394, %v1813
        %v1834 = vmul.f32 %v1417, %v1813
        %v1835 = vmul.f32 %v1395, %v1813
        %v1836 = vmul.f32 %v1418, %v1813
        %v1837 = vmul.f32 %v1396, %v1813
        %v1838 = vmul.f32 %v1419, %v1813
        %v1839 = vmul.f32 %v1397, %v1813
        %v1840 = vmul.f32 %v1420, %v1813
        %v1841 = vmul.f32 %v1398, %v1813
        %v1842 = vmul.f32 %v1421, %v1813
        %v1843 = vmul.f32 %v1399, %v1813
        %v1844 = vmul.f32 %v1422, %v1813
        %v1845 = vmul.f32 %v1400, %v1813
        %v1846 = vadd.f32 %v1781, %v1814
        %v1847 = vadd.f32 %v1782, %v1815
        %v1848 = vadd.f32 %v1783, %v1816
        %v1849 = vadd.f32 %v1784, %v1817
        %v1850 = vadd.f32 %v1785, %v1818
        %v1851 = vadd.f32 %v1786, %v1819
        %v1852 = vadd.f32 %v1787, %v1820
        %v1853 = vadd.f32 %v1788, %v1821
        %v1854 = vadd.f32 %v1789, %v1822
        %v1855 = vadd.f32 %v1790, %v1823
        %v1856 = vadd.f32 %v1791, %v1824
        %v1857 = vadd.f32 %v1792, %v1825
        %v1858 = vadd.f32 %v1793, %v1826
        %v1859 = vadd.f32 %v1794, %v1827
        %v1860 = vadd.f32 %v1795, %v1828
        %v1861 = vadd.f32 %v1796, %v1829
        %v1862 = vadd.f32 %v1797, %v1830
        %v1863 = vadd.f32 %v1798, %v1831
        %v1864 = vadd.f32 %v1799, %v1832
        %v1865 = vadd.f32 %v1800, %v1833
        %v1866 = vadd.f32 %v1801, %v1834
        %v1867 = vadd.f32 %v1802, %v1835
        %v1868 = vadd.f32 %v1803, %v1836
        %v1869 = vadd.f32 %v1804, %v1837
        %v1870 = vadd.f32 %v1805, %v1838
        %v1871 = vadd.f32 %v1806, %v1839
        %v1872 = vadd.f32 %v1807, %v1840
        %v1873 = vadd.f32 %v1808, %v1841
        %v1874 = vadd.f32 %v1809, %v1842
        %v1875 = vadd.f32 %v1810, %v1843
        %v1876 = vadd.f32 %v1811, %v1844
        %v1877 = vadd.f32 %v1812, %v1845
        %v1878 = vrot.slane %v1237, 6
        %v1879 = vrot.slane %v1240, 6
        %v1880 = vrot.slane %v1243, 6
        %v1881 = vrot.slane %v1246, 6
        %v1882 = vrot.slane %v1249, 6
        %v1883 = vrot.slane %v1252, 6
        %v1884 = vrot.slane %v1255, 6
        %v1885 = vrot.slane %v1258, 6
        %v1886 = vrot.slane %v1261, 6
        %v1887 = vrot.slane %v1264, 6
        %v1888 = vrot.slane %v1267, 6
        %v1889 = vrot.slane %v1270, 6
        %v1890 = vrot.slane %v1273, 6
        %v1891 = vrot.slane %v1276, 6
        %v1892 = vrot.slane %v1279, 6
        %v1893 = vrot.slane %v1282, 6
        %v1894 = vrot.slane %v1285, 6
        %v1895 = vrot.slane %v1288, 6
        %v1896 = vrot.slane %v1291, 6
        %v1897 = vrot.slane %v1294, 6
        %v1898 = vrot.slane %v1297, 6
        %v1899 = vrot.slane %v1300, 6
        %v1900 = vrot.slane %v1238, 6
        %v1901 = vrot.slane %v1241, 6
        %v1902 = vrot.slane %v1244, 6
        %v1903 = vrot.slane %v1247, 6
        %v1904 = vrot.slane %v1250, 6
        %v1905 = vrot.slane %v1253, 6
        %v1906 = vrot.slane %v1256, 6
        %v1907 = vrot.slane %v1259, 6
        %v1908 = vrot.slane %v1262, 6
        %v1909 = vrot.slane %v1265, 6
        %v1910 = vrot.slane %v1268, 6
        %v1911 = vrot.slane %v1271, 6
        %v1912 = vrot.slane %v1274, 6
        %v1913 = vrot.slane %v1277, 6
        %v1914 = vrot.slane %v1280, 6
        %v1915 = vrot.slane %v1283, 6
        %v1916 = vrot.slane %v1286, 6
        %v1917 = vrot.slane %v1289, 6
        %v1918 = vrot.slane %v1292, 6
        %v1919 = vrot.slane %v1295, 6
        %v1920 = vrot.slane %v1298, 6
        %v1921 = vrot.slane %v1301, 6
        %v1922 = vrot.slane %v1239, 6
        %v1923 = vrot.slane %v1242, 6
        %v1924 = vrot.slane %v1245, 6
        %v1925 = vrot.slane %v1248, 6
        %v1926 = vrot.slane %v1251, 6
        %v1927 = vrot.slane %v1254, 6
        %v1928 = vrot.slane %v1257, 6
        %v1929 = vrot.slane %v1260, 6
        %v1930 = vrot.slane %v1263, 6
        %v1931 = vrot.slane %v1266, 6
        %v1932 = vrot.slane %v1269, 6
        %v1933 = vrot.slane %v1272, 6
        %v1934 = vrot.slane %v1275, 6
        %v1935 = vrot.slane %v1278, 6
        %v1936 = vrot.slane %v1281, 6
        %v1937 = vrot.slane %v1284, 6
        %v1938 = vrot.slane %v1287, 6
        %v1939 = vrot.slane %v1290, 6
        %v1940 = vrot.slane %v1293, 6
        %v1941 = vrot.slane %v1296, 6
        %v1942 = vrot.slane %v1299, 6
        %v1943 = vrot.slane %v1302, 6
        %vm1944 = vcmp.lt.s32.totalorder %v1377, 2
        %v1945 = vsel %vm1944, %v1878, %v1900
        %v1946 = vsel %vm1944, %v1879, %v1901
        %v1947 = vsel %vm1944, %v1880, %v1902
        %v1948 = vsel %vm1944, %v1881, %v1903
        %v1949 = vsel %vm1944, %v1882, %v1904
        %v1950 = vsel %vm1944, %v1883, %v1905
        %v1951 = vsel %vm1944, %v1884, %v1906
        %v1952 = vsel %vm1944, %v1885, %v1907
        %v1953 = vsel %vm1944, %v1886, %v1908
        %v1954 = vsel %vm1944, %v1887, %v1909
        %v1955 = vsel %vm1944, %v1888, %v1910
        %v1956 = vsel %vm1944, %v1889, %v1911
        %v1957 = vsel %vm1944, %v1890, %v1912
        %v1958 = vsel %vm1944, %v1891, %v1913
        %v1959 = vsel %vm1944, %v1892, %v1914
        %v1960 = vsel %vm1944, %v1893, %v1915
        %v1961 = vsel %vm1944, %v1894, %v1916
        %v1962 = vsel %vm1944, %v1895, %v1917
        %v1963 = vsel %vm1944, %v1896, %v1918
        %v1964 = vsel %vm1944, %v1897, %v1919
        %v1965 = vsel %vm1944, %v1898, %v1920
        %v1966 = vsel %vm1944, %v1899, %v1921
        %v1967 = vsel %vm1944, %v1922, %v1878
        %v1968 = vsel %vm1944, %v1923, %v1879
        %v1969 = vsel %vm1944, %v1924, %v1880
        %v1970 = vsel %vm1944, %v1925, %v1881
        %v1971 = vsel %vm1944, %v1926, %v1882
        %v1972 = vsel %vm1944, %v1927, %v1883
        %v1973 = vsel %vm1944, %v1928, %v1884
        %v1974 = vsel %vm1944, %v1929, %v1885
        %v1975 = vsel %vm1944, %v1930, %v1886
        %v1976 = vsel %vm1944, %v1931, %v1887
        %v1977 = vsel %vm1944, %v1932, %v1888
        %v1978 = vsel %vm1944, %v1933, %v1889
        %v1979 = vsel %vm1944, %v1934, %v1890
        %v1980 = vsel %vm1944, %v1935, %v1891
        %v1981 = vsel %vm1944, %v1936, %v1892
        %v1982 = vsel %vm1944, %v1937, %v1893
        %v1983 = vsel %vm1944, %v1938, %v1894
        %v1984 = vsel %vm1944, %v1939, %v1895
        %v1985 = vsel %vm1944, %v1940, %v1896
        %v1986 = vsel %vm1944, %v1941, %v1897
        %v1987 = vsel %vm1944, %v1942, %v1898
        %v1988 = vsel %vm1944, %v1943, %v1899
        %v1989 = vperm.slane %v1303, 1
        %v1990 = vmul.f32 %v1967, %v1989
        %v1991 = vmul.f32 %v1945, %v1989
        %v1992 = vmul.f32 %v1968, %v1989
        %v1993 = vmul.f32 %v1946, %v1989
        %v1994 = vmul.f32 %v1969, %v1989
        %v1995 = vmul.f32 %v1947, %v1989
        %v1996 = vmul.f32 %v1970, %v1989
        %v1997 = vmul.f32 %v1948, %v1989
        %v1998 = vmul.f32 %v1971, %v1989
        %v1999 = vmul.f32 %v1949, %v1989
        %v2000 = vmul.f32 %v1972, %v1989
        %v2001 = vmul.f32 %v1950, %v1989
        %v2002 = vmul.f32 %v1973, %v1989
        %v2003 = vmul.f32 %v1951, %v1989
        %v2004 = vmul.f32 %v1974, %v1989
        %v2005 = vmul.f32 %v1952, %v1989
        %v2006 = vmul.f32 %v1975, %v1989
        %v2007 = vmul.f32 %v1953, %v1989
        %v2008 = vmul.f32 %v1976, %v1989
        %v2009 = vmul.f32 %v1954, %v1989
        %v2010 = vmul.f32 %v1977, %v1989
        %v2011 = vmul.f32 %v1955, %v1989
        %v2012 = vmul.f32 %v1978, %v1989
        %v2013 = vmul.f32 %v1956, %v1989
        %v2014 = vmul.f32 %v1979, %v1989
        %v2015 = vmul.f32 %v1957, %v1989
        %v2016 = vmul.f32 %v1980, %v1989
        %v2017 = vmul.f32 %v1958, %v1989
        %v2018 = vmul.f32 %v1981, %v1989
        %v2019 = vmul.f32 %v1959, %v1989
        %v2020 = vmul.f32 %v1982, %v1989
        %v2021 = vmul.f32 %v1960, %v1989
        %v2022 = vadd.f32 %v1846, %v1990
        %v2023 = vadd.f32 %v1847, %v1991
        %v2024 = vadd.f32 %v1848, %v1992
        %v2025 = vadd.f32 %v1849, %v1993
        %v2026 = vadd.f32 %v1850, %v1994
        %v2027 = vadd.f32 %v1851, %v1995
        %v2028 = vadd.f32 %v1852, %v1996
        %v2029 = vadd.f32 %v1853, %v1997
        %v2030 = vadd.f32 %v1854, %v1998
        %v2031 = vadd.f32 %v1855, %v1999
        %v2032 = vadd.f32 %v1856, %v2000
        %v2033 = vadd.f32 %v1857, %v2001
        %v2034 = vadd.f32 %v1858, %v2002
        %v2035 = vadd.f32 %v1859, %v2003
        %v2036 = vadd.f32 %v1860, %v2004
        %v2037 = vadd.f32 %v1861, %v2005
        %v2038 = vadd.f32 %v1862, %v2006
        %v2039 = vadd.f32 %v1863, %v2007
        %v2040 = vadd.f32 %v1864, %v2008
        %v2041 = vadd.f32 %v1865, %v2009
        %v2042 = vadd.f32 %v1866, %v2010
        %v2043 = vadd.f32 %v1867, %v2011
        %v2044 = vadd.f32 %v1868, %v2012
        %v2045 = vadd.f32 %v1869, %v2013
        %v2046 = vadd.f32 %v1870, %v2014
        %v2047 = vadd.f32 %v1871, %v2015
        %v2048 = vadd.f32 %v1872, %v2016
        %v2049 = vadd.f32 %v1873, %v2017
        %v2050 = vadd.f32 %v1874, %v2018
        %v2051 = vadd.f32 %v1875, %v2019
        %v2052 = vadd.f32 %v1876, %v2020
        %v2053 = vadd.f32 %v1877, %v2021
        %v2054 = vperm.slane %v1304, 0
        %v2055 = vmul.f32 %v1968, %v2054
        %v2056 = vmul.f32 %v1946, %v2054
        %v2057 = vmul.f32 %v1969, %v2054
        %v2058 = vmul.f32 %v1947, %v2054
        %v2059 = vmul.f32 %v1970, %v2054
        %v2060 = vmul.f32 %v1948, %v2054
        %v2061 = vmul.f32 %v1971, %v2054
        %v2062 = vmul.f32 %v1949, %v2054
        %v2063 = vmul.f32 %v1972, %v2054
        %v2064 = vmul.f32 %v1950, %v2054
        %v2065 = vmul.f32 %v1973, %v2054
        %v2066 = vmul.f32 %v1951, %v2054
        %v2067 = vmul.f32 %v1974, %v2054
        %v2068 = vmul.f32 %v1952, %v2054
        %v2069 = vmul.f32 %v1975, %v2054
        %v2070 = vmul.f32 %v1953, %v2054
        %v2071 = vmul.f32 %v1976, %v2054
        %v2072 = vmul.f32 %v1954, %v2054
        %v2073 = vmul.f32 %v1977, %v2054
        %v2074 = vmul.f32 %v1955, %v2054
        %v2075 = vmul.f32 %v1978, %v2054
        %v2076 = vmul.f32 %v1956, %v2054
        %v2077 = vmul.f32 %v1979, %v2054
        %v2078 = vmul.f32 %v1957, %v2054
        %v2079 = vmul.f32 %v1980, %v2054
        %v2080 = vmul.f32 %v1958, %v2054
        %v2081 = vmul.f32 %v1981, %v2054
        %v2082 = vmul.f32 %v1959, %v2054
        %v2083 = vmul.f32 %v1982, %v2054
        %v2084 = vmul.f32 %v1960, %v2054
        %v2085 = vmul.f32 %v1983, %v2054
        %v2086 = vmul.f32 %v1961, %v2054
        %v2087 = vadd.f32 %v2022, %v2055
        %v2088 = vadd.f32 %v2023, %v2056
        %v2089 = vadd.f32 %v2024, %v2057
        %v2090 = vadd.f32 %v2025, %v2058
        %v2091 = vadd.f32 %v2026, %v2059
        %v2092 = vadd.f32 %v2027, %v2060
        %v2093 = vadd.f32 %v2028, %v2061
        %v2094 = vadd.f32 %v2029, %v2062
        %v2095 = vadd.f32 %v2030, %v2063
        %v2096 = vadd.f32 %v2031, %v2064
        %v2097 = vadd.f32 %v2032, %v2065
        %v2098 = vadd.f32 %v2033, %v2066
        %v2099 = vadd.f32 %v2034, %v2067
        %v2100 = vadd.f32 %v2035, %v2068
        %v2101 = vadd.f32 %v2036, %v2069
        %v2102 = vadd.f32 %v2037, %v2070
        %v2103 = vadd.f32 %v2038, %v2071
        %v2104 = vadd.f32 %v2039, %v2072
        %v2105 = vadd.f32 %v2040, %v2073
        %v2106 = vadd.f32 %v2041, %v2074
        %v2107 = vadd.f32 %v2042, %v2075
        %v2108 = vadd.f32 %v2043, %v2076
        %v2109 = vadd.f32 %v2044, %v2077
        %v2110 = vadd.f32 %v2045, %v2078
        %v2111 = vadd.f32 %v2046, %v2079
        %v2112 = vadd.f32 %v2047, %v2080
        %v2113 = vadd.f32 %v2048, %v2081
        %v2114 = vadd.f32 %v2049, %v2082
        %v2115 = vadd.f32 %v2050, %v2083
        %v2116 = vadd.f32 %v2051, %v2084
        %v2117 = vadd.f32 %v2052, %v2085
        %v2118 = vadd.f32 %v2053, %v2086
        %v2119 = vperm.slane %v1304, 7
        %v2120 = vmul.f32 %v1969, %v2119
        %v2121 = vmul.f32 %v1947, %v2119
        %v2122 = vmul.f32 %v1970, %v2119
        %v2123 = vmul.f32 %v1948, %v2119
        %v2124 = vmul.f32 %v1971, %v2119
        %v2125 = vmul.f32 %v1949, %v2119
        %v2126 = vmul.f32 %v1972, %v2119
        %v2127 = vmul.f32 %v1950, %v2119
        %v2128 = vmul.f32 %v1973, %v2119
        %v2129 = vmul.f32 %v1951, %v2119
        %v2130 = vmul.f32 %v1974, %v2119
        %v2131 = vmul.f32 %v1952, %v2119
        %v2132 = vmul.f32 %v1975, %v2119
        %v2133 = vmul.f32 %v1953, %v2119
        %v2134 = vmul.f32 %v1976, %v2119
        %v2135 = vmul.f32 %v1954, %v2119
        %v2136 = vmul.f32 %v1977, %v2119
        %v2137 = vmul.f32 %v1955, %v2119
        %v2138 = vmul.f32 %v1978, %v2119
        %v2139 = vmul.f32 %v1956, %v2119
        %v2140 = vmul.f32 %v1979, %v2119
        %v2141 = vmul.f32 %v1957, %v2119
        %v2142 = vmul.f32 %v1980, %v2119
        %v2143 = vmul.f32 %v1958, %v2119
        %v2144 = vmul.f32 %v1981, %v2119
        %v2145 = vmul.f32 %v1959, %v2119
        %v2146 = vmul.f32 %v1982, %v2119
        %v2147 = vmul.f32 %v1960, %v2119
        %v2148 = vmul.f32 %v1983, %v2119
        %v2149 = vmul.f32 %v1961, %v2119
        %v2150 = vmul.f32 %v1984, %v2119
        %v2151 = vmul.f32 %v1962, %v2119
        %v2152 = vadd.f32 %v2087, %v2120
        %v2153 = vadd.f32 %v2088, %v2121
        %v2154 = vadd.f32 %v2089, %v2122
        %v2155 = vadd.f32 %v2090, %v2123
        %v2156 = vadd.f32 %v2091, %v2124
        %v2157 = vadd.f32 %v2092, %v2125
        %v2158 = vadd.f32 %v2093, %v2126
        %v2159 = vadd.f32 %v2094, %v2127
        %v2160 = vadd.f32 %v2095, %v2128
        %v2161 = vadd.f32 %v2096, %v2129
        %v2162 = vadd.f32 %v2097, %v2130
        %v2163 = vadd.f32 %v2098, %v2131
        %v2164 = vadd.f32 %v2099, %v2132
        %v2165 = vadd.f32 %v2100, %v2133
        %v2166 = vadd.f32 %v2101, %v2134
        %v2167 = vadd.f32 %v2102, %v2135
        %v2168 = vadd.f32 %v2103, %v2136
        %v2169 = vadd.f32 %v2104, %v2137
        %v2170 = vadd.f32 %v2105, %v2138
        %v2171 = vadd.f32 %v2106, %v2139
        %v2172 = vadd.f32 %v2107, %v2140
        %v2173 = vadd.f32 %v2108, %v2141
        %v2174 = vadd.f32 %v2109, %v2142
        %v2175 = vadd.f32 %v2110, %v2143
        %v2176 = vadd.f32 %v2111, %v2144
        %v2177 = vadd.f32 %v2112, %v2145
        %v2178 = vadd.f32 %v2113, %v2146
        %v2179 = vadd.f32 %v2114, %v2147
        %v2180 = vadd.f32 %v2115, %v2148
        %v2181 = vadd.f32 %v2116, %v2149
        %v2182 = vadd.f32 %v2117, %v2150
        %v2183 = vadd.f32 %v2118, %v2151
        %v2184 = vperm.slane %v1305, 6
        %v2185 = vmul.f32 %v1970, %v2184
        %v2186 = vmul.f32 %v1948, %v2184
        %v2187 = vmul.f32 %v1971, %v2184
        %v2188 = vmul.f32 %v1949, %v2184
        %v2189 = vmul.f32 %v1972, %v2184
        %v2190 = vmul.f32 %v1950, %v2184
        %v2191 = vmul.f32 %v1973, %v2184
        %v2192 = vmul.f32 %v1951, %v2184
        %v2193 = vmul.f32 %v1974, %v2184
        %v2194 = vmul.f32 %v1952, %v2184
        %v2195 = vmul.f32 %v1975, %v2184
        %v2196 = vmul.f32 %v1953, %v2184
        %v2197 = vmul.f32 %v1976, %v2184
        %v2198 = vmul.f32 %v1954, %v2184
        %v2199 = vmul.f32 %v1977, %v2184
        %v2200 = vmul.f32 %v1955, %v2184
        %v2201 = vmul.f32 %v1978, %v2184
        %v2202 = vmul.f32 %v1956, %v2184
        %v2203 = vmul.f32 %v1979, %v2184
        %v2204 = vmul.f32 %v1957, %v2184
        %v2205 = vmul.f32 %v1980, %v2184
        %v2206 = vmul.f32 %v1958, %v2184
        %v2207 = vmul.f32 %v1981, %v2184
        %v2208 = vmul.f32 %v1959, %v2184
        %v2209 = vmul.f32 %v1982, %v2184
        %v2210 = vmul.f32 %v1960, %v2184
        %v2211 = vmul.f32 %v1983, %v2184
        %v2212 = vmul.f32 %v1961, %v2184
        %v2213 = vmul.f32 %v1984, %v2184
        %v2214 = vmul.f32 %v1962, %v2184
        %v2215 = vmul.f32 %v1985, %v2184
        %v2216 = vmul.f32 %v1963, %v2184
        %v2217 = vadd.f32 %v2152, %v2185
        %v2218 = vadd.f32 %v2153, %v2186
        %v2219 = vadd.f32 %v2154, %v2187
        %v2220 = vadd.f32 %v2155, %v2188
        %v2221 = vadd.f32 %v2156, %v2189
        %v2222 = vadd.f32 %v2157, %v2190
        %v2223 = vadd.f32 %v2158, %v2191
        %v2224 = vadd.f32 %v2159, %v2192
        %v2225 = vadd.f32 %v2160, %v2193
        %v2226 = vadd.f32 %v2161, %v2194
        %v2227 = vadd.f32 %v2162, %v2195
        %v2228 = vadd.f32 %v2163, %v2196
        %v2229 = vadd.f32 %v2164, %v2197
        %v2230 = vadd.f32 %v2165, %v2198
        %v2231 = vadd.f32 %v2166, %v2199
        %v2232 = vadd.f32 %v2167, %v2200
        %v2233 = vadd.f32 %v2168, %v2201
        %v2234 = vadd.f32 %v2169, %v2202
        %v2235 = vadd.f32 %v2170, %v2203
        %v2236 = vadd.f32 %v2171, %v2204
        %v2237 = vadd.f32 %v2172, %v2205
        %v2238 = vadd.f32 %v2173, %v2206
        %v2239 = vadd.f32 %v2174, %v2207
        %v2240 = vadd.f32 %v2175, %v2208
        %v2241 = vadd.f32 %v2176, %v2209
        %v2242 = vadd.f32 %v2177, %v2210
        %v2243 = vadd.f32 %v2178, %v2211
        %v2244 = vadd.f32 %v2179, %v2212
        %v2245 = vadd.f32 %v2180, %v2213
        %v2246 = vadd.f32 %v2181, %v2214
        %v2247 = vadd.f32 %v2182, %v2215
        %v2248 = vadd.f32 %v2183, %v2216
        %v2249 = vperm.slane %v1306, 5
        %v2250 = vmul.f32 %v1971, %v2249
        %v2251 = vmul.f32 %v1949, %v2249
        %v2252 = vmul.f32 %v1972, %v2249
        %v2253 = vmul.f32 %v1950, %v2249
        %v2254 = vmul.f32 %v1973, %v2249
        %v2255 = vmul.f32 %v1951, %v2249
        %v2256 = vmul.f32 %v1974, %v2249
        %v2257 = vmul.f32 %v1952, %v2249
        %v2258 = vmul.f32 %v1975, %v2249
        %v2259 = vmul.f32 %v1953, %v2249
        %v2260 = vmul.f32 %v1976, %v2249
        %v2261 = vmul.f32 %v1954, %v2249
        %v2262 = vmul.f32 %v1977, %v2249
        %v2263 = vmul.f32 %v1955, %v2249
        %v2264 = vmul.f32 %v1978, %v2249
        %v2265 = vmul.f32 %v1956, %v2249
        %v2266 = vmul.f32 %v1979, %v2249
        %v2267 = vmul.f32 %v1957, %v2249
        %v2268 = vmul.f32 %v1980, %v2249
        %v2269 = vmul.f32 %v1958, %v2249
        %v2270 = vmul.f32 %v1981, %v2249
        %v2271 = vmul.f32 %v1959, %v2249
        %v2272 = vmul.f32 %v1982, %v2249
        %v2273 = vmul.f32 %v1960, %v2249
        %v2274 = vmul.f32 %v1983, %v2249
        %v2275 = vmul.f32 %v1961, %v2249
        %v2276 = vmul.f32 %v1984, %v2249
        %v2277 = vmul.f32 %v1962, %v2249
        %v2278 = vmul.f32 %v1985, %v2249
        %v2279 = vmul.f32 %v1963, %v2249
        %v2280 = vmul.f32 %v1986, %v2249
        %v2281 = vmul.f32 %v1964, %v2249
        %v2282 = vadd.f32 %v2217, %v2250
        %v2283 = vadd.f32 %v2218, %v2251
        %v2284 = vadd.f32 %v2219, %v2252
        %v2285 = vadd.f32 %v2220, %v2253
        %v2286 = vadd.f32 %v2221, %v2254
        %v2287 = vadd.f32 %v2222, %v2255
        %v2288 = vadd.f32 %v2223, %v2256
        %v2289 = vadd.f32 %v2224, %v2257
        %v2290 = vadd.f32 %v2225, %v2258
        %v2291 = vadd.f32 %v2226, %v2259
        %v2292 = vadd.f32 %v2227, %v2260
        %v2293 = vadd.f32 %v2228, %v2261
        %v2294 = vadd.f32 %v2229, %v2262
        %v2295 = vadd.f32 %v2230, %v2263
        %v2296 = vadd.f32 %v2231, %v2264
        %v2297 = vadd.f32 %v2232, %v2265
        %v2298 = vadd.f32 %v2233, %v2266
        %v2299 = vadd.f32 %v2234, %v2267
        %v2300 = vadd.f32 %v2235, %v2268
        %v2301 = vadd.f32 %v2236, %v2269
        %v2302 = vadd.f32 %v2237, %v2270
        %v2303 = vadd.f32 %v2238, %v2271
        %v2304 = vadd.f32 %v2239, %v2272
        %v2305 = vadd.f32 %v2240, %v2273
        %v2306 = vadd.f32 %v2241, %v2274
        %v2307 = vadd.f32 %v2242, %v2275
        %v2308 = vadd.f32 %v2243, %v2276
        %v2309 = vadd.f32 %v2244, %v2277
        %v2310 = vadd.f32 %v2245, %v2278
        %v2311 = vadd.f32 %v2246, %v2279
        %v2312 = vadd.f32 %v2247, %v2280
        %v2313 = vadd.f32 %v2248, %v2281
        %v2314 = vperm.slane %v1307, 4
        %v2315 = vmul.f32 %v1972, %v2314
        %v2316 = vmul.f32 %v1950, %v2314
        %v2317 = vmul.f32 %v1973, %v2314
        %v2318 = vmul.f32 %v1951, %v2314
        %v2319 = vmul.f32 %v1974, %v2314
        %v2320 = vmul.f32 %v1952, %v2314
        %v2321 = vmul.f32 %v1975, %v2314
        %v2322 = vmul.f32 %v1953, %v2314
        %v2323 = vmul.f32 %v1976, %v2314
        %v2324 = vmul.f32 %v1954, %v2314
        %v2325 = vmul.f32 %v1977, %v2314
        %v2326 = vmul.f32 %v1955, %v2314
        %v2327 = vmul.f32 %v1978, %v2314
        %v2328 = vmul.f32 %v1956, %v2314
        %v2329 = vmul.f32 %v1979, %v2314
        %v2330 = vmul.f32 %v1957, %v2314
        %v2331 = vmul.f32 %v1980, %v2314
        %v2332 = vmul.f32 %v1958, %v2314
        %v2333 = vmul.f32 %v1981, %v2314
        %v2334 = vmul.f32 %v1959, %v2314
        %v2335 = vmul.f32 %v1982, %v2314
        %v2336 = vmul.f32 %v1960, %v2314
        %v2337 = vmul.f32 %v1983, %v2314
        %v2338 = vmul.f32 %v1961, %v2314
        %v2339 = vmul.f32 %v1984, %v2314
        %v2340 = vmul.f32 %v1962, %v2314
        %v2341 = vmul.f32 %v1985, %v2314
        %v2342 = vmul.f32 %v1963, %v2314
        %v2343 = vmul.f32 %v1986, %v2314
        %v2344 = vmul.f32 %v1964, %v2314
        %v2345 = vmul.f32 %v1987, %v2314
        %v2346 = vmul.f32 %v1965, %v2314
        %v2347 = vadd.f32 %v2282, %v2315
        %v2348 = vadd.f32 %v2283, %v2316
        %v2349 = vadd.f32 %v2284, %v2317
        %v2350 = vadd.f32 %v2285, %v2318
        %v2351 = vadd.f32 %v2286, %v2319
        %v2352 = vadd.f32 %v2287, %v2320
        %v2353 = vadd.f32 %v2288, %v2321
        %v2354 = vadd.f32 %v2289, %v2322
        %v2355 = vadd.f32 %v2290, %v2323
        %v2356 = vadd.f32 %v2291, %v2324
        %v2357 = vadd.f32 %v2292, %v2325
        %v2358 = vadd.f32 %v2293, %v2326
        %v2359 = vadd.f32 %v2294, %v2327
        %v2360 = vadd.f32 %v2295, %v2328
        %v2361 = vadd.f32 %v2296, %v2329
        %v2362 = vadd.f32 %v2297, %v2330
        %v2363 = vadd.f32 %v2298, %v2331
        %v2364 = vadd.f32 %v2299, %v2332
        %v2365 = vadd.f32 %v2300, %v2333
        %v2366 = vadd.f32 %v2301, %v2334
        %v2367 = vadd.f32 %v2302, %v2335
        %v2368 = vadd.f32 %v2303, %v2336
        %v2369 = vadd.f32 %v2304, %v2337
        %v2370 = vadd.f32 %v2305, %v2338
        %v2371 = vadd.f32 %v2306, %v2339
        %v2372 = vadd.f32 %v2307, %v2340
        %v2373 = vadd.f32 %v2308, %v2341
        %v2374 = vadd.f32 %v2309, %v2342
        %v2375 = vadd.f32 %v2310, %v2343
        %v2376 = vadd.f32 %v2311, %v2344
        %v2377 = vadd.f32 %v2312, %v2345
        %v2378 = vadd.f32 %v2313, %v2346
        %v2379 = vperm.slane %v1308, 3
        %v2380 = vmul.f32 %v1973, %v2379
        %v2381 = vmul.f32 %v1951, %v2379
        %v2382 = vmul.f32 %v1974, %v2379
        %v2383 = vmul.f32 %v1952, %v2379
        %v2384 = vmul.f32 %v1975, %v2379
        %v2385 = vmul.f32 %v1953, %v2379
        %v2386 = vmul.f32 %v1976, %v2379
        %v2387 = vmul.f32 %v1954, %v2379
        %v2388 = vmul.f32 %v1977, %v2379
        %v2389 = vmul.f32 %v1955, %v2379
        %v2390 = vmul.f32 %v1978, %v2379
        %v2391 = vmul.f32 %v1956, %v2379
        %v2392 = vmul.f32 %v1979, %v2379
        %v2393 = vmul.f32 %v1957, %v2379
        %v2394 = vmul.f32 %v1980, %v2379
        %v2395 = vmul.f32 %v1958, %v2379
        %v2396 = vmul.f32 %v1981, %v2379
        %v2397 = vmul.f32 %v1959, %v2379
        %v2398 = vmul.f32 %v1982, %v2379
        %v2399 = vmul.f32 %v1960, %v2379
        %v2400 = vmul.f32 %v1983, %v2379
        %v2401 = vmul.f32 %v1961, %v2379
        %v2402 = vmul.f32 %v1984, %v2379
        %v2403 = vmul.f32 %v1962, %v2379
        %v2404 = vmul.f32 %v1985, %v2379
        %v2405 = vmul.f32 %v1963, %v2379
        %v2406 = vmul.f32 %v1986, %v2379
        %v2407 = vmul.f32 %v1964, %v2379
        %v2408 = vmul.f32 %v1987, %v2379
        %v2409 = vmul.f32 %v1965, %v2379
        %v2410 = vmul.f32 %v1988, %v2379
        %v2411 = vmul.f32 %v1966, %v2379
        %v2412 = vadd.f32 %v2347, %v2380
        %v2413 = vadd.f32 %v2348, %v2381
        %v2414 = vadd.f32 %v2349, %v2382
        %v2415 = vadd.f32 %v2350, %v2383
        %v2416 = vadd.f32 %v2351, %v2384
        %v2417 = vadd.f32 %v2352, %v2385
        %v2418 = vadd.f32 %v2353, %v2386
        %v2419 = vadd.f32 %v2354, %v2387
        %v2420 = vadd.f32 %v2355, %v2388
        %v2421 = vadd.f32 %v2356, %v2389
        %v2422 = vadd.f32 %v2357, %v2390
        %v2423 = vadd.f32 %v2358, %v2391
        %v2424 = vadd.f32 %v2359, %v2392
        %v2425 = vadd.f32 %v2360, %v2393
        %v2426 = vadd.f32 %v2361, %v2394
        %v2427 = vadd.f32 %v2362, %v2395
        %v2428 = vadd.f32 %v2363, %v2396
        %v2429 = vadd.f32 %v2364, %v2397
        %v2430 = vadd.f32 %v2365, %v2398
        %v2431 = vadd.f32 %v2366, %v2399
        %v2432 = vadd.f32 %v2367, %v2400
        %v2433 = vadd.f32 %v2368, %v2401
        %v2434 = vadd.f32 %v2369, %v2402
        %v2435 = vadd.f32 %v2370, %v2403
        %v2436 = vadd.f32 %v2371, %v2404
        %v2437 = vadd.f32 %v2372, %v2405
        %v2438 = vadd.f32 %v2373, %v2406
        %v2439 = vadd.f32 %v2374, %v2407
        %v2440 = vadd.f32 %v2375, %v2408
        %v2441 = vadd.f32 %v2376, %v2409
        %v2442 = vadd.f32 %v2377, %v2410
        %v2443 = vadd.f32 %v2378, %v2411
        %v2444 = vrot.slane %v1237, 7
        %v2445 = vrot.slane %v1240, 7
        %v2446 = vrot.slane %v1243, 7
        %v2447 = vrot.slane %v1246, 7
        %v2448 = vrot.slane %v1249, 7
        %v2449 = vrot.slane %v1252, 7
        %v2450 = vrot.slane %v1255, 7
        %v2451 = vrot.slane %v1258, 7
        %v2452 = vrot.slane %v1261, 7
        %v2453 = vrot.slane %v1264, 7
        %v2454 = vrot.slane %v1267, 7
        %v2455 = vrot.slane %v1270, 7
        %v2456 = vrot.slane %v1273, 7
        %v2457 = vrot.slane %v1276, 7
        %v2458 = vrot.slane %v1279, 7
        %v2459 = vrot.slane %v1282, 7
        %v2460 = vrot.slane %v1285, 7
        %v2461 = vrot.slane %v1288, 7
        %v2462 = vrot.slane %v1291, 7
        %v2463 = vrot.slane %v1294, 7
        %v2464 = vrot.slane %v1297, 7
        %v2465 = vrot.slane %v1300, 7
        %v2466 = vrot.slane %v1238, 7
        %v2467 = vrot.slane %v1241, 7
        %v2468 = vrot.slane %v1244, 7
        %v2469 = vrot.slane %v1247, 7
        %v2470 = vrot.slane %v1250, 7
        %v2471 = vrot.slane %v1253, 7
        %v2472 = vrot.slane %v1256, 7
        %v2473 = vrot.slane %v1259, 7
        %v2474 = vrot.slane %v1262, 7
        %v2475 = vrot.slane %v1265, 7
        %v2476 = vrot.slane %v1268, 7
        %v2477 = vrot.slane %v1271, 7
        %v2478 = vrot.slane %v1274, 7
        %v2479 = vrot.slane %v1277, 7
        %v2480 = vrot.slane %v1280, 7
        %v2481 = vrot.slane %v1283, 7
        %v2482 = vrot.slane %v1286, 7
        %v2483 = vrot.slane %v1289, 7
        %v2484 = vrot.slane %v1292, 7
        %v2485 = vrot.slane %v1295, 7
        %v2486 = vrot.slane %v1298, 7
        %v2487 = vrot.slane %v1301, 7
        %v2488 = vrot.slane %v1239, 7
        %v2489 = vrot.slane %v1242, 7
        %v2490 = vrot.slane %v1245, 7
        %v2491 = vrot.slane %v1248, 7
        %v2492 = vrot.slane %v1251, 7
        %v2493 = vrot.slane %v1254, 7
        %v2494 = vrot.slane %v1257, 7
        %v2495 = vrot.slane %v1260, 7
        %v2496 = vrot.slane %v1263, 7
        %v2497 = vrot.slane %v1266, 7
        %v2498 = vrot.slane %v1269, 7
        %v2499 = vrot.slane %v1272, 7
        %v2500 = vrot.slane %v1275, 7
        %v2501 = vrot.slane %v1278, 7
        %v2502 = vrot.slane %v1281, 7
        %v2503 = vrot.slane %v1284, 7
        %v2504 = vrot.slane %v1287, 7
        %v2505 = vrot.slane %v1290, 7
        %v2506 = vrot.slane %v1293, 7
        %v2507 = vrot.slane %v1296, 7
        %v2508 = vrot.slane %v1299, 7
        %v2509 = vrot.slane %v1302, 7
        %vm2510 = vcmp.lt.s32.totalorder %v1377, 1
        %v2511 = vsel %vm2510, %v2444, %v2466
        %v2512 = vsel %vm2510, %v2445, %v2467
        %v2513 = vsel %vm2510, %v2446, %v2468
        %v2514 = vsel %vm2510, %v2447, %v2469
        %v2515 = vsel %vm2510, %v2448, %v2470
        %v2516 = vsel %vm2510, %v2449, %v2471
        %v2517 = vsel %vm2510, %v2450, %v2472
        %v2518 = vsel %vm2510, %v2451, %v2473
        %v2519 = vsel %vm2510, %v2452, %v2474
        %v2520 = vsel %vm2510, %v2453, %v2475
        %v2521 = vsel %vm2510, %v2454, %v2476
        %v2522 = vsel %vm2510, %v2455, %v2477
        %v2523 = vsel %vm2510, %v2456, %v2478
        %v2524 = vsel %vm2510, %v2457, %v2479
        %v2525 = vsel %vm2510, %v2458, %v2480
        %v2526 = vsel %vm2510, %v2459, %v2481
        %v2527 = vsel %vm2510, %v2460, %v2482
        %v2528 = vsel %vm2510, %v2461, %v2483
        %v2529 = vsel %vm2510, %v2462, %v2484
        %v2530 = vsel %vm2510, %v2463, %v2485
        %v2531 = vsel %vm2510, %v2464, %v2486
        %v2532 = vsel %vm2510, %v2465, %v2487
        %v2533 = vsel %vm2510, %v2488, %v2444
        %v2534 = vsel %vm2510, %v2489, %v2445
        %v2535 = vsel %vm2510, %v2490, %v2446
        %v2536 = vsel %vm2510, %v2491, %v2447
        %v2537 = vsel %vm2510, %v2492, %v2448
        %v2538 = vsel %vm2510, %v2493, %v2449
        %v2539 = vsel %vm2510, %v2494, %v2450
        %v2540 = vsel %vm2510, %v2495, %v2451
        %v2541 = vsel %vm2510, %v2496, %v2452
        %v2542 = vsel %vm2510, %v2497, %v2453
        %v2543 = vsel %vm2510, %v2498, %v2454
        %v2544 = vsel %vm2510, %v2499, %v2455
        %v2545 = vsel %vm2510, %v2500, %v2456
        %v2546 = vsel %vm2510, %v2501, %v2457
        %v2547 = vsel %vm2510, %v2502, %v2458
        %v2548 = vsel %vm2510, %v2503, %v2459
        %v2549 = vsel %vm2510, %v2504, %v2460
        %v2550 = vsel %vm2510, %v2505, %v2461
        %v2551 = vsel %vm2510, %v2506, %v2462
        %v2552 = vsel %vm2510, %v2507, %v2463
        %v2553 = vsel %vm2510, %v2508, %v2464
        %v2554 = vsel %vm2510, %v2509, %v2465
        %v2555 = vperm.slane %v1303, 2
        %v2556 = vmul.f32 %v2533, %v2555
        %v2557 = vmul.f32 %v2511, %v2555
        %v2558 = vmul.f32 %v2534, %v2555
        %v2559 = vmul.f32 %v2512, %v2555
        %v2560 = vmul.f32 %v2535, %v2555
        %v2561 = vmul.f32 %v2513, %v2555
        %v2562 = vmul.f32 %v2536, %v2555
        %v2563 = vmul.f32 %v2514, %v2555
        %v2564 = vmul.f32 %v2537, %v2555
        %v2565 = vmul.f32 %v2515, %v2555
        %v2566 = vmul.f32 %v2538, %v2555
        %v2567 = vmul.f32 %v2516, %v2555
        %v2568 = vmul.f32 %v2539, %v2555
        %v2569 = vmul.f32 %v2517, %v2555
        %v2570 = vmul.f32 %v2540, %v2555
        %v2571 = vmul.f32 %v2518, %v2555
        %v2572 = vmul.f32 %v2541, %v2555
        %v2573 = vmul.f32 %v2519, %v2555
        %v2574 = vmul.f32 %v2542, %v2555
        %v2575 = vmul.f32 %v2520, %v2555
        %v2576 = vmul.f32 %v2543, %v2555
        %v2577 = vmul.f32 %v2521, %v2555
        %v2578 = vmul.f32 %v2544, %v2555
        %v2579 = vmul.f32 %v2522, %v2555
        %v2580 = vmul.f32 %v2545, %v2555
        %v2581 = vmul.f32 %v2523, %v2555
        %v2582 = vmul.f32 %v2546, %v2555
        %v2583 = vmul.f32 %v2524, %v2555
        %v2584 = vmul.f32 %v2547, %v2555
        %v2585 = vmul.f32 %v2525, %v2555
        %v2586 = vmul.f32 %v2548, %v2555
        %v2587 = vmul.f32 %v2526, %v2555
        %v2588 = vadd.f32 %v2412, %v2556
        %v2589 = vadd.f32 %v2413, %v2557
        %v2590 = vadd.f32 %v2414, %v2558
        %v2591 = vadd.f32 %v2415, %v2559
        %v2592 = vadd.f32 %v2416, %v2560
        %v2593 = vadd.f32 %v2417, %v2561
        %v2594 = vadd.f32 %v2418, %v2562
        %v2595 = vadd.f32 %v2419, %v2563
        %v2596 = vadd.f32 %v2420, %v2564
        %v2597 = vadd.f32 %v2421, %v2565
        %v2598 = vadd.f32 %v2422, %v2566
        %v2599 = vadd.f32 %v2423, %v2567
        %v2600 = vadd.f32 %v2424, %v2568
        %v2601 = vadd.f32 %v2425, %v2569
        %v2602 = vadd.f32 %v2426, %v2570
        %v2603 = vadd.f32 %v2427, %v2571
        %v2604 = vadd.f32 %v2428, %v2572
        %v2605 = vadd.f32 %v2429, %v2573
        %v2606 = vadd.f32 %v2430, %v2574
        %v2607 = vadd.f32 %v2431, %v2575
        %v2608 = vadd.f32 %v2432, %v2576
        %v2609 = vadd.f32 %v2433, %v2577
        %v2610 = vadd.f32 %v2434, %v2578
        %v2611 = vadd.f32 %v2435, %v2579
        %v2612 = vadd.f32 %v2436, %v2580
        %v2613 = vadd.f32 %v2437, %v2581
        %v2614 = vadd.f32 %v2438, %v2582
        %v2615 = vadd.f32 %v2439, %v2583
        %v2616 = vadd.f32 %v2440, %v2584
        %v2617 = vadd.f32 %v2441, %v2585
        %v2618 = vadd.f32 %v2442, %v2586
        %v2619 = vadd.f32 %v2443, %v2587
        %v2620 = vperm.slane %v1304, 1
        %v2621 = vmul.f32 %v2534, %v2620
        %v2622 = vmul.f32 %v2512, %v2620
        %v2623 = vmul.f32 %v2535, %v2620
        %v2624 = vmul.f32 %v2513, %v2620
        %v2625 = vmul.f32 %v2536, %v2620
        %v2626 = vmul.f32 %v2514, %v2620
        %v2627 = vmul.f32 %v2537, %v2620
        %v2628 = vmul.f32 %v2515, %v2620
        %v2629 = vmul.f32 %v2538, %v2620
        %v2630 = vmul.f32 %v2516, %v2620
        %v2631 = vmul.f32 %v2539, %v2620
        %v2632 = vmul.f32 %v2517, %v2620
        %v2633 = vmul.f32 %v2540, %v2620
        %v2634 = vmul.f32 %v2518, %v2620
        %v2635 = vmul.f32 %v2541, %v2620
        %v2636 = vmul.f32 %v2519, %v2620
        %v2637 = vmul.f32 %v2542, %v2620
        %v2638 = vmul.f32 %v2520, %v2620
        %v2639 = vmul.f32 %v2543, %v2620
        %v2640 = vmul.f32 %v2521, %v2620
        %v2641 = vmul.f32 %v2544, %v2620
        %v2642 = vmul.f32 %v2522, %v2620
        %v2643 = vmul.f32 %v2545, %v2620
        %v2644 = vmul.f32 %v2523, %v2620
        %v2645 = vmul.f32 %v2546, %v2620
        %v2646 = vmul.f32 %v2524, %v2620
        %v2647 = vmul.f32 %v2547, %v2620
        %v2648 = vmul.f32 %v2525, %v2620
        %v2649 = vmul.f32 %v2548, %v2620
        %v2650 = vmul.f32 %v2526, %v2620
        %v2651 = vmul.f32 %v2549, %v2620
        %v2652 = vmul.f32 %v2527, %v2620
        %v2653 = vadd.f32 %v2588, %v2621
        %v2654 = vadd.f32 %v2589, %v2622
        %v2655 = vadd.f32 %v2590, %v2623
        %v2656 = vadd.f32 %v2591, %v2624
        %v2657 = vadd.f32 %v2592, %v2625
        %v2658 = vadd.f32 %v2593, %v2626
        %v2659 = vadd.f32 %v2594, %v2627
        %v2660 = vadd.f32 %v2595, %v2628
        %v2661 = vadd.f32 %v2596, %v2629
        %v2662 = vadd.f32 %v2597, %v2630
        %v2663 = vadd.f32 %v2598, %v2631
        %v2664 = vadd.f32 %v2599, %v2632
        %v2665 = vadd.f32 %v2600, %v2633
        %v2666 = vadd.f32 %v2601, %v2634
        %v2667 = vadd.f32 %v2602, %v2635
        %v2668 = vadd.f32 %v2603, %v2636
        %v2669 = vadd.f32 %v2604, %v2637
        %v2670 = vadd.f32 %v2605, %v2638
        %v2671 = vadd.f32 %v2606, %v2639
        %v2672 = vadd.f32 %v2607, %v2640
        %v2673 = vadd.f32 %v2608, %v2641
        %v2674 = vadd.f32 %v2609, %v2642
        %v2675 = vadd.f32 %v2610, %v2643
        %v2676 = vadd.f32 %v2611, %v2644
        %v2677 = vadd.f32 %v2612, %v2645
        %v2678 = vadd.f32 %v2613, %v2646
        %v2679 = vadd.f32 %v2614, %v2647
        %v2680 = vadd.f32 %v2615, %v2648
        %v2681 = vadd.f32 %v2616, %v2649
        %v2682 = vadd.f32 %v2617, %v2650
        %v2683 = vadd.f32 %v2618, %v2651
        %v2684 = vadd.f32 %v2619, %v2652
        %v2685 = vperm.slane %v1305, 0
        %v2686 = vmul.f32 %v2535, %v2685
        %v2687 = vmul.f32 %v2513, %v2685
        %v2688 = vmul.f32 %v2536, %v2685
        %v2689 = vmul.f32 %v2514, %v2685
        %v2690 = vmul.f32 %v2537, %v2685
        %v2691 = vmul.f32 %v2515, %v2685
        %v2692 = vmul.f32 %v2538, %v2685
        %v2693 = vmul.f32 %v2516, %v2685
        %v2694 = vmul.f32 %v2539, %v2685
        %v2695 = vmul.f32 %v2517, %v2685
        %v2696 = vmul.f32 %v2540, %v2685
        %v2697 = vmul.f32 %v2518, %v2685
        %v2698 = vmul.f32 %v2541, %v2685
        %v2699 = vmul.f32 %v2519, %v2685
        %v2700 = vmul.f32 %v2542, %v2685
        %v2701 = vmul.f32 %v2520, %v2685
        %v2702 = vmul.f32 %v2543, %v2685
        %v2703 = vmul.f32 %v2521, %v2685
        %v2704 = vmul.f32 %v2544, %v2685
        %v2705 = vmul.f32 %v2522, %v2685
        %v2706 = vmul.f32 %v2545, %v2685
        %v2707 = vmul.f32 %v2523, %v2685
        %v2708 = vmul.f32 %v2546, %v2685
        %v2709 = vmul.f32 %v2524, %v2685
        %v2710 = vmul.f32 %v2547, %v2685
        %v2711 = vmul.f32 %v2525, %v2685
        %v2712 = vmul.f32 %v2548, %v2685
        %v2713 = vmul.f32 %v2526, %v2685
        %v2714 = vmul.f32 %v2549, %v2685
        %v2715 = vmul.f32 %v2527, %v2685
        %v2716 = vmul.f32 %v2550, %v2685
        %v2717 = vmul.f32 %v2528, %v2685
        %v2718 = vadd.f32 %v2653, %v2686
        %v2719 = vadd.f32 %v2654, %v2687
        %v2720 = vadd.f32 %v2655, %v2688
        %v2721 = vadd.f32 %v2656, %v2689
        %v2722 = vadd.f32 %v2657, %v2690
        %v2723 = vadd.f32 %v2658, %v2691
        %v2724 = vadd.f32 %v2659, %v2692
        %v2725 = vadd.f32 %v2660, %v2693
        %v2726 = vadd.f32 %v2661, %v2694
        %v2727 = vadd.f32 %v2662, %v2695
        %v2728 = vadd.f32 %v2663, %v2696
        %v2729 = vadd.f32 %v2664, %v2697
        %v2730 = vadd.f32 %v2665, %v2698
        %v2731 = vadd.f32 %v2666, %v2699
        %v2732 = vadd.f32 %v2667, %v2700
        %v2733 = vadd.f32 %v2668, %v2701
        %v2734 = vadd.f32 %v2669, %v2702
        %v2735 = vadd.f32 %v2670, %v2703
        %v2736 = vadd.f32 %v2671, %v2704
        %v2737 = vadd.f32 %v2672, %v2705
        %v2738 = vadd.f32 %v2673, %v2706
        %v2739 = vadd.f32 %v2674, %v2707
        %v2740 = vadd.f32 %v2675, %v2708
        %v2741 = vadd.f32 %v2676, %v2709
        %v2742 = vadd.f32 %v2677, %v2710
        %v2743 = vadd.f32 %v2678, %v2711
        %v2744 = vadd.f32 %v2679, %v2712
        %v2745 = vadd.f32 %v2680, %v2713
        %v2746 = vadd.f32 %v2681, %v2714
        %v2747 = vadd.f32 %v2682, %v2715
        %v2748 = vadd.f32 %v2683, %v2716
        %v2749 = vadd.f32 %v2684, %v2717
        %v2750 = vperm.slane %v1305, 7
        %v2751 = vmul.f32 %v2536, %v2750
        %v2752 = vmul.f32 %v2514, %v2750
        %v2753 = vmul.f32 %v2537, %v2750
        %v2754 = vmul.f32 %v2515, %v2750
        %v2755 = vmul.f32 %v2538, %v2750
        %v2756 = vmul.f32 %v2516, %v2750
        %v2757 = vmul.f32 %v2539, %v2750
        %v2758 = vmul.f32 %v2517, %v2750
        %v2759 = vmul.f32 %v2540, %v2750
        %v2760 = vmul.f32 %v2518, %v2750
        %v2761 = vmul.f32 %v2541, %v2750
        %v2762 = vmul.f32 %v2519, %v2750
        %v2763 = vmul.f32 %v2542, %v2750
        %v2764 = vmul.f32 %v2520, %v2750
        %v2765 = vmul.f32 %v2543, %v2750
        %v2766 = vmul.f32 %v2521, %v2750
        %v2767 = vmul.f32 %v2544, %v2750
        %v2768 = vmul.f32 %v2522, %v2750
        %v2769 = vmul.f32 %v2545, %v2750
        %v2770 = vmul.f32 %v2523, %v2750
        %v2771 = vmul.f32 %v2546, %v2750
        %v2772 = vmul.f32 %v2524, %v2750
        %v2773 = vmul.f32 %v2547, %v2750
        %v2774 = vmul.f32 %v2525, %v2750
        %v2775 = vmul.f32 %v2548, %v2750
        %v2776 = vmul.f32 %v2526, %v2750
        %v2777 = vmul.f32 %v2549, %v2750
        %v2778 = vmul.f32 %v2527, %v2750
        %v2779 = vmul.f32 %v2550, %v2750
        %v2780 = vmul.f32 %v2528, %v2750
        %v2781 = vmul.f32 %v2551, %v2750
        %v2782 = vmul.f32 %v2529, %v2750
        %v2783 = vadd.f32 %v2718, %v2751
        %v2784 = vadd.f32 %v2719, %v2752
        %v2785 = vadd.f32 %v2720, %v2753
        %v2786 = vadd.f32 %v2721, %v2754
        %v2787 = vadd.f32 %v2722, %v2755
        %v2788 = vadd.f32 %v2723, %v2756
        %v2789 = vadd.f32 %v2724, %v2757
        %v2790 = vadd.f32 %v2725, %v2758
        %v2791 = vadd.f32 %v2726, %v2759
        %v2792 = vadd.f32 %v2727, %v2760
        %v2793 = vadd.f32 %v2728, %v2761
        %v2794 = vadd.f32 %v2729, %v2762
        %v2795 = vadd.f32 %v2730, %v2763
        %v2796 = vadd.f32 %v2731, %v2764
        %v2797 = vadd.f32 %v2732, %v2765
        %v2798 = vadd.f32 %v2733, %v2766
        %v2799 = vadd.f32 %v2734, %v2767
        %v2800 = vadd.f32 %v2735, %v2768
        %v2801 = vadd.f32 %v2736, %v2769
        %v2802 = vadd.f32 %v2737, %v2770
        %v2803 = vadd.f32 %v2738, %v2771
        %v2804 = vadd.f32 %v2739, %v2772
        %v2805 = vadd.f32 %v2740, %v2773
        %v2806 = vadd.f32 %v2741, %v2774
        %v2807 = vadd.f32 %v2742, %v2775
        %v2808 = vadd.f32 %v2743, %v2776
        %v2809 = vadd.f32 %v2744, %v2777
        %v2810 = vadd.f32 %v2745, %v2778
        %v2811 = vadd.f32 %v2746, %v2779
        %v2812 = vadd.f32 %v2747, %v2780
        %v2813 = vadd.f32 %v2748, %v2781
        %v2814 = vadd.f32 %v2749, %v2782
        %v2815 = vperm.slane %v1306, 6
        %v2816 = vmul.f32 %v2537, %v2815
        %v2817 = vmul.f32 %v2515, %v2815
        %v2818 = vmul.f32 %v2538, %v2815
        %v2819 = vmul.f32 %v2516, %v2815
        %v2820 = vmul.f32 %v2539, %v2815
        %v2821 = vmul.f32 %v2517, %v2815
        %v2822 = vmul.f32 %v2540, %v2815
        %v2823 = vmul.f32 %v2518, %v2815
        %v2824 = vmul.f32 %v2541, %v2815
        %v2825 = vmul.f32 %v2519, %v2815
        %v2826 = vmul.f32 %v2542, %v2815
        %v2827 = vmul.f32 %v2520, %v2815
        %v2828 = vmul.f32 %v2543, %v2815
        %v2829 = vmul.f32 %v2521, %v2815
        %v2830 = vmul.f32 %v2544, %v2815
        %v2831 = vmul.f32 %v2522, %v2815
        %v2832 = vmul.f32 %v2545, %v2815
        %v2833 = vmul.f32 %v2523, %v2815
        %v2834 = vmul.f32 %v2546, %v2815
        %v2835 = vmul.f32 %v2524, %v2815
        %v2836 = vmul.f32 %v2547, %v2815
        %v2837 = vmul.f32 %v2525, %v2815
        %v2838 = vmul.f32 %v2548, %v2815
        %v2839 = vmul.f32 %v2526, %v2815
        %v2840 = vmul.f32 %v2549, %v2815
        %v2841 = vmul.f32 %v2527, %v2815
        %v2842 = vmul.f32 %v2550, %v2815
        %v2843 = vmul.f32 %v2528, %v2815
        %v2844 = vmul.f32 %v2551, %v2815
        %v2845 = vmul.f32 %v2529, %v2815
        %v2846 = vmul.f32 %v2552, %v2815
        %v2847 = vmul.f32 %v2530, %v2815
        %v2848 = vadd.f32 %v2783, %v2816
        %v2849 = vadd.f32 %v2784, %v2817
        %v2850 = vadd.f32 %v2785, %v2818
        %v2851 = vadd.f32 %v2786, %v2819
        %v2852 = vadd.f32 %v2787, %v2820
        %v2853 = vadd.f32 %v2788, %v2821
        %v2854 = vadd.f32 %v2789, %v2822
        %v2855 = vadd.f32 %v2790, %v2823
        %v2856 = vadd.f32 %v2791, %v2824
        %v2857 = vadd.f32 %v2792, %v2825
        %v2858 = vadd.f32 %v2793, %v2826
        %v2859 = vadd.f32 %v2794, %v2827
        %v2860 = vadd.f32 %v2795, %v2828
        %v2861 = vadd.f32 %v2796, %v2829
        %v2862 = vadd.f32 %v2797, %v2830
        %v2863 = vadd.f32 %v2798, %v2831
        %v2864 = vadd.f32 %v2799, %v2832
        %v2865 = vadd.f32 %v2800, %v2833
        %v2866 = vadd.f32 %v2801, %v2834
        %v2867 = vadd.f32 %v2802, %v2835
        %v2868 = vadd.f32 %v2803, %v2836
        %v2869 = vadd.f32 %v2804, %v2837
        %v2870 = vadd.f32 %v2805, %v2838
        %v2871 = vadd.f32 %v2806, %v2839
        %v2872 = vadd.f32 %v2807, %v2840
        %v2873 = vadd.f32 %v2808, %v2841
        %v2874 = vadd.f32 %v2809, %v2842
        %v2875 = vadd.f32 %v2810, %v2843
        %v2876 = vadd.f32 %v2811, %v2844
        %v2877 = vadd.f32 %v2812, %v2845
        %v2878 = vadd.f32 %v2813, %v2846
        %v2879 = vadd.f32 %v2814, %v2847
        %v2880 = vperm.slane %v1307, 5
        %v2881 = vmul.f32 %v2538, %v2880
        %v2882 = vmul.f32 %v2516, %v2880
        %v2883 = vmul.f32 %v2539, %v2880
        %v2884 = vmul.f32 %v2517, %v2880
        %v2885 = vmul.f32 %v2540, %v2880
        %v2886 = vmul.f32 %v2518, %v2880
        %v2887 = vmul.f32 %v2541, %v2880
        %v2888 = vmul.f32 %v2519, %v2880
        %v2889 = vmul.f32 %v2542, %v2880
        %v2890 = vmul.f32 %v2520, %v2880
        %v2891 = vmul.f32 %v2543, %v2880
        %v2892 = vmul.f32 %v2521, %v2880
        %v2893 = vmul.f32 %v2544, %v2880
        %v2894 = vmul.f32 %v2522, %v2880
        %v2895 = vmul.f32 %v2545, %v2880
        %v2896 = vmul.f32 %v2523, %v2880
        %v2897 = vmul.f32 %v2546, %v2880
        %v2898 = vmul.f32 %v2524, %v2880
        %v2899 = vmul.f32 %v2547, %v2880
        %v2900 = vmul.f32 %v2525, %v2880
        %v2901 = vmul.f32 %v2548, %v2880
        %v2902 = vmul.f32 %v2526, %v2880
        %v2903 = vmul.f32 %v2549, %v2880
        %v2904 = vmul.f32 %v2527, %v2880
        %v2905 = vmul.f32 %v2550, %v2880
        %v2906 = vmul.f32 %v2528, %v2880
        %v2907 = vmul.f32 %v2551, %v2880
        %v2908 = vmul.f32 %v2529, %v2880
        %v2909 = vmul.f32 %v2552, %v2880
        %v2910 = vmul.f32 %v2530, %v2880
        %v2911 = vmul.f32 %v2553, %v2880
        %v2912 = vmul.f32 %v2531, %v2880
        %v2913 = vadd.f32 %v2848, %v2881
        %v2914 = vadd.f32 %v2849, %v2882
        %v2915 = vadd.f32 %v2850, %v2883
        %v2916 = vadd.f32 %v2851, %v2884
        %v2917 = vadd.f32 %v2852, %v2885
        %v2918 = vadd.f32 %v2853, %v2886
        %v2919 = vadd.f32 %v2854, %v2887
        %v2920 = vadd.f32 %v2855, %v2888
        %v2921 = vadd.f32 %v2856, %v2889
        %v2922 = vadd.f32 %v2857, %v2890
        %v2923 = vadd.f32 %v2858, %v2891
        %v2924 = vadd.f32 %v2859, %v2892
        %v2925 = vadd.f32 %v2860, %v2893
        %v2926 = vadd.f32 %v2861, %v2894
        %v2927 = vadd.f32 %v2862, %v2895
        %v2928 = vadd.f32 %v2863, %v2896
        %v2929 = vadd.f32 %v2864, %v2897
        %v2930 = vadd.f32 %v2865, %v2898
        %v2931 = vadd.f32 %v2866, %v2899
        %v2932 = vadd.f32 %v2867, %v2900
        %v2933 = vadd.f32 %v2868, %v2901
        %v2934 = vadd.f32 %v2869, %v2902
        %v2935 = vadd.f32 %v2870, %v2903
        %v2936 = vadd.f32 %v2871, %v2904
        %v2937 = vadd.f32 %v2872, %v2905
        %v2938 = vadd.f32 %v2873, %v2906
        %v2939 = vadd.f32 %v2874, %v2907
        %v2940 = vadd.f32 %v2875, %v2908
        %v2941 = vadd.f32 %v2876, %v2909
        %v2942 = vadd.f32 %v2877, %v2910
        %v2943 = vadd.f32 %v2878, %v2911
        %v2944 = vadd.f32 %v2879, %v2912
        %v2945 = vperm.slane %v1308, 4
        %v2946 = vmul.f32 %v2539, %v2945
        %v2947 = vmul.f32 %v2517, %v2945
        %v2948 = vmul.f32 %v2540, %v2945
        %v2949 = vmul.f32 %v2518, %v2945
        %v2950 = vmul.f32 %v2541, %v2945
        %v2951 = vmul.f32 %v2519, %v2945
        %v2952 = vmul.f32 %v2542, %v2945
        %v2953 = vmul.f32 %v2520, %v2945
        %v2954 = vmul.f32 %v2543, %v2945
        %v2955 = vmul.f32 %v2521, %v2945
        %v2956 = vmul.f32 %v2544, %v2945
        %v2957 = vmul.f32 %v2522, %v2945
        %v2958 = vmul.f32 %v2545, %v2945
        %v2959 = vmul.f32 %v2523, %v2945
        %v2960 = vmul.f32 %v2546, %v2945
        %v2961 = vmul.f32 %v2524, %v2945
        %v2962 = vmul.f32 %v2547, %v2945
        %v2963 = vmul.f32 %v2525, %v2945
        %v2964 = vmul.f32 %v2548, %v2945
        %v2965 = vmul.f32 %v2526, %v2945
        %v2966 = vmul.f32 %v2549, %v2945
        %v2967 = vmul.f32 %v2527, %v2945
        %v2968 = vmul.f32 %v2550, %v2945
        %v2969 = vmul.f32 %v2528, %v2945
        %v2970 = vmul.f32 %v2551, %v2945
        %v2971 = vmul.f32 %v2529, %v2945
        %v2972 = vmul.f32 %v2552, %v2945
        %v2973 = vmul.f32 %v2530, %v2945
        %v2974 = vmul.f32 %v2553, %v2945
        %v2975 = vmul.f32 %v2531, %v2945
        %v2976 = vmul.f32 %v2554, %v2945
        %v2977 = vmul.f32 %v2532, %v2945
        %v2978 = vadd.f32 %v2913, %v2946
        %v2979 = vadd.f32 %v2914, %v2947
        %v2980 = vadd.f32 %v2915, %v2948
        %v2981 = vadd.f32 %v2916, %v2949
        %v2982 = vadd.f32 %v2917, %v2950
        %v2983 = vadd.f32 %v2918, %v2951
        %v2984 = vadd.f32 %v2919, %v2952
        %v2985 = vadd.f32 %v2920, %v2953
        %v2986 = vadd.f32 %v2921, %v2954
        %v2987 = vadd.f32 %v2922, %v2955
        %v2988 = vadd.f32 %v2923, %v2956
        %v2989 = vadd.f32 %v2924, %v2957
        %v2990 = vadd.f32 %v2925, %v2958
        %v2991 = vadd.f32 %v2926, %v2959
        %v2992 = vadd.f32 %v2927, %v2960
        %v2993 = vadd.f32 %v2928, %v2961
        %v2994 = vadd.f32 %v2929, %v2962
        %v2995 = vadd.f32 %v2930, %v2963
        %v2996 = vadd.f32 %v2931, %v2964
        %v2997 = vadd.f32 %v2932, %v2965
        %v2998 = vadd.f32 %v2933, %v2966
        %v2999 = vadd.f32 %v2934, %v2967
        %v3000 = vadd.f32 %v2935, %v2968
        %v3001 = vadd.f32 %v2936, %v2969
        %v3002 = vadd.f32 %v2937, %v2970
        %v3003 = vadd.f32 %v2938, %v2971
        %v3004 = vadd.f32 %v2939, %v2972
        %v3005 = vadd.f32 %v2940, %v2973
        %v3006 = vadd.f32 %v2941, %v2974
        %v3007 = vadd.f32 %v2942, %v2975
        %v3008 = vadd.f32 %v2943, %v2976
        %v3009 = vadd.f32 %v2944, %v2977
        %v3010 = vperm.slane %v1303, 3
        %v3011 = vmul.f32 %v1237, %v3010
        %v3012 = vmul.f32 %v1238, %v3010
        %v3013 = vmul.f32 %v1240, %v3010
        %v3014 = vmul.f32 %v1241, %v3010
        %v3015 = vmul.f32 %v1243, %v3010
        %v3016 = vmul.f32 %v1244, %v3010
        %v3017 = vmul.f32 %v1246, %v3010
        %v3018 = vmul.f32 %v1247, %v3010
        %v3019 = vmul.f32 %v1249, %v3010
        %v3020 = vmul.f32 %v1250, %v3010
        %v3021 = vmul.f32 %v1252, %v3010
        %v3022 = vmul.f32 %v1253, %v3010
        %v3023 = vmul.f32 %v1255, %v3010
        %v3024 = vmul.f32 %v1256, %v3010
        %v3025 = vmul.f32 %v1258, %v3010
        %v3026 = vmul.f32 %v1259, %v3010
        %v3027 = vmul.f32 %v1261, %v3010
        %v3028 = vmul.f32 %v1262, %v3010
        %v3029 = vmul.f32 %v1264, %v3010
        %v3030 = vmul.f32 %v1265, %v3010
        %v3031 = vmul.f32 %v1267, %v3010
        %v3032 = vmul.f32 %v1268, %v3010
        %v3033 = vmul.f32 %v1270, %v3010
        %v3034 = vmul.f32 %v1271, %v3010
        %v3035 = vmul.f32 %v1273, %v3010
        %v3036 = vmul.f32 %v1274, %v3010
        %v3037 = vmul.f32 %v1276, %v3010
        %v3038 = vmul.f32 %v1277, %v3010
        %v3039 = vmul.f32 %v1279, %v3010
        %v3040 = vmul.f32 %v1280, %v3010
        %v3041 = vmul.f32 %v1282, %v3010
        %v3042 = vmul.f32 %v1283, %v3010
        %v3043 = vadd.f32 %v2978, %v3011
        %v3044 = vadd.f32 %v2979, %v3012
        %v3045 = vadd.f32 %v2980, %v3013
        %v3046 = vadd.f32 %v2981, %v3014
        %v3047 = vadd.f32 %v2982, %v3015
        %v3048 = vadd.f32 %v2983, %v3016
        %v3049 = vadd.f32 %v2984, %v3017
        %v3050 = vadd.f32 %v2985, %v3018
        %v3051 = vadd.f32 %v2986, %v3019
        %v3052 = vadd.f32 %v2987, %v3020
        %v3053 = vadd.f32 %v2988, %v3021
        %v3054 = vadd.f32 %v2989, %v3022
        %v3055 = vadd.f32 %v2990, %v3023
        %v3056 = vadd.f32 %v2991, %v3024
        %v3057 = vadd.f32 %v2992, %v3025
        %v3058 = vadd.f32 %v2993, %v3026
        %v3059 = vadd.f32 %v2994, %v3027
        %v3060 = vadd.f32 %v2995, %v3028
        %v3061 = vadd.f32 %v2996, %v3029
        %v3062 = vadd.f32 %v2997, %v3030
        %v3063 = vadd.f32 %v2998, %v3031
        %v3064 = vadd.f32 %v2999, %v3032
        %v3065 = vadd.f32 %v3000, %v3033
        %v3066 = vadd.f32 %v3001, %v3034
        %v3067 = vadd.f32 %v3002, %v3035
        %v3068 = vadd.f32 %v3003, %v3036
        %v3069 = vadd.f32 %v3004, %v3037
        %v3070 = vadd.f32 %v3005, %v3038
        %v3071 = vadd.f32 %v3006, %v3039
        %v3072 = vadd.f32 %v3007, %v3040
        %v3073 = vadd.f32 %v3008, %v3041
        %v3074 = vadd.f32 %v3009, %v3042
        %v3075 = vperm.slane %v1304, 2
        %v3076 = vmul.f32 %v1240, %v3075
        %v3077 = vmul.f32 %v1241, %v3075
        %v3078 = vmul.f32 %v1243, %v3075
        %v3079 = vmul.f32 %v1244, %v3075
        %v3080 = vmul.f32 %v1246, %v3075
        %v3081 = vmul.f32 %v1247, %v3075
        %v3082 = vmul.f32 %v1249, %v3075
        %v3083 = vmul.f32 %v1250, %v3075
        %v3084 = vmul.f32 %v1252, %v3075
        %v3085 = vmul.f32 %v1253, %v3075
        %v3086 = vmul.f32 %v1255, %v3075
        %v3087 = vmul.f32 %v1256, %v3075
        %v3088 = vmul.f32 %v1258, %v3075
        %v3089 = vmul.f32 %v1259, %v3075
        %v3090 = vmul.f32 %v1261, %v3075
        %v3091 = vmul.f32 %v1262, %v3075
        %v3092 = vmul.f32 %v1264, %v3075
        %v3093 = vmul.f32 %v1265, %v3075
        %v3094 = vmul.f32 %v1267, %v3075
        %v3095 = vmul.f32 %v1268, %v3075
        %v3096 = vmul.f32 %v1270, %v3075
        %v3097 = vmul.f32 %v1271, %v3075
        %v3098 = vmul.f32 %v1273, %v3075
        %v3099 = vmul.f32 %v1274, %v3075
        %v3100 = vmul.f32 %v1276, %v3075
        %v3101 = vmul.f32 %v1277, %v3075
        %v3102 = vmul.f32 %v1279, %v3075
        %v3103 = vmul.f32 %v1280, %v3075
        %v3104 = vmul.f32 %v1282, %v3075
        %v3105 = vmul.f32 %v1283, %v3075
        %v3106 = vmul.f32 %v1285, %v3075
        %v3107 = vmul.f32 %v1286, %v3075
        %v3108 = vadd.f32 %v3043, %v3076
        %v3109 = vadd.f32 %v3044, %v3077
        %v3110 = vadd.f32 %v3045, %v3078
        %v3111 = vadd.f32 %v3046, %v3079
        %v3112 = vadd.f32 %v3047, %v3080
        %v3113 = vadd.f32 %v3048, %v3081
        %v3114 = vadd.f32 %v3049, %v3082
        %v3115 = vadd.f32 %v3050, %v3083
        %v3116 = vadd.f32 %v3051, %v3084
        %v3117 = vadd.f32 %v3052, %v3085
        %v3118 = vadd.f32 %v3053, %v3086
        %v3119 = vadd.f32 %v3054, %v3087
        %v3120 = vadd.f32 %v3055, %v3088
        %v3121 = vadd.f32 %v3056, %v3089
        %v3122 = vadd.f32 %v3057, %v3090
        %v3123 = vadd.f32 %v3058, %v3091
        %v3124 = vadd.f32 %v3059, %v3092
        %v3125 = vadd.f32 %v3060, %v3093
        %v3126 = vadd.f32 %v3061, %v3094
        %v3127 = vadd.f32 %v3062, %v3095
        %v3128 = vadd.f32 %v3063, %v3096
        %v3129 = vadd.f32 %v3064, %v3097
        %v3130 = vadd.f32 %v3065, %v3098
        %v3131 = vadd.f32 %v3066, %v3099
        %v3132 = vadd.f32 %v3067, %v3100
        %v3133 = vadd.f32 %v3068, %v3101
        %v3134 = vadd.f32 %v3069, %v3102
        %v3135 = vadd.f32 %v3070, %v3103
        %v3136 = vadd.f32 %v3071, %v3104
        %v3137 = vadd.f32 %v3072, %v3105
        %v3138 = vadd.f32 %v3073, %v3106
        %v3139 = vadd.f32 %v3074, %v3107
        %v3140 = vperm.slane %v1305, 1
        %v3141 = vmul.f32 %v1243, %v3140
        %v3142 = vmul.f32 %v1244, %v3140
        %v3143 = vmul.f32 %v1246, %v3140
        %v3144 = vmul.f32 %v1247, %v3140
        %v3145 = vmul.f32 %v1249, %v3140
        %v3146 = vmul.f32 %v1250, %v3140
        %v3147 = vmul.f32 %v1252, %v3140
        %v3148 = vmul.f32 %v1253, %v3140
        %v3149 = vmul.f32 %v1255, %v3140
        %v3150 = vmul.f32 %v1256, %v3140
        %v3151 = vmul.f32 %v1258, %v3140
        %v3152 = vmul.f32 %v1259, %v3140
        %v3153 = vmul.f32 %v1261, %v3140
        %v3154 = vmul.f32 %v1262, %v3140
        %v3155 = vmul.f32 %v1264, %v3140
        %v3156 = vmul.f32 %v1265, %v3140
        %v3157 = vmul.f32 %v1267, %v3140
        %v3158 = vmul.f32 %v1268, %v3140
        %v3159 = vmul.f32 %v1270, %v3140
        %v3160 = vmul.f32 %v1271, %v3140
        %v3161 = vmul.f32 %v1273, %v3140
        %v3162 = vmul.f32 %v1274, %v3140
        %v3163 = vmul.f32 %v1276, %v3140
        %v3164 = vmul.f32 %v1277, %v3140
        %v3165 = vmul.f32 %v1279, %v3140
        %v3166 = vmul.f32 %v1280, %v3140
        %v3167 = vmul.f32 %v1282, %v3140
        %v3168 = vmul.f32 %v1283, %v3140
        %v3169 = vmul.f32 %v1285, %v3140
        %v3170 = vmul.f32 %v1286, %v3140
        %v3171 = vmul.f32 %v1288, %v3140
        %v3172 = vmul.f32 %v1289, %v3140
        %v3173 = vadd.f32 %v3108, %v3141
        %v3174 = vadd.f32 %v3109, %v3142
        %v3175 = vadd.f32 %v3110, %v3143
        %v3176 = vadd.f32 %v3111, %v3144
        %v3177 = vadd.f32 %v3112, %v3145
        %v3178 = vadd.f32 %v3113, %v3146
        %v3179 = vadd.f32 %v3114, %v3147
        %v3180 = vadd.f32 %v3115, %v3148
        %v3181 = vadd.f32 %v3116, %v3149
        %v3182 = vadd.f32 %v3117, %v3150
        %v3183 = vadd.f32 %v3118, %v3151
        %v3184 = vadd.f32 %v3119, %v3152
        %v3185 = vadd.f32 %v3120, %v3153
        %v3186 = vadd.f32 %v3121, %v3154
        %v3187 = vadd.f32 %v3122, %v3155
        %v3188 = vadd.f32 %v3123, %v3156
        %v3189 = vadd.f32 %v3124, %v3157
        %v3190 = vadd.f32 %v3125, %v3158
        %v3191 = vadd.f32 %v3126, %v3159
        %v3192 = vadd.f32 %v3127, %v3160
        %v3193 = vadd.f32 %v3128, %v3161
        %v3194 = vadd.f32 %v3129, %v3162
        %v3195 = vadd.f32 %v3130, %v3163
        %v3196 = vadd.f32 %v3131, %v3164
        %v3197 = vadd.f32 %v3132, %v3165
        %v3198 = vadd.f32 %v3133, %v3166
        %v3199 = vadd.f32 %v3134, %v3167
        %v3200 = vadd.f32 %v3135, %v3168
        %v3201 = vadd.f32 %v3136, %v3169
        %v3202 = vadd.f32 %v3137, %v3170
        %v3203 = vadd.f32 %v3138, %v3171
        %v3204 = vadd.f32 %v3139, %v3172
        %v3205 = vperm.slane %v1306, 0
        %v3206 = vmul.f32 %v1246, %v3205
        %v3207 = vmul.f32 %v1247, %v3205
        %v3208 = vmul.f32 %v1249, %v3205
        %v3209 = vmul.f32 %v1250, %v3205
        %v3210 = vmul.f32 %v1252, %v3205
        %v3211 = vmul.f32 %v1253, %v3205
        %v3212 = vmul.f32 %v1255, %v3205
        %v3213 = vmul.f32 %v1256, %v3205
        %v3214 = vmul.f32 %v1258, %v3205
        %v3215 = vmul.f32 %v1259, %v3205
        %v3216 = vmul.f32 %v1261, %v3205
        %v3217 = vmul.f32 %v1262, %v3205
        %v3218 = vmul.f32 %v1264, %v3205
        %v3219 = vmul.f32 %v1265, %v3205
        %v3220 = vmul.f32 %v1267, %v3205
        %v3221 = vmul.f32 %v1268, %v3205
        %v3222 = vmul.f32 %v1270, %v3205
        %v3223 = vmul.f32 %v1271, %v3205
        %v3224 = vmul.f32 %v1273, %v3205
        %v3225 = vmul.f32 %v1274, %v3205
        %v3226 = vmul.f32 %v1276, %v3205
        %v3227 = vmul.f32 %v1277, %v3205
        %v3228 = vmul.f32 %v1279, %v3205
        %v3229 = vmul.f32 %v1280, %v3205
        %v3230 = vmul.f32 %v1282, %v3205
        %v3231 = vmul.f32 %v1283, %v3205
        %v3232 = vmul.f32 %v1285, %v3205
        %v3233 = vmul.f32 %v1286, %v3205
        %v3234 = vmul.f32 %v1288, %v3205
        %v3235 = vmul.f32 %v1289, %v3205
        %v3236 = vmul.f32 %v1291, %v3205
        %v3237 = vmul.f32 %v1292, %v3205
        %v3238 = vadd.f32 %v3173, %v3206
        %v3239 = vadd.f32 %v3174, %v3207
        %v3240 = vadd.f32 %v3175, %v3208
        %v3241 = vadd.f32 %v3176, %v3209
        %v3242 = vadd.f32 %v3177, %v3210
        %v3243 = vadd.f32 %v3178, %v3211
        %v3244 = vadd.f32 %v3179, %v3212
        %v3245 = vadd.f32 %v3180, %v3213
        %v3246 = vadd.f32 %v3181, %v3214
        %v3247 = vadd.f32 %v3182, %v3215
        %v3248 = vadd.f32 %v3183, %v3216
        %v3249 = vadd.f32 %v3184, %v3217
        %v3250 = vadd.f32 %v3185, %v3218
        %v3251 = vadd.f32 %v3186, %v3219
        %v3252 = vadd.f32 %v3187, %v3220
        %v3253 = vadd.f32 %v3188, %v3221
        %v3254 = vadd.f32 %v3189, %v3222
        %v3255 = vadd.f32 %v3190, %v3223
        %v3256 = vadd.f32 %v3191, %v3224
        %v3257 = vadd.f32 %v3192, %v3225
        %v3258 = vadd.f32 %v3193, %v3226
        %v3259 = vadd.f32 %v3194, %v3227
        %v3260 = vadd.f32 %v3195, %v3228
        %v3261 = vadd.f32 %v3196, %v3229
        %v3262 = vadd.f32 %v3197, %v3230
        %v3263 = vadd.f32 %v3198, %v3231
        %v3264 = vadd.f32 %v3199, %v3232
        %v3265 = vadd.f32 %v3200, %v3233
        %v3266 = vadd.f32 %v3201, %v3234
        %v3267 = vadd.f32 %v3202, %v3235
        %v3268 = vadd.f32 %v3203, %v3236
        %v3269 = vadd.f32 %v3204, %v3237
        %v3270 = vperm.slane %v1306, 7
        %v3271 = vmul.f32 %v1249, %v3270
        %v3272 = vmul.f32 %v1250, %v3270
        %v3273 = vmul.f32 %v1252, %v3270
        %v3274 = vmul.f32 %v1253, %v3270
        %v3275 = vmul.f32 %v1255, %v3270
        %v3276 = vmul.f32 %v1256, %v3270
        %v3277 = vmul.f32 %v1258, %v3270
        %v3278 = vmul.f32 %v1259, %v3270
        %v3279 = vmul.f32 %v1261, %v3270
        %v3280 = vmul.f32 %v1262, %v3270
        %v3281 = vmul.f32 %v1264, %v3270
        %v3282 = vmul.f32 %v1265, %v3270
        %v3283 = vmul.f32 %v1267, %v3270
        %v3284 = vmul.f32 %v1268, %v3270
        %v3285 = vmul.f32 %v1270, %v3270
        %v3286 = vmul.f32 %v1271, %v3270
        %v3287 = vmul.f32 %v1273, %v3270
        %v3288 = vmul.f32 %v1274, %v3270
        %v3289 = vmul.f32 %v1276, %v3270
        %v3290 = vmul.f32 %v1277, %v3270
        %v3291 = vmul.f32 %v1279, %v3270
        %v3292 = vmul.f32 %v1280, %v3270
        %v3293 = vmul.f32 %v1282, %v3270
        %v3294 = vmul.f32 %v1283, %v3270
        %v3295 = vmul.f32 %v1285, %v3270
        %v3296 = vmul.f32 %v1286, %v3270
        %v3297 = vmul.f32 %v1288, %v3270
        %v3298 = vmul.f32 %v1289, %v3270
        %v3299 = vmul.f32 %v1291, %v3270
        %v3300 = vmul.f32 %v1292, %v3270
        %v3301 = vmul.f32 %v1294, %v3270
        %v3302 = vmul.f32 %v1295, %v3270
        %v3303 = vadd.f32 %v3238, %v3271
        %v3304 = vadd.f32 %v3239, %v3272
        %v3305 = vadd.f32 %v3240, %v3273
        %v3306 = vadd.f32 %v3241, %v3274
        %v3307 = vadd.f32 %v3242, %v3275
        %v3308 = vadd.f32 %v3243, %v3276
        %v3309 = vadd.f32 %v3244, %v3277
        %v3310 = vadd.f32 %v3245, %v3278
        %v3311 = vadd.f32 %v3246, %v3279
        %v3312 = vadd.f32 %v3247, %v3280
        %v3313 = vadd.f32 %v3248, %v3281
        %v3314 = vadd.f32 %v3249, %v3282
        %v3315 = vadd.f32 %v3250, %v3283
        %v3316 = vadd.f32 %v3251, %v3284
        %v3317 = vadd.f32 %v3252, %v3285
        %v3318 = vadd.f32 %v3253, %v3286
        %v3319 = vadd.f32 %v3254, %v3287
        %v3320 = vadd.f32 %v3255, %v3288
        %v3321 = vadd.f32 %v3256, %v3289
        %v3322 = vadd.f32 %v3257, %v3290
        %v3323 = vadd.f32 %v3258, %v3291
        %v3324 = vadd.f32 %v3259, %v3292
        %v3325 = vadd.f32 %v3260, %v3293
        %v3326 = vadd.f32 %v3261, %v3294
        %v3327 = vadd.f32 %v3262, %v3295
        %v3328 = vadd.f32 %v3263, %v3296
        %v3329 = vadd.f32 %v3264, %v3297
        %v3330 = vadd.f32 %v3265, %v3298
        %v3331 = vadd.f32 %v3266, %v3299
        %v3332 = vadd.f32 %v3267, %v3300
        %v3333 = vadd.f32 %v3268, %v3301
        %v3334 = vadd.f32 %v3269, %v3302
        %v3335 = vperm.slane %v1307, 6
        %v3336 = vmul.f32 %v1252, %v3335
        %v3337 = vmul.f32 %v1253, %v3335
        %v3338 = vmul.f32 %v1255, %v3335
        %v3339 = vmul.f32 %v1256, %v3335
        %v3340 = vmul.f32 %v1258, %v3335
        %v3341 = vmul.f32 %v1259, %v3335
        %v3342 = vmul.f32 %v1261, %v3335
        %v3343 = vmul.f32 %v1262, %v3335
        %v3344 = vmul.f32 %v1264, %v3335
        %v3345 = vmul.f32 %v1265, %v3335
        %v3346 = vmul.f32 %v1267, %v3335
        %v3347 = vmul.f32 %v1268, %v3335
        %v3348 = vmul.f32 %v1270, %v3335
        %v3349 = vmul.f32 %v1271, %v3335
        %v3350 = vmul.f32 %v1273, %v3335
        %v3351 = vmul.f32 %v1274, %v3335
        %v3352 = vmul.f32 %v1276, %v3335
        %v3353 = vmul.f32 %v1277, %v3335
        %v3354 = vmul.f32 %v1279, %v3335
        %v3355 = vmul.f32 %v1280, %v3335
        %v3356 = vmul.f32 %v1282, %v3335
        %v3357 = vmul.f32 %v1283, %v3335
        %v3358 = vmul.f32 %v1285, %v3335
        %v3359 = vmul.f32 %v1286, %v3335
        %v3360 = vmul.f32 %v1288, %v3335
        %v3361 = vmul.f32 %v1289, %v3335
        %v3362 = vmul.f32 %v1291, %v3335
        %v3363 = vmul.f32 %v1292, %v3335
        %v3364 = vmul.f32 %v1294, %v3335
        %v3365 = vmul.f32 %v1295, %v3335
        %v3366 = vmul.f32 %v1297, %v3335
        %v3367 = vmul.f32 %v1298, %v3335
        %v3368 = vadd.f32 %v3303, %v3336
        %v3369 = vadd.f32 %v3304, %v3337
        %v3370 = vadd.f32 %v3305, %v3338
        %v3371 = vadd.f32 %v3306, %v3339
        %v3372 = vadd.f32 %v3307, %v3340
        %v3373 = vadd.f32 %v3308, %v3341
        %v3374 = vadd.f32 %v3309, %v3342
        %v3375 = vadd.f32 %v3310, %v3343
        %v3376 = vadd.f32 %v3311, %v3344
        %v3377 = vadd.f32 %v3312, %v3345
        %v3378 = vadd.f32 %v3313, %v3346
        %v3379 = vadd.f32 %v3314, %v3347
        %v3380 = vadd.f32 %v3315, %v3348
        %v3381 = vadd.f32 %v3316, %v3349
        %v3382 = vadd.f32 %v3317, %v3350
        %v3383 = vadd.f32 %v3318, %v3351
        %v3384 = vadd.f32 %v3319, %v3352
        %v3385 = vadd.f32 %v3320, %v3353
        %v3386 = vadd.f32 %v3321, %v3354
        %v3387 = vadd.f32 %v3322, %v3355
        %v3388 = vadd.f32 %v3323, %v3356
        %v3389 = vadd.f32 %v3324, %v3357
        %v3390 = vadd.f32 %v3325, %v3358
        %v3391 = vadd.f32 %v3326, %v3359
        %v3392 = vadd.f32 %v3327, %v3360
        %v3393 = vadd.f32 %v3328, %v3361
        %v3394 = vadd.f32 %v3329, %v3362
        %v3395 = vadd.f32 %v3330, %v3363
        %v3396 = vadd.f32 %v3331, %v3364
        %v3397 = vadd.f32 %v3332, %v3365
        %v3398 = vadd.f32 %v3333, %v3366
        %v3399 = vadd.f32 %v3334, %v3367
        %v3400 = vperm.slane %v1308, 5
        %v3401 = vmul.f32 %v1255, %v3400
        %v3402 = vmul.f32 %v1256, %v3400
        %v3403 = vmul.f32 %v1258, %v3400
        %v3404 = vmul.f32 %v1259, %v3400
        %v3405 = vmul.f32 %v1261, %v3400
        %v3406 = vmul.f32 %v1262, %v3400
        %v3407 = vmul.f32 %v1264, %v3400
        %v3408 = vmul.f32 %v1265, %v3400
        %v3409 = vmul.f32 %v1267, %v3400
        %v3410 = vmul.f32 %v1268, %v3400
        %v3411 = vmul.f32 %v1270, %v3400
        %v3412 = vmul.f32 %v1271, %v3400
        %v3413 = vmul.f32 %v1273, %v3400
        %v3414 = vmul.f32 %v1274, %v3400
        %v3415 = vmul.f32 %v1276, %v3400
        %v3416 = vmul.f32 %v1277, %v3400
        %v3417 = vmul.f32 %v1279, %v3400
        %v3418 = vmul.f32 %v1280, %v3400
        %v3419 = vmul.f32 %v1282, %v3400
        %v3420 = vmul.f32 %v1283, %v3400
        %v3421 = vmul.f32 %v1285, %v3400
        %v3422 = vmul.f32 %v1286, %v3400
        %v3423 = vmul.f32 %v1288, %v3400
        %v3424 = vmul.f32 %v1289, %v3400
        %v3425 = vmul.f32 %v1291, %v3400
        %v3426 = vmul.f32 %v1292, %v3400
        %v3427 = vmul.f32 %v1294, %v3400
        %v3428 = vmul.f32 %v1295, %v3400
        %v3429 = vmul.f32 %v1297, %v3400
        %v3430 = vmul.f32 %v1298, %v3400
        %v3431 = vmul.f32 %v1300, %v3400
        %v3432 = vmul.f32 %v1301, %v3400
        %v3433 = vadd.f32 %v3368, %v3401
        %v3434 = vadd.f32 %v3369, %v3402
        %v3435 = vadd.f32 %v3370, %v3403
        %v3436 = vadd.f32 %v3371, %v3404
        %v3437 = vadd.f32 %v3372, %v3405
        %v3438 = vadd.f32 %v3373, %v3406
        %v3439 = vadd.f32 %v3374, %v3407
        %v3440 = vadd.f32 %v3375, %v3408
        %v3441 = vadd.f32 %v3376, %v3409
        %v3442 = vadd.f32 %v3377, %v3410
        %v3443 = vadd.f32 %v3378, %v3411
        %v3444 = vadd.f32 %v3379, %v3412
        %v3445 = vadd.f32 %v3380, %v3413
        %v3446 = vadd.f32 %v3381, %v3414
        %v3447 = vadd.f32 %v3382, %v3415
        %v3448 = vadd.f32 %v3383, %v3416
        %v3449 = vadd.f32 %v3384, %v3417
        %v3450 = vadd.f32 %v3385, %v3418
        %v3451 = vadd.f32 %v3386, %v3419
        %v3452 = vadd.f32 %v3387, %v3420
        %v3453 = vadd.f32 %v3388, %v3421
        %v3454 = vadd.f32 %v3389, %v3422
        %v3455 = vadd.f32 %v3390, %v3423
        %v3456 = vadd.f32 %v3391, %v3424
        %v3457 = vadd.f32 %v3392, %v3425
        %v3458 = vadd.f32 %v3393, %v3426
        %v3459 = vadd.f32 %v3394, %v3427
        %v3460 = vadd.f32 %v3395, %v3428
        %v3461 = vadd.f32 %v3396, %v3429
        %v3462 = vadd.f32 %v3397, %v3430
        %v3463 = vadd.f32 %v3398, %v3431
        %v3464 = vadd.f32 %v3399, %v3432
        %v3465 = vrot.slane %v1237, 1
        %v3466 = vrot.slane %v1240, 1
        %v3467 = vrot.slane %v1243, 1
        %v3468 = vrot.slane %v1246, 1
        %v3469 = vrot.slane %v1249, 1
        %v3470 = vrot.slane %v1252, 1
        %v3471 = vrot.slane %v1255, 1
        %v3472 = vrot.slane %v1258, 1
        %v3473 = vrot.slane %v1261, 1
        %v3474 = vrot.slane %v1264, 1
        %v3475 = vrot.slane %v1267, 1
        %v3476 = vrot.slane %v1270, 1
        %v3477 = vrot.slane %v1273, 1
        %v3478 = vrot.slane %v1276, 1
        %v3479 = vrot.slane %v1279, 1
        %v3480 = vrot.slane %v1282, 1
        %v3481 = vrot.slane %v1285, 1
        %v3482 = vrot.slane %v1288, 1
        %v3483 = vrot.slane %v1291, 1
        %v3484 = vrot.slane %v1294, 1
        %v3485 = vrot.slane %v1297, 1
        %v3486 = vrot.slane %v1300, 1
        %v3487 = vrot.slane %v1238, 1
        %v3488 = vrot.slane %v1241, 1
        %v3489 = vrot.slane %v1244, 1
        %v3490 = vrot.slane %v1247, 1
        %v3491 = vrot.slane %v1250, 1
        %v3492 = vrot.slane %v1253, 1
        %v3493 = vrot.slane %v1256, 1
        %v3494 = vrot.slane %v1259, 1
        %v3495 = vrot.slane %v1262, 1
        %v3496 = vrot.slane %v1265, 1
        %v3497 = vrot.slane %v1268, 1
        %v3498 = vrot.slane %v1271, 1
        %v3499 = vrot.slane %v1274, 1
        %v3500 = vrot.slane %v1277, 1
        %v3501 = vrot.slane %v1280, 1
        %v3502 = vrot.slane %v1283, 1
        %v3503 = vrot.slane %v1286, 1
        %v3504 = vrot.slane %v1289, 1
        %v3505 = vrot.slane %v1292, 1
        %v3506 = vrot.slane %v1295, 1
        %v3507 = vrot.slane %v1298, 1
        %v3508 = vrot.slane %v1301, 1
        %v3509 = vrot.slane %v1239, 1
        %v3510 = vrot.slane %v1242, 1
        %v3511 = vrot.slane %v1245, 1
        %v3512 = vrot.slane %v1248, 1
        %v3513 = vrot.slane %v1251, 1
        %v3514 = vrot.slane %v1254, 1
        %v3515 = vrot.slane %v1257, 1
        %v3516 = vrot.slane %v1260, 1
        %v3517 = vrot.slane %v1263, 1
        %v3518 = vrot.slane %v1266, 1
        %v3519 = vrot.slane %v1269, 1
        %v3520 = vrot.slane %v1272, 1
        %v3521 = vrot.slane %v1275, 1
        %v3522 = vrot.slane %v1278, 1
        %v3523 = vrot.slane %v1281, 1
        %v3524 = vrot.slane %v1284, 1
        %v3525 = vrot.slane %v1287, 1
        %v3526 = vrot.slane %v1290, 1
        %v3527 = vrot.slane %v1293, 1
        %v3528 = vrot.slane %v1296, 1
        %v3529 = vrot.slane %v1299, 1
        %v3530 = vrot.slane %v1302, 1
        %vm3531 = vcmp.lt.s32.totalorder %v1377, 7
        %v3532 = vsel %vm3531, %v3487, %v3509
        %v3533 = vsel %vm3531, %v3488, %v3510
        %v3534 = vsel %vm3531, %v3489, %v3511
        %v3535 = vsel %vm3531, %v3490, %v3512
        %v3536 = vsel %vm3531, %v3491, %v3513
        %v3537 = vsel %vm3531, %v3492, %v3514
        %v3538 = vsel %vm3531, %v3493, %v3515
        %v3539 = vsel %vm3531, %v3494, %v3516
        %v3540 = vsel %vm3531, %v3495, %v3517
        %v3541 = vsel %vm3531, %v3496, %v3518
        %v3542 = vsel %vm3531, %v3497, %v3519
        %v3543 = vsel %vm3531, %v3498, %v3520
        %v3544 = vsel %vm3531, %v3499, %v3521
        %v3545 = vsel %vm3531, %v3500, %v3522
        %v3546 = vsel %vm3531, %v3501, %v3523
        %v3547 = vsel %vm3531, %v3502, %v3524
        %v3548 = vsel %vm3531, %v3503, %v3525
        %v3549 = vsel %vm3531, %v3504, %v3526
        %v3550 = vsel %vm3531, %v3505, %v3527
        %v3551 = vsel %vm3531, %v3506, %v3528
        %v3552 = vsel %vm3531, %v3507, %v3529
        %v3553 = vsel %vm3531, %v3508, %v3530
        %v3554 = vsel %vm3531, %v3465, %v3487
        %v3555 = vsel %vm3531, %v3466, %v3488
        %v3556 = vsel %vm3531, %v3467, %v3489
        %v3557 = vsel %vm3531, %v3468, %v3490
        %v3558 = vsel %vm3531, %v3469, %v3491
        %v3559 = vsel %vm3531, %v3470, %v3492
        %v3560 = vsel %vm3531, %v3471, %v3493
        %v3561 = vsel %vm3531, %v3472, %v3494
        %v3562 = vsel %vm3531, %v3473, %v3495
        %v3563 = vsel %vm3531, %v3474, %v3496
        %v3564 = vsel %vm3531, %v3475, %v3497
        %v3565 = vsel %vm3531, %v3476, %v3498
        %v3566 = vsel %vm3531, %v3477, %v3499
        %v3567 = vsel %vm3531, %v3478, %v3500
        %v3568 = vsel %vm3531, %v3479, %v3501
        %v3569 = vsel %vm3531, %v3480, %v3502
        %v3570 = vsel %vm3531, %v3481, %v3503
        %v3571 = vsel %vm3531, %v3482, %v3504
        %v3572 = vsel %vm3531, %v3483, %v3505
        %v3573 = vsel %vm3531, %v3484, %v3506
        %v3574 = vsel %vm3531, %v3485, %v3507
        %v3575 = vsel %vm3531, %v3486, %v3508
        %v3576 = vperm.slane %v1303, 4
        %v3577 = vmul.f32 %v3554, %v3576
        %v3578 = vmul.f32 %v3532, %v3576
        %v3579 = vmul.f32 %v3555, %v3576
        %v3580 = vmul.f32 %v3533, %v3576
        %v3581 = vmul.f32 %v3556, %v3576
        %v3582 = vmul.f32 %v3534, %v3576
        %v3583 = vmul.f32 %v3557, %v3576
        %v3584 = vmul.f32 %v3535, %v3576
        %v3585 = vmul.f32 %v3558, %v3576
        %v3586 = vmul.f32 %v3536, %v3576
        %v3587 = vmul.f32 %v3559, %v3576
        %v3588 = vmul.f32 %v3537, %v3576
        %v3589 = vmul.f32 %v3560, %v3576
        %v3590 = vmul.f32 %v3538, %v3576
        %v3591 = vmul.f32 %v3561, %v3576
        %v3592 = vmul.f32 %v3539, %v3576
        %v3593 = vmul.f32 %v3562, %v3576
        %v3594 = vmul.f32 %v3540, %v3576
        %v3595 = vmul.f32 %v3563, %v3576
        %v3596 = vmul.f32 %v3541, %v3576
        %v3597 = vmul.f32 %v3564, %v3576
        %v3598 = vmul.f32 %v3542, %v3576
        %v3599 = vmul.f32 %v3565, %v3576
        %v3600 = vmul.f32 %v3543, %v3576
        %v3601 = vmul.f32 %v3566, %v3576
        %v3602 = vmul.f32 %v3544, %v3576
        %v3603 = vmul.f32 %v3567, %v3576
        %v3604 = vmul.f32 %v3545, %v3576
        %v3605 = vmul.f32 %v3568, %v3576
        %v3606 = vmul.f32 %v3546, %v3576
        %v3607 = vmul.f32 %v3569, %v3576
        %v3608 = vmul.f32 %v3547, %v3576
        %v3609 = vadd.f32 %v3433, %v3577
        %v3610 = vadd.f32 %v3434, %v3578
        %v3611 = vadd.f32 %v3435, %v3579
        %v3612 = vadd.f32 %v3436, %v3580
        %v3613 = vadd.f32 %v3437, %v3581
        %v3614 = vadd.f32 %v3438, %v3582
        %v3615 = vadd.f32 %v3439, %v3583
        %v3616 = vadd.f32 %v3440, %v3584
        %v3617 = vadd.f32 %v3441, %v3585
        %v3618 = vadd.f32 %v3442, %v3586
        %v3619 = vadd.f32 %v3443, %v3587
        %v3620 = vadd.f32 %v3444, %v3588
        %v3621 = vadd.f32 %v3445, %v3589
        %v3622 = vadd.f32 %v3446, %v3590
        %v3623 = vadd.f32 %v3447, %v3591
        %v3624 = vadd.f32 %v3448, %v3592
        %v3625 = vadd.f32 %v3449, %v3593
        %v3626 = vadd.f32 %v3450, %v3594
        %v3627 = vadd.f32 %v3451, %v3595
        %v3628 = vadd.f32 %v3452, %v3596
        %v3629 = vadd.f32 %v3453, %v3597
        %v3630 = vadd.f32 %v3454, %v3598
        %v3631 = vadd.f32 %v3455, %v3599
        %v3632 = vadd.f32 %v3456, %v3600
        %v3633 = vadd.f32 %v3457, %v3601
        %v3634 = vadd.f32 %v3458, %v3602
        %v3635 = vadd.f32 %v3459, %v3603
        %v3636 = vadd.f32 %v3460, %v3604
        %v3637 = vadd.f32 %v3461, %v3605
        %v3638 = vadd.f32 %v3462, %v3606
        %v3639 = vadd.f32 %v3463, %v3607
        %v3640 = vadd.f32 %v3464, %v3608
        %v3641 = vperm.slane %v1304, 3
        %v3642 = vmul.f32 %v3555, %v3641
        %v3643 = vmul.f32 %v3533, %v3641
        %v3644 = vmul.f32 %v3556, %v3641
        %v3645 = vmul.f32 %v3534, %v3641
        %v3646 = vmul.f32 %v3557, %v3641
        %v3647 = vmul.f32 %v3535, %v3641
        %v3648 = vmul.f32 %v3558, %v3641
        %v3649 = vmul.f32 %v3536, %v3641
        %v3650 = vmul.f32 %v3559, %v3641
        %v3651 = vmul.f32 %v3537, %v3641
        %v3652 = vmul.f32 %v3560, %v3641
        %v3653 = vmul.f32 %v3538, %v3641
        %v3654 = vmul.f32 %v3561, %v3641
        %v3655 = vmul.f32 %v3539, %v3641
        %v3656 = vmul.f32 %v3562, %v3641
        %v3657 = vmul.f32 %v3540, %v3641
        %v3658 = vmul.f32 %v3563, %v3641
        %v3659 = vmul.f32 %v3541, %v3641
        %v3660 = vmul.f32 %v3564, %v3641
        %v3661 = vmul.f32 %v3542, %v3641
        %v3662 = vmul.f32 %v3565, %v3641
        %v3663 = vmul.f32 %v3543, %v3641
        %v3664 = vmul.f32 %v3566, %v3641
        %v3665 = vmul.f32 %v3544, %v3641
        %v3666 = vmul.f32 %v3567, %v3641
        %v3667 = vmul.f32 %v3545, %v3641
        %v3668 = vmul.f32 %v3568, %v3641
        %v3669 = vmul.f32 %v3546, %v3641
        %v3670 = vmul.f32 %v3569, %v3641
        %v3671 = vmul.f32 %v3547, %v3641
        %v3672 = vmul.f32 %v3570, %v3641
        %v3673 = vmul.f32 %v3548, %v3641
        %v3674 = vadd.f32 %v3609, %v3642
        %v3675 = vadd.f32 %v3610, %v3643
        %v3676 = vadd.f32 %v3611, %v3644
        %v3677 = vadd.f32 %v3612, %v3645
        %v3678 = vadd.f32 %v3613, %v3646
        %v3679 = vadd.f32 %v3614, %v3647
        %v3680 = vadd.f32 %v3615, %v3648
        %v3681 = vadd.f32 %v3616, %v3649
        %v3682 = vadd.f32 %v3617, %v3650
        %v3683 = vadd.f32 %v3618, %v3651
        %v3684 = vadd.f32 %v3619, %v3652
        %v3685 = vadd.f32 %v3620, %v3653
        %v3686 = vadd.f32 %v3621, %v3654
        %v3687 = vadd.f32 %v3622, %v3655
        %v3688 = vadd.f32 %v3623, %v3656
        %v3689 = vadd.f32 %v3624, %v3657
        %v3690 = vadd.f32 %v3625, %v3658
        %v3691 = vadd.f32 %v3626, %v3659
        %v3692 = vadd.f32 %v3627, %v3660
        %v3693 = vadd.f32 %v3628, %v3661
        %v3694 = vadd.f32 %v3629, %v3662
        %v3695 = vadd.f32 %v3630, %v3663
        %v3696 = vadd.f32 %v3631, %v3664
        %v3697 = vadd.f32 %v3632, %v3665
        %v3698 = vadd.f32 %v3633, %v3666
        %v3699 = vadd.f32 %v3634, %v3667
        %v3700 = vadd.f32 %v3635, %v3668
        %v3701 = vadd.f32 %v3636, %v3669
        %v3702 = vadd.f32 %v3637, %v3670
        %v3703 = vadd.f32 %v3638, %v3671
        %v3704 = vadd.f32 %v3639, %v3672
        %v3705 = vadd.f32 %v3640, %v3673
        %v3706 = vperm.slane %v1305, 2
        %v3707 = vmul.f32 %v3556, %v3706
        %v3708 = vmul.f32 %v3534, %v3706
        %v3709 = vmul.f32 %v3557, %v3706
        %v3710 = vmul.f32 %v3535, %v3706
        %v3711 = vmul.f32 %v3558, %v3706
        %v3712 = vmul.f32 %v3536, %v3706
        %v3713 = vmul.f32 %v3559, %v3706
        %v3714 = vmul.f32 %v3537, %v3706
        %v3715 = vmul.f32 %v3560, %v3706
        %v3716 = vmul.f32 %v3538, %v3706
        %v3717 = vmul.f32 %v3561, %v3706
        %v3718 = vmul.f32 %v3539, %v3706
        %v3719 = vmul.f32 %v3562, %v3706
        %v3720 = vmul.f32 %v3540, %v3706
        %v3721 = vmul.f32 %v3563, %v3706
        %v3722 = vmul.f32 %v3541, %v3706
        %v3723 = vmul.f32 %v3564, %v3706
        %v3724 = vmul.f32 %v3542, %v3706
        %v3725 = vmul.f32 %v3565, %v3706
        %v3726 = vmul.f32 %v3543, %v3706
        %v3727 = vmul.f32 %v3566, %v3706
        %v3728 = vmul.f32 %v3544, %v3706
        %v3729 = vmul.f32 %v3567, %v3706
        %v3730 = vmul.f32 %v3545, %v3706
        %v3731 = vmul.f32 %v3568, %v3706
        %v3732 = vmul.f32 %v3546, %v3706
        %v3733 = vmul.f32 %v3569, %v3706
        %v3734 = vmul.f32 %v3547, %v3706
        %v3735 = vmul.f32 %v3570, %v3706
        %v3736 = vmul.f32 %v3548, %v3706
        %v3737 = vmul.f32 %v3571, %v3706
        %v3738 = vmul.f32 %v3549, %v3706
        %v3739 = vadd.f32 %v3674, %v3707
        %v3740 = vadd.f32 %v3675, %v3708
        %v3741 = vadd.f32 %v3676, %v3709
        %v3742 = vadd.f32 %v3677, %v3710
        %v3743 = vadd.f32 %v3678, %v3711
        %v3744 = vadd.f32 %v3679, %v3712
        %v3745 = vadd.f32 %v3680, %v3713
        %v3746 = vadd.f32 %v3681, %v3714
        %v3747 = vadd.f32 %v3682, %v3715
        %v3748 = vadd.f32 %v3683, %v3716
        %v3749 = vadd.f32 %v3684, %v3717
        %v3750 = vadd.f32 %v3685, %v3718
        %v3751 = vadd.f32 %v3686, %v3719
        %v3752 = vadd.f32 %v3687, %v3720
        %v3753 = vadd.f32 %v3688, %v3721
        %v3754 = vadd.f32 %v3689, %v3722
        %v3755 = vadd.f32 %v3690, %v3723
        %v3756 = vadd.f32 %v3691, %v3724
        %v3757 = vadd.f32 %v3692, %v3725
        %v3758 = vadd.f32 %v3693, %v3726
        %v3759 = vadd.f32 %v3694, %v3727
        %v3760 = vadd.f32 %v3695, %v3728
        %v3761 = vadd.f32 %v3696, %v3729
        %v3762 = vadd.f32 %v3697, %v3730
        %v3763 = vadd.f32 %v3698, %v3731
        %v3764 = vadd.f32 %v3699, %v3732
        %v3765 = vadd.f32 %v3700, %v3733
        %v3766 = vadd.f32 %v3701, %v3734
        %v3767 = vadd.f32 %v3702, %v3735
        %v3768 = vadd.f32 %v3703, %v3736
        %v3769 = vadd.f32 %v3704, %v3737
        %v3770 = vadd.f32 %v3705, %v3738
        %v3771 = vperm.slane %v1306, 1
        %v3772 = vmul.f32 %v3557, %v3771
        %v3773 = vmul.f32 %v3535, %v3771
        %v3774 = vmul.f32 %v3558, %v3771
        %v3775 = vmul.f32 %v3536, %v3771
        %v3776 = vmul.f32 %v3559, %v3771
        %v3777 = vmul.f32 %v3537, %v3771
        %v3778 = vmul.f32 %v3560, %v3771
        %v3779 = vmul.f32 %v3538, %v3771
        %v3780 = vmul.f32 %v3561, %v3771
        %v3781 = vmul.f32 %v3539, %v3771
        %v3782 = vmul.f32 %v3562, %v3771
        %v3783 = vmul.f32 %v3540, %v3771
        %v3784 = vmul.f32 %v3563, %v3771
        %v3785 = vmul.f32 %v3541, %v3771
        %v3786 = vmul.f32 %v3564, %v3771
        %v3787 = vmul.f32 %v3542, %v3771
        %v3788 = vmul.f32 %v3565, %v3771
        %v3789 = vmul.f32 %v3543, %v3771
        %v3790 = vmul.f32 %v3566, %v3771
        %v3791 = vmul.f32 %v3544, %v3771
        %v3792 = vmul.f32 %v3567, %v3771
        %v3793 = vmul.f32 %v3545, %v3771
        %v3794 = vmul.f32 %v3568, %v3771
        %v3795 = vmul.f32 %v3546, %v3771
        %v3796 = vmul.f32 %v3569, %v3771
        %v3797 = vmul.f32 %v3547, %v3771
        %v3798 = vmul.f32 %v3570, %v3771
        %v3799 = vmul.f32 %v3548, %v3771
        %v3800 = vmul.f32 %v3571, %v3771
        %v3801 = vmul.f32 %v3549, %v3771
        %v3802 = vmul.f32 %v3572, %v3771
        %v3803 = vmul.f32 %v3550, %v3771
        %v3804 = vadd.f32 %v3739, %v3772
        %v3805 = vadd.f32 %v3740, %v3773
        %v3806 = vadd.f32 %v3741, %v3774
        %v3807 = vadd.f32 %v3742, %v3775
        %v3808 = vadd.f32 %v3743, %v3776
        %v3809 = vadd.f32 %v3744, %v3777
        %v3810 = vadd.f32 %v3745, %v3778
        %v3811 = vadd.f32 %v3746, %v3779
        %v3812 = vadd.f32 %v3747, %v3780
        %v3813 = vadd.f32 %v3748, %v3781
        %v3814 = vadd.f32 %v3749, %v3782
        %v3815 = vadd.f32 %v3750, %v3783
        %v3816 = vadd.f32 %v3751, %v3784
        %v3817 = vadd.f32 %v3752, %v3785
        %v3818 = vadd.f32 %v3753, %v3786
        %v3819 = vadd.f32 %v3754, %v3787
        %v3820 = vadd.f32 %v3755, %v3788
        %v3821 = vadd.f32 %v3756, %v3789
        %v3822 = vadd.f32 %v3757, %v3790
        %v3823 = vadd.f32 %v3758, %v3791
        %v3824 = vadd.f32 %v3759, %v3792
        %v3825 = vadd.f32 %v3760, %v3793
        %v3826 = vadd.f32 %v3761, %v3794
        %v3827 = vadd.f32 %v3762, %v3795
        %v3828 = vadd.f32 %v3763, %v3796
        %v3829 = vadd.f32 %v3764, %v3797
        %v3830 = vadd.f32 %v3765, %v3798
        %v3831 = vadd.f32 %v3766, %v3799
        %v3832 = vadd.f32 %v3767, %v3800
        %v3833 = vadd.f32 %v3768, %v3801
        %v3834 = vadd.f32 %v3769, %v3802
        %v3835 = vadd.f32 %v3770, %v3803
        %v3836 = vperm.slane %v1307, 0
        %v3837 = vmul.f32 %v3558, %v3836
        %v3838 = vmul.f32 %v3536, %v3836
        %v3839 = vmul.f32 %v3559, %v3836
        %v3840 = vmul.f32 %v3537, %v3836
        %v3841 = vmul.f32 %v3560, %v3836
        %v3842 = vmul.f32 %v3538, %v3836
        %v3843 = vmul.f32 %v3561, %v3836
        %v3844 = vmul.f32 %v3539, %v3836
        %v3845 = vmul.f32 %v3562, %v3836
        %v3846 = vmul.f32 %v3540, %v3836
        %v3847 = vmul.f32 %v3563, %v3836
        %v3848 = vmul.f32 %v3541, %v3836
        %v3849 = vmul.f32 %v3564, %v3836
        %v3850 = vmul.f32 %v3542, %v3836
        %v3851 = vmul.f32 %v3565, %v3836
        %v3852 = vmul.f32 %v3543, %v3836
        %v3853 = vmul.f32 %v3566, %v3836
        %v3854 = vmul.f32 %v3544, %v3836
        %v3855 = vmul.f32 %v3567, %v3836
        %v3856 = vmul.f32 %v3545, %v3836
        %v3857 = vmul.f32 %v3568, %v3836
        %v3858 = vmul.f32 %v3546, %v3836
        %v3859 = vmul.f32 %v3569, %v3836
        %v3860 = vmul.f32 %v3547, %v3836
        %v3861 = vmul.f32 %v3570, %v3836
        %v3862 = vmul.f32 %v3548, %v3836
        %v3863 = vmul.f32 %v3571, %v3836
        %v3864 = vmul.f32 %v3549, %v3836
        %v3865 = vmul.f32 %v3572, %v3836
        %v3866 = vmul.f32 %v3550, %v3836
        %v3867 = vmul.f32 %v3573, %v3836
        %v3868 = vmul.f32 %v3551, %v3836
        %v3869 = vadd.f32 %v3804, %v3837
        %v3870 = vadd.f32 %v3805, %v3838
        %v3871 = vadd.f32 %v3806, %v3839
        %v3872 = vadd.f32 %v3807, %v3840
        %v3873 = vadd.f32 %v3808, %v3841
        %v3874 = vadd.f32 %v3809, %v3842
        %v3875 = vadd.f32 %v3810, %v3843
        %v3876 = vadd.f32 %v3811, %v3844
        %v3877 = vadd.f32 %v3812, %v3845
        %v3878 = vadd.f32 %v3813, %v3846
        %v3879 = vadd.f32 %v3814, %v3847
        %v3880 = vadd.f32 %v3815, %v3848
        %v3881 = vadd.f32 %v3816, %v3849
        %v3882 = vadd.f32 %v3817, %v3850
        %v3883 = vadd.f32 %v3818, %v3851
        %v3884 = vadd.f32 %v3819, %v3852
        %v3885 = vadd.f32 %v3820, %v3853
        %v3886 = vadd.f32 %v3821, %v3854
        %v3887 = vadd.f32 %v3822, %v3855
        %v3888 = vadd.f32 %v3823, %v3856
        %v3889 = vadd.f32 %v3824, %v3857
        %v3890 = vadd.f32 %v3825, %v3858
        %v3891 = vadd.f32 %v3826, %v3859
        %v3892 = vadd.f32 %v3827, %v3860
        %v3893 = vadd.f32 %v3828, %v3861
        %v3894 = vadd.f32 %v3829, %v3862
        %v3895 = vadd.f32 %v3830, %v3863
        %v3896 = vadd.f32 %v3831, %v3864
        %v3897 = vadd.f32 %v3832, %v3865
        %v3898 = vadd.f32 %v3833, %v3866
        %v3899 = vadd.f32 %v3834, %v3867
        %v3900 = vadd.f32 %v3835, %v3868
        %v3901 = vperm.slane %v1307, 7
        %v3902 = vmul.f32 %v3559, %v3901
        %v3903 = vmul.f32 %v3537, %v3901
        %v3904 = vmul.f32 %v3560, %v3901
        %v3905 = vmul.f32 %v3538, %v3901
        %v3906 = vmul.f32 %v3561, %v3901
        %v3907 = vmul.f32 %v3539, %v3901
        %v3908 = vmul.f32 %v3562, %v3901
        %v3909 = vmul.f32 %v3540, %v3901
        %v3910 = vmul.f32 %v3563, %v3901
        %v3911 = vmul.f32 %v3541, %v3901
        %v3912 = vmul.f32 %v3564, %v3901
        %v3913 = vmul.f32 %v3542, %v3901
        %v3914 = vmul.f32 %v3565, %v3901
        %v3915 = vmul.f32 %v3543, %v3901
        %v3916 = vmul.f32 %v3566, %v3901
        %v3917 = vmul.f32 %v3544, %v3901
        %v3918 = vmul.f32 %v3567, %v3901
        %v3919 = vmul.f32 %v3545, %v3901
        %v3920 = vmul.f32 %v3568, %v3901
        %v3921 = vmul.f32 %v3546, %v3901
        %v3922 = vmul.f32 %v3569, %v3901
        %v3923 = vmul.f32 %v3547, %v3901
        %v3924 = vmul.f32 %v3570, %v3901
        %v3925 = vmul.f32 %v3548, %v3901
        %v3926 = vmul.f32 %v3571, %v3901
        %v3927 = vmul.f32 %v3549, %v3901
        %v3928 = vmul.f32 %v3572, %v3901
        %v3929 = vmul.f32 %v3550, %v3901
        %v3930 = vmul.f32 %v3573, %v3901
        %v3931 = vmul.f32 %v3551, %v3901
        %v3932 = vmul.f32 %v3574, %v3901
        %v3933 = vmul.f32 %v3552, %v3901
        %v3934 = vadd.f32 %v3869, %v3902
        %v3935 = vadd.f32 %v3870, %v3903
        %v3936 = vadd.f32 %v3871, %v3904
        %v3937 = vadd.f32 %v3872, %v3905
        %v3938 = vadd.f32 %v3873, %v3906
        %v3939 = vadd.f32 %v3874, %v3907
        %v3940 = vadd.f32 %v3875, %v3908
        %v3941 = vadd.f32 %v3876, %v3909
        %v3942 = vadd.f32 %v3877, %v3910
        %v3943 = vadd.f32 %v3878, %v3911
        %v3944 = vadd.f32 %v3879, %v3912
        %v3945 = vadd.f32 %v3880, %v3913
        %v3946 = vadd.f32 %v3881, %v3914
        %v3947 = vadd.f32 %v3882, %v3915
        %v3948 = vadd.f32 %v3883, %v3916
        %v3949 = vadd.f32 %v3884, %v3917
        %v3950 = vadd.f32 %v3885, %v3918
        %v3951 = vadd.f32 %v3886, %v3919
        %v3952 = vadd.f32 %v3887, %v3920
        %v3953 = vadd.f32 %v3888, %v3921
        %v3954 = vadd.f32 %v3889, %v3922
        %v3955 = vadd.f32 %v3890, %v3923
        %v3956 = vadd.f32 %v3891, %v3924
        %v3957 = vadd.f32 %v3892, %v3925
        %v3958 = vadd.f32 %v3893, %v3926
        %v3959 = vadd.f32 %v3894, %v3927
        %v3960 = vadd.f32 %v3895, %v3928
        %v3961 = vadd.f32 %v3896, %v3929
        %v3962 = vadd.f32 %v3897, %v3930
        %v3963 = vadd.f32 %v3898, %v3931
        %v3964 = vadd.f32 %v3899, %v3932
        %v3965 = vadd.f32 %v3900, %v3933
        %v3966 = vperm.slane %v1308, 6
        %v3967 = vmul.f32 %v3560, %v3966
        %v3968 = vmul.f32 %v3538, %v3966
        %v3969 = vmul.f32 %v3561, %v3966
        %v3970 = vmul.f32 %v3539, %v3966
        %v3971 = vmul.f32 %v3562, %v3966
        %v3972 = vmul.f32 %v3540, %v3966
        %v3973 = vmul.f32 %v3563, %v3966
        %v3974 = vmul.f32 %v3541, %v3966
        %v3975 = vmul.f32 %v3564, %v3966
        %v3976 = vmul.f32 %v3542, %v3966
        %v3977 = vmul.f32 %v3565, %v3966
        %v3978 = vmul.f32 %v3543, %v3966
        %v3979 = vmul.f32 %v3566, %v3966
        %v3980 = vmul.f32 %v3544, %v3966
        %v3981 = vmul.f32 %v3567, %v3966
        %v3982 = vmul.f32 %v3545, %v3966
        %v3983 = vmul.f32 %v3568, %v3966
        %v3984 = vmul.f32 %v3546, %v3966
        %v3985 = vmul.f32 %v3569, %v3966
        %v3986 = vmul.f32 %v3547, %v3966
        %v3987 = vmul.f32 %v3570, %v3966
        %v3988 = vmul.f32 %v3548, %v3966
        %v3989 = vmul.f32 %v3571, %v3966
        %v3990 = vmul.f32 %v3549, %v3966
        %v3991 = vmul.f32 %v3572, %v3966
        %v3992 = vmul.f32 %v3550, %v3966
        %v3993 = vmul.f32 %v3573, %v3966
        %v3994 = vmul.f32 %v3551, %v3966
        %v3995 = vmul.f32 %v3574, %v3966
        %v3996 = vmul.f32 %v3552, %v3966
        %v3997 = vmul.f32 %v3575, %v3966
        %v3998 = vmul.f32 %v3553, %v3966
        %v3999 = vadd.f32 %v3934, %v3967
        %v4000 = vadd.f32 %v3935, %v3968
        %v4001 = vadd.f32 %v3936, %v3969
        %v4002 = vadd.f32 %v3937, %v3970
        %v4003 = vadd.f32 %v3938, %v3971
        %v4004 = vadd.f32 %v3939, %v3972
        %v4005 = vadd.f32 %v3940, %v3973
        %v4006 = vadd.f32 %v3941, %v3974
        %v4007 = vadd.f32 %v3942, %v3975
        %v4008 = vadd.f32 %v3943, %v3976
        %v4009 = vadd.f32 %v3944, %v3977
        %v4010 = vadd.f32 %v3945, %v3978
        %v4011 = vadd.f32 %v3946, %v3979
        %v4012 = vadd.f32 %v3947, %v3980
        %v4013 = vadd.f32 %v3948, %v3981
        %v4014 = vadd.f32 %v3949, %v3982
        %v4015 = vadd.f32 %v3950, %v3983
        %v4016 = vadd.f32 %v3951, %v3984
        %v4017 = vadd.f32 %v3952, %v3985
        %v4018 = vadd.f32 %v3953, %v3986
        %v4019 = vadd.f32 %v3954, %v3987
        %v4020 = vadd.f32 %v3955, %v3988
        %v4021 = vadd.f32 %v3956, %v3989
        %v4022 = vadd.f32 %v3957, %v3990
        %v4023 = vadd.f32 %v3958, %v3991
        %v4024 = vadd.f32 %v3959, %v3992
        %v4025 = vadd.f32 %v3960, %v3993
        %v4026 = vadd.f32 %v3961, %v3994
        %v4027 = vadd.f32 %v3962, %v3995
        %v4028 = vadd.f32 %v3963, %v3996
        %v4029 = vadd.f32 %v3964, %v3997
        %v4030 = vadd.f32 %v3965, %v3998
        %v4031 = vrot.slane %v1237, 2
        %v4032 = vrot.slane %v1240, 2
        %v4033 = vrot.slane %v1243, 2
        %v4034 = vrot.slane %v1246, 2
        %v4035 = vrot.slane %v1249, 2
        %v4036 = vrot.slane %v1252, 2
        %v4037 = vrot.slane %v1255, 2
        %v4038 = vrot.slane %v1258, 2
        %v4039 = vrot.slane %v1261, 2
        %v4040 = vrot.slane %v1264, 2
        %v4041 = vrot.slane %v1267, 2
        %v4042 = vrot.slane %v1270, 2
        %v4043 = vrot.slane %v1273, 2
        %v4044 = vrot.slane %v1276, 2
        %v4045 = vrot.slane %v1279, 2
        %v4046 = vrot.slane %v1282, 2
        %v4047 = vrot.slane %v1285, 2
        %v4048 = vrot.slane %v1288, 2
        %v4049 = vrot.slane %v1291, 2
        %v4050 = vrot.slane %v1294, 2
        %v4051 = vrot.slane %v1297, 2
        %v4052 = vrot.slane %v1300, 2
        %v4053 = vrot.slane %v1238, 2
        %v4054 = vrot.slane %v1241, 2
        %v4055 = vrot.slane %v1244, 2
        %v4056 = vrot.slane %v1247, 2
        %v4057 = vrot.slane %v1250, 2
        %v4058 = vrot.slane %v1253, 2
        %v4059 = vrot.slane %v1256, 2
        %v4060 = vrot.slane %v1259, 2
        %v4061 = vrot.slane %v1262, 2
        %v4062 = vrot.slane %v1265, 2
        %v4063 = vrot.slane %v1268, 2
        %v4064 = vrot.slane %v1271, 2
        %v4065 = vrot.slane %v1274, 2
        %v4066 = vrot.slane %v1277, 2
        %v4067 = vrot.slane %v1280, 2
        %v4068 = vrot.slane %v1283, 2
        %v4069 = vrot.slane %v1286, 2
        %v4070 = vrot.slane %v1289, 2
        %v4071 = vrot.slane %v1292, 2
        %v4072 = vrot.slane %v1295, 2
        %v4073 = vrot.slane %v1298, 2
        %v4074 = vrot.slane %v1301, 2
        %v4075 = vrot.slane %v1239, 2
        %v4076 = vrot.slane %v1242, 2
        %v4077 = vrot.slane %v1245, 2
        %v4078 = vrot.slane %v1248, 2
        %v4079 = vrot.slane %v1251, 2
        %v4080 = vrot.slane %v1254, 2
        %v4081 = vrot.slane %v1257, 2
        %v4082 = vrot.slane %v1260, 2
        %v4083 = vrot.slane %v1263, 2
        %v4084 = vrot.slane %v1266, 2
        %v4085 = vrot.slane %v1269, 2
        %v4086 = vrot.slane %v1272, 2
        %v4087 = vrot.slane %v1275, 2
        %v4088 = vrot.slane %v1278, 2
        %v4089 = vrot.slane %v1281, 2
        %v4090 = vrot.slane %v1284, 2
        %v4091 = vrot.slane %v1287, 2
        %v4092 = vrot.slane %v1290, 2
        %v4093 = vrot.slane %v1293, 2
        %v4094 = vrot.slane %v1296, 2
        %v4095 = vrot.slane %v1299, 2
        %v4096 = vrot.slane %v1302, 2
        %vm4097 = vcmp.lt.s32.totalorder %v1377, 6
        %v4098 = vsel %vm4097, %v4053, %v4075
        %v4099 = vsel %vm4097, %v4054, %v4076
        %v4100 = vsel %vm4097, %v4055, %v4077
        %v4101 = vsel %vm4097, %v4056, %v4078
        %v4102 = vsel %vm4097, %v4057, %v4079
        %v4103 = vsel %vm4097, %v4058, %v4080
        %v4104 = vsel %vm4097, %v4059, %v4081
        %v4105 = vsel %vm4097, %v4060, %v4082
        %v4106 = vsel %vm4097, %v4061, %v4083
        %v4107 = vsel %vm4097, %v4062, %v4084
        %v4108 = vsel %vm4097, %v4063, %v4085
        %v4109 = vsel %vm4097, %v4064, %v4086
        %v4110 = vsel %vm4097, %v4065, %v4087
        %v4111 = vsel %vm4097, %v4066, %v4088
        %v4112 = vsel %vm4097, %v4067, %v4089
        %v4113 = vsel %vm4097, %v4068, %v4090
        %v4114 = vsel %vm4097, %v4069, %v4091
        %v4115 = vsel %vm4097, %v4070, %v4092
        %v4116 = vsel %vm4097, %v4071, %v4093
        %v4117 = vsel %vm4097, %v4072, %v4094
        %v4118 = vsel %vm4097, %v4073, %v4095
        %v4119 = vsel %vm4097, %v4074, %v4096
        %v4120 = vsel %vm4097, %v4031, %v4053
        %v4121 = vsel %vm4097, %v4032, %v4054
        %v4122 = vsel %vm4097, %v4033, %v4055
        %v4123 = vsel %vm4097, %v4034, %v4056
        %v4124 = vsel %vm4097, %v4035, %v4057
        %v4125 = vsel %vm4097, %v4036, %v4058
        %v4126 = vsel %vm4097, %v4037, %v4059
        %v4127 = vsel %vm4097, %v4038, %v4060
        %v4128 = vsel %vm4097, %v4039, %v4061
        %v4129 = vsel %vm4097, %v4040, %v4062
        %v4130 = vsel %vm4097, %v4041, %v4063
        %v4131 = vsel %vm4097, %v4042, %v4064
        %v4132 = vsel %vm4097, %v4043, %v4065
        %v4133 = vsel %vm4097, %v4044, %v4066
        %v4134 = vsel %vm4097, %v4045, %v4067
        %v4135 = vsel %vm4097, %v4046, %v4068
        %v4136 = vsel %vm4097, %v4047, %v4069
        %v4137 = vsel %vm4097, %v4048, %v4070
        %v4138 = vsel %vm4097, %v4049, %v4071
        %v4139 = vsel %vm4097, %v4050, %v4072
        %v4140 = vsel %vm4097, %v4051, %v4073
        %v4141 = vsel %vm4097, %v4052, %v4074
        %v4142 = vperm.slane %v1303, 5
        %v4143 = vmul.f32 %v4120, %v4142
        %v4144 = vmul.f32 %v4098, %v4142
        %v4145 = vmul.f32 %v4121, %v4142
        %v4146 = vmul.f32 %v4099, %v4142
        %v4147 = vmul.f32 %v4122, %v4142
        %v4148 = vmul.f32 %v4100, %v4142
        %v4149 = vmul.f32 %v4123, %v4142
        %v4150 = vmul.f32 %v4101, %v4142
        %v4151 = vmul.f32 %v4124, %v4142
        %v4152 = vmul.f32 %v4102, %v4142
        %v4153 = vmul.f32 %v4125, %v4142
        %v4154 = vmul.f32 %v4103, %v4142
        %v4155 = vmul.f32 %v4126, %v4142
        %v4156 = vmul.f32 %v4104, %v4142
        %v4157 = vmul.f32 %v4127, %v4142
        %v4158 = vmul.f32 %v4105, %v4142
        %v4159 = vmul.f32 %v4128, %v4142
        %v4160 = vmul.f32 %v4106, %v4142
        %v4161 = vmul.f32 %v4129, %v4142
        %v4162 = vmul.f32 %v4107, %v4142
        %v4163 = vmul.f32 %v4130, %v4142
        %v4164 = vmul.f32 %v4108, %v4142
        %v4165 = vmul.f32 %v4131, %v4142
        %v4166 = vmul.f32 %v4109, %v4142
        %v4167 = vmul.f32 %v4132, %v4142
        %v4168 = vmul.f32 %v4110, %v4142
        %v4169 = vmul.f32 %v4133, %v4142
        %v4170 = vmul.f32 %v4111, %v4142
        %v4171 = vmul.f32 %v4134, %v4142
        %v4172 = vmul.f32 %v4112, %v4142
        %v4173 = vmul.f32 %v4135, %v4142
        %v4174 = vmul.f32 %v4113, %v4142
        %v4175 = vadd.f32 %v3999, %v4143
        %v4176 = vadd.f32 %v4000, %v4144
        %v4177 = vadd.f32 %v4001, %v4145
        %v4178 = vadd.f32 %v4002, %v4146
        %v4179 = vadd.f32 %v4003, %v4147
        %v4180 = vadd.f32 %v4004, %v4148
        %v4181 = vadd.f32 %v4005, %v4149
        %v4182 = vadd.f32 %v4006, %v4150
        %v4183 = vadd.f32 %v4007, %v4151
        %v4184 = vadd.f32 %v4008, %v4152
        %v4185 = vadd.f32 %v4009, %v4153
        %v4186 = vadd.f32 %v4010, %v4154
        %v4187 = vadd.f32 %v4011, %v4155
        %v4188 = vadd.f32 %v4012, %v4156
        %v4189 = vadd.f32 %v4013, %v4157
        %v4190 = vadd.f32 %v4014, %v4158
        %v4191 = vadd.f32 %v4015, %v4159
        %v4192 = vadd.f32 %v4016, %v4160
        %v4193 = vadd.f32 %v4017, %v4161
        %v4194 = vadd.f32 %v4018, %v4162
        %v4195 = vadd.f32 %v4019, %v4163
        %v4196 = vadd.f32 %v4020, %v4164
        %v4197 = vadd.f32 %v4021, %v4165
        %v4198 = vadd.f32 %v4022, %v4166
        %v4199 = vadd.f32 %v4023, %v4167
        %v4200 = vadd.f32 %v4024, %v4168
        %v4201 = vadd.f32 %v4025, %v4169
        %v4202 = vadd.f32 %v4026, %v4170
        %v4203 = vadd.f32 %v4027, %v4171
        %v4204 = vadd.f32 %v4028, %v4172
        %v4205 = vadd.f32 %v4029, %v4173
        %v4206 = vadd.f32 %v4030, %v4174
        %v4207 = vperm.slane %v1304, 4
        %v4208 = vmul.f32 %v4121, %v4207
        %v4209 = vmul.f32 %v4099, %v4207
        %v4210 = vmul.f32 %v4122, %v4207
        %v4211 = vmul.f32 %v4100, %v4207
        %v4212 = vmul.f32 %v4123, %v4207
        %v4213 = vmul.f32 %v4101, %v4207
        %v4214 = vmul.f32 %v4124, %v4207
        %v4215 = vmul.f32 %v4102, %v4207
        %v4216 = vmul.f32 %v4125, %v4207
        %v4217 = vmul.f32 %v4103, %v4207
        %v4218 = vmul.f32 %v4126, %v4207
        %v4219 = vmul.f32 %v4104, %v4207
        %v4220 = vmul.f32 %v4127, %v4207
        %v4221 = vmul.f32 %v4105, %v4207
        %v4222 = vmul.f32 %v4128, %v4207
        %v4223 = vmul.f32 %v4106, %v4207
        %v4224 = vmul.f32 %v4129, %v4207
        %v4225 = vmul.f32 %v4107, %v4207
        %v4226 = vmul.f32 %v4130, %v4207
        %v4227 = vmul.f32 %v4108, %v4207
        %v4228 = vmul.f32 %v4131, %v4207
        %v4229 = vmul.f32 %v4109, %v4207
        %v4230 = vmul.f32 %v4132, %v4207
        %v4231 = vmul.f32 %v4110, %v4207
        %v4232 = vmul.f32 %v4133, %v4207
        %v4233 = vmul.f32 %v4111, %v4207
        %v4234 = vmul.f32 %v4134, %v4207
        %v4235 = vmul.f32 %v4112, %v4207
        %v4236 = vmul.f32 %v4135, %v4207
        %v4237 = vmul.f32 %v4113, %v4207
        %v4238 = vmul.f32 %v4136, %v4207
        %v4239 = vmul.f32 %v4114, %v4207
        %v4240 = vadd.f32 %v4175, %v4208
        %v4241 = vadd.f32 %v4176, %v4209
        %v4242 = vadd.f32 %v4177, %v4210
        %v4243 = vadd.f32 %v4178, %v4211
        %v4244 = vadd.f32 %v4179, %v4212
        %v4245 = vadd.f32 %v4180, %v4213
        %v4246 = vadd.f32 %v4181, %v4214
        %v4247 = vadd.f32 %v4182, %v4215
        %v4248 = vadd.f32 %v4183, %v4216
        %v4249 = vadd.f32 %v4184, %v4217
        %v4250 = vadd.f32 %v4185, %v4218
        %v4251 = vadd.f32 %v4186, %v4219
        %v4252 = vadd.f32 %v4187, %v4220
        %v4253 = vadd.f32 %v4188, %v4221
        %v4254 = vadd.f32 %v4189, %v4222
        %v4255 = vadd.f32 %v4190, %v4223
        %v4256 = vadd.f32 %v4191, %v4224
        %v4257 = vadd.f32 %v4192, %v4225
        %v4258 = vadd.f32 %v4193, %v4226
        %v4259 = vadd.f32 %v4194, %v4227
        %v4260 = vadd.f32 %v4195, %v4228
        %v4261 = vadd.f32 %v4196, %v4229
        %v4262 = vadd.f32 %v4197, %v4230
        %v4263 = vadd.f32 %v4198, %v4231
        %v4264 = vadd.f32 %v4199, %v4232
        %v4265 = vadd.f32 %v4200, %v4233
        %v4266 = vadd.f32 %v4201, %v4234
        %v4267 = vadd.f32 %v4202, %v4235
        %v4268 = vadd.f32 %v4203, %v4236
        %v4269 = vadd.f32 %v4204, %v4237
        %v4270 = vadd.f32 %v4205, %v4238
        %v4271 = vadd.f32 %v4206, %v4239
        %v4272 = vperm.slane %v1305, 3
        %v4273 = vmul.f32 %v4122, %v4272
        %v4274 = vmul.f32 %v4100, %v4272
        %v4275 = vmul.f32 %v4123, %v4272
        %v4276 = vmul.f32 %v4101, %v4272
        %v4277 = vmul.f32 %v4124, %v4272
        %v4278 = vmul.f32 %v4102, %v4272
        %v4279 = vmul.f32 %v4125, %v4272
        %v4280 = vmul.f32 %v4103, %v4272
        %v4281 = vmul.f32 %v4126, %v4272
        %v4282 = vmul.f32 %v4104, %v4272
        %v4283 = vmul.f32 %v4127, %v4272
        %v4284 = vmul.f32 %v4105, %v4272
        %v4285 = vmul.f32 %v4128, %v4272
        %v4286 = vmul.f32 %v4106, %v4272
        %v4287 = vmul.f32 %v4129, %v4272
        %v4288 = vmul.f32 %v4107, %v4272
        %v4289 = vmul.f32 %v4130, %v4272
        %v4290 = vmul.f32 %v4108, %v4272
        %v4291 = vmul.f32 %v4131, %v4272
        %v4292 = vmul.f32 %v4109, %v4272
        %v4293 = vmul.f32 %v4132, %v4272
        %v4294 = vmul.f32 %v4110, %v4272
        %v4295 = vmul.f32 %v4133, %v4272
        %v4296 = vmul.f32 %v4111, %v4272
        %v4297 = vmul.f32 %v4134, %v4272
        %v4298 = vmul.f32 %v4112, %v4272
        %v4299 = vmul.f32 %v4135, %v4272
        %v4300 = vmul.f32 %v4113, %v4272
        %v4301 = vmul.f32 %v4136, %v4272
        %v4302 = vmul.f32 %v4114, %v4272
        %v4303 = vmul.f32 %v4137, %v4272
        %v4304 = vmul.f32 %v4115, %v4272
        %v4305 = vadd.f32 %v4240, %v4273
        %v4306 = vadd.f32 %v4241, %v4274
        %v4307 = vadd.f32 %v4242, %v4275
        %v4308 = vadd.f32 %v4243, %v4276
        %v4309 = vadd.f32 %v4244, %v4277
        %v4310 = vadd.f32 %v4245, %v4278
        %v4311 = vadd.f32 %v4246, %v4279
        %v4312 = vadd.f32 %v4247, %v4280
        %v4313 = vadd.f32 %v4248, %v4281
        %v4314 = vadd.f32 %v4249, %v4282
        %v4315 = vadd.f32 %v4250, %v4283
        %v4316 = vadd.f32 %v4251, %v4284
        %v4317 = vadd.f32 %v4252, %v4285
        %v4318 = vadd.f32 %v4253, %v4286
        %v4319 = vadd.f32 %v4254, %v4287
        %v4320 = vadd.f32 %v4255, %v4288
        %v4321 = vadd.f32 %v4256, %v4289
        %v4322 = vadd.f32 %v4257, %v4290
        %v4323 = vadd.f32 %v4258, %v4291
        %v4324 = vadd.f32 %v4259, %v4292
        %v4325 = vadd.f32 %v4260, %v4293
        %v4326 = vadd.f32 %v4261, %v4294
        %v4327 = vadd.f32 %v4262, %v4295
        %v4328 = vadd.f32 %v4263, %v4296
        %v4329 = vadd.f32 %v4264, %v4297
        %v4330 = vadd.f32 %v4265, %v4298
        %v4331 = vadd.f32 %v4266, %v4299
        %v4332 = vadd.f32 %v4267, %v4300
        %v4333 = vadd.f32 %v4268, %v4301
        %v4334 = vadd.f32 %v4269, %v4302
        %v4335 = vadd.f32 %v4270, %v4303
        %v4336 = vadd.f32 %v4271, %v4304
        %v4337 = vperm.slane %v1306, 2
        %v4338 = vmul.f32 %v4123, %v4337
        %v4339 = vmul.f32 %v4101, %v4337
        %v4340 = vmul.f32 %v4124, %v4337
        %v4341 = vmul.f32 %v4102, %v4337
        %v4342 = vmul.f32 %v4125, %v4337
        %v4343 = vmul.f32 %v4103, %v4337
        %v4344 = vmul.f32 %v4126, %v4337
        %v4345 = vmul.f32 %v4104, %v4337
        %v4346 = vmul.f32 %v4127, %v4337
        %v4347 = vmul.f32 %v4105, %v4337
        %v4348 = vmul.f32 %v4128, %v4337
        %v4349 = vmul.f32 %v4106, %v4337
        %v4350 = vmul.f32 %v4129, %v4337
        %v4351 = vmul.f32 %v4107, %v4337
        %v4352 = vmul.f32 %v4130, %v4337
        %v4353 = vmul.f32 %v4108, %v4337
        %v4354 = vmul.f32 %v4131, %v4337
        %v4355 = vmul.f32 %v4109, %v4337
        %v4356 = vmul.f32 %v4132, %v4337
        %v4357 = vmul.f32 %v4110, %v4337
        %v4358 = vmul.f32 %v4133, %v4337
        %v4359 = vmul.f32 %v4111, %v4337
        %v4360 = vmul.f32 %v4134, %v4337
        %v4361 = vmul.f32 %v4112, %v4337
        %v4362 = vmul.f32 %v4135, %v4337
        %v4363 = vmul.f32 %v4113, %v4337
        %v4364 = vmul.f32 %v4136, %v4337
        %v4365 = vmul.f32 %v4114, %v4337
        %v4366 = vmul.f32 %v4137, %v4337
        %v4367 = vmul.f32 %v4115, %v4337
        %v4368 = vmul.f32 %v4138, %v4337
        %v4369 = vmul.f32 %v4116, %v4337
        %v4370 = vadd.f32 %v4305, %v4338
        %v4371 = vadd.f32 %v4306, %v4339
        %v4372 = vadd.f32 %v4307, %v4340
        %v4373 = vadd.f32 %v4308, %v4341
        %v4374 = vadd.f32 %v4309, %v4342
        %v4375 = vadd.f32 %v4310, %v4343
        %v4376 = vadd.f32 %v4311, %v4344
        %v4377 = vadd.f32 %v4312, %v4345
        %v4378 = vadd.f32 %v4313, %v4346
        %v4379 = vadd.f32 %v4314, %v4347
        %v4380 = vadd.f32 %v4315, %v4348
        %v4381 = vadd.f32 %v4316, %v4349
        %v4382 = vadd.f32 %v4317, %v4350
        %v4383 = vadd.f32 %v4318, %v4351
        %v4384 = vadd.f32 %v4319, %v4352
        %v4385 = vadd.f32 %v4320, %v4353
        %v4386 = vadd.f32 %v4321, %v4354
        %v4387 = vadd.f32 %v4322, %v4355
        %v4388 = vadd.f32 %v4323, %v4356
        %v4389 = vadd.f32 %v4324, %v4357
        %v4390 = vadd.f32 %v4325, %v4358
        %v4391 = vadd.f32 %v4326, %v4359
        %v4392 = vadd.f32 %v4327, %v4360
        %v4393 = vadd.f32 %v4328, %v4361
        %v4394 = vadd.f32 %v4329, %v4362
        %v4395 = vadd.f32 %v4330, %v4363
        %v4396 = vadd.f32 %v4331, %v4364
        %v4397 = vadd.f32 %v4332, %v4365
        %v4398 = vadd.f32 %v4333, %v4366
        %v4399 = vadd.f32 %v4334, %v4367
        %v4400 = vadd.f32 %v4335, %v4368
        %v4401 = vadd.f32 %v4336, %v4369
        %v4402 = vperm.slane %v1307, 1
        %v4403 = vmul.f32 %v4124, %v4402
        %v4404 = vmul.f32 %v4102, %v4402
        %v4405 = vmul.f32 %v4125, %v4402
        %v4406 = vmul.f32 %v4103, %v4402
        %v4407 = vmul.f32 %v4126, %v4402
        %v4408 = vmul.f32 %v4104, %v4402
        %v4409 = vmul.f32 %v4127, %v4402
        %v4410 = vmul.f32 %v4105, %v4402
        %v4411 = vmul.f32 %v4128, %v4402
        %v4412 = vmul.f32 %v4106, %v4402
        %v4413 = vmul.f32 %v4129, %v4402
        %v4414 = vmul.f32 %v4107, %v4402
        %v4415 = vmul.f32 %v4130, %v4402
        %v4416 = vmul.f32 %v4108, %v4402
        %v4417 = vmul.f32 %v4131, %v4402
        %v4418 = vmul.f32 %v4109, %v4402
        %v4419 = vmul.f32 %v4132, %v4402
        %v4420 = vmul.f32 %v4110, %v4402
        %v4421 = vmul.f32 %v4133, %v4402
        %v4422 = vmul.f32 %v4111, %v4402
        %v4423 = vmul.f32 %v4134, %v4402
        %v4424 = vmul.f32 %v4112, %v4402
        %v4425 = vmul.f32 %v4135, %v4402
        %v4426 = vmul.f32 %v4113, %v4402
        %v4427 = vmul.f32 %v4136, %v4402
        %v4428 = vmul.f32 %v4114, %v4402
        %v4429 = vmul.f32 %v4137, %v4402
        %v4430 = vmul.f32 %v4115, %v4402
        %v4431 = vmul.f32 %v4138, %v4402
        %v4432 = vmul.f32 %v4116, %v4402
        %v4433 = vmul.f32 %v4139, %v4402
        %v4434 = vmul.f32 %v4117, %v4402
        %v4435 = vadd.f32 %v4370, %v4403
        %v4436 = vadd.f32 %v4371, %v4404
        %v4437 = vadd.f32 %v4372, %v4405
        %v4438 = vadd.f32 %v4373, %v4406
        %v4439 = vadd.f32 %v4374, %v4407
        %v4440 = vadd.f32 %v4375, %v4408
        %v4441 = vadd.f32 %v4376, %v4409
        %v4442 = vadd.f32 %v4377, %v4410
        %v4443 = vadd.f32 %v4378, %v4411
        %v4444 = vadd.f32 %v4379, %v4412
        %v4445 = vadd.f32 %v4380, %v4413
        %v4446 = vadd.f32 %v4381, %v4414
        %v4447 = vadd.f32 %v4382, %v4415
        %v4448 = vadd.f32 %v4383, %v4416
        %v4449 = vadd.f32 %v4384, %v4417
        %v4450 = vadd.f32 %v4385, %v4418
        %v4451 = vadd.f32 %v4386, %v4419
        %v4452 = vadd.f32 %v4387, %v4420
        %v4453 = vadd.f32 %v4388, %v4421
        %v4454 = vadd.f32 %v4389, %v4422
        %v4455 = vadd.f32 %v4390, %v4423
        %v4456 = vadd.f32 %v4391, %v4424
        %v4457 = vadd.f32 %v4392, %v4425
        %v4458 = vadd.f32 %v4393, %v4426
        %v4459 = vadd.f32 %v4394, %v4427
        %v4460 = vadd.f32 %v4395, %v4428
        %v4461 = vadd.f32 %v4396, %v4429
        %v4462 = vadd.f32 %v4397, %v4430
        %v4463 = vadd.f32 %v4398, %v4431
        %v4464 = vadd.f32 %v4399, %v4432
        %v4465 = vadd.f32 %v4400, %v4433
        %v4466 = vadd.f32 %v4401, %v4434
        %v4467 = vperm.slane %v1308, 0
        %v4468 = vmul.f32 %v4125, %v4467
        %v4469 = vmul.f32 %v4103, %v4467
        %v4470 = vmul.f32 %v4126, %v4467
        %v4471 = vmul.f32 %v4104, %v4467
        %v4472 = vmul.f32 %v4127, %v4467
        %v4473 = vmul.f32 %v4105, %v4467
        %v4474 = vmul.f32 %v4128, %v4467
        %v4475 = vmul.f32 %v4106, %v4467
        %v4476 = vmul.f32 %v4129, %v4467
        %v4477 = vmul.f32 %v4107, %v4467
        %v4478 = vmul.f32 %v4130, %v4467
        %v4479 = vmul.f32 %v4108, %v4467
        %v4480 = vmul.f32 %v4131, %v4467
        %v4481 = vmul.f32 %v4109, %v4467
        %v4482 = vmul.f32 %v4132, %v4467
        %v4483 = vmul.f32 %v4110, %v4467
        %v4484 = vmul.f32 %v4133, %v4467
        %v4485 = vmul.f32 %v4111, %v4467
        %v4486 = vmul.f32 %v4134, %v4467
        %v4487 = vmul.f32 %v4112, %v4467
        %v4488 = vmul.f32 %v4135, %v4467
        %v4489 = vmul.f32 %v4113, %v4467
        %v4490 = vmul.f32 %v4136, %v4467
        %v4491 = vmul.f32 %v4114, %v4467
        %v4492 = vmul.f32 %v4137, %v4467
        %v4493 = vmul.f32 %v4115, %v4467
        %v4494 = vmul.f32 %v4138, %v4467
        %v4495 = vmul.f32 %v4116, %v4467
        %v4496 = vmul.f32 %v4139, %v4467
        %v4497 = vmul.f32 %v4117, %v4467
        %v4498 = vmul.f32 %v4140, %v4467
        %v4499 = vmul.f32 %v4118, %v4467
        %v4500 = vadd.f32 %v4435, %v4468
        %v4501 = vadd.f32 %v4436, %v4469
        %v4502 = vadd.f32 %v4437, %v4470
        %v4503 = vadd.f32 %v4438, %v4471
        %v4504 = vadd.f32 %v4439, %v4472
        %v4505 = vadd.f32 %v4440, %v4473
        %v4506 = vadd.f32 %v4441, %v4474
        %v4507 = vadd.f32 %v4442, %v4475
        %v4508 = vadd.f32 %v4443, %v4476
        %v4509 = vadd.f32 %v4444, %v4477
        %v4510 = vadd.f32 %v4445, %v4478
        %v4511 = vadd.f32 %v4446, %v4479
        %v4512 = vadd.f32 %v4447, %v4480
        %v4513 = vadd.f32 %v4448, %v4481
        %v4514 = vadd.f32 %v4449, %v4482
        %v4515 = vadd.f32 %v4450, %v4483
        %v4516 = vadd.f32 %v4451, %v4484
        %v4517 = vadd.f32 %v4452, %v4485
        %v4518 = vadd.f32 %v4453, %v4486
        %v4519 = vadd.f32 %v4454, %v4487
        %v4520 = vadd.f32 %v4455, %v4488
        %v4521 = vadd.f32 %v4456, %v4489
        %v4522 = vadd.f32 %v4457, %v4490
        %v4523 = vadd.f32 %v4458, %v4491
        %v4524 = vadd.f32 %v4459, %v4492
        %v4525 = vadd.f32 %v4460, %v4493
        %v4526 = vadd.f32 %v4461, %v4494
        %v4527 = vadd.f32 %v4462, %v4495
        %v4528 = vadd.f32 %v4463, %v4496
        %v4529 = vadd.f32 %v4464, %v4497
        %v4530 = vadd.f32 %v4465, %v4498
        %v4531 = vadd.f32 %v4466, %v4499
        %v4532 = vperm.slane %v1308, 7
        %v4533 = vmul.f32 %v4126, %v4532
        %v4534 = vmul.f32 %v4104, %v4532
        %v4535 = vmul.f32 %v4127, %v4532
        %v4536 = vmul.f32 %v4105, %v4532
        %v4537 = vmul.f32 %v4128, %v4532
        %v4538 = vmul.f32 %v4106, %v4532
        %v4539 = vmul.f32 %v4129, %v4532
        %v4540 = vmul.f32 %v4107, %v4532
        %v4541 = vmul.f32 %v4130, %v4532
        %v4542 = vmul.f32 %v4108, %v4532
        %v4543 = vmul.f32 %v4131, %v4532
        %v4544 = vmul.f32 %v4109, %v4532
        %v4545 = vmul.f32 %v4132, %v4532
        %v4546 = vmul.f32 %v4110, %v4532
        %v4547 = vmul.f32 %v4133, %v4532
        %v4548 = vmul.f32 %v4111, %v4532
        %v4549 = vmul.f32 %v4134, %v4532
        %v4550 = vmul.f32 %v4112, %v4532
        %v4551 = vmul.f32 %v4135, %v4532
        %v4552 = vmul.f32 %v4113, %v4532
        %v4553 = vmul.f32 %v4136, %v4532
        %v4554 = vmul.f32 %v4114, %v4532
        %v4555 = vmul.f32 %v4137, %v4532
        %v4556 = vmul.f32 %v4115, %v4532
        %v4557 = vmul.f32 %v4138, %v4532
        %v4558 = vmul.f32 %v4116, %v4532
        %v4559 = vmul.f32 %v4139, %v4532
        %v4560 = vmul.f32 %v4117, %v4532
        %v4561 = vmul.f32 %v4140, %v4532
        %v4562 = vmul.f32 %v4118, %v4532
        %v4563 = vmul.f32 %v4141, %v4532
        %v4564 = vmul.f32 %v4119, %v4532
        %v4565 = vadd.f32 %v4500, %v4533
        %v4566 = vadd.f32 %v4501, %v4534
        %v4567 = vadd.f32 %v4502, %v4535
        %v4568 = vadd.f32 %v4503, %v4536
        %v4569 = vadd.f32 %v4504, %v4537
        %v4570 = vadd.f32 %v4505, %v4538
        %v4571 = vadd.f32 %v4506, %v4539
        %v4572 = vadd.f32 %v4507, %v4540
        %v4573 = vadd.f32 %v4508, %v4541
        %v4574 = vadd.f32 %v4509, %v4542
        %v4575 = vadd.f32 %v4510, %v4543
        %v4576 = vadd.f32 %v4511, %v4544
        %v4577 = vadd.f32 %v4512, %v4545
        %v4578 = vadd.f32 %v4513, %v4546
        %v4579 = vadd.f32 %v4514, %v4547
        %v4580 = vadd.f32 %v4515, %v4548
        %v4581 = vadd.f32 %v4516, %v4549
        %v4582 = vadd.f32 %v4517, %v4550
        %v4583 = vadd.f32 %v4518, %v4551
        %v4584 = vadd.f32 %v4519, %v4552
        %v4585 = vadd.f32 %v4520, %v4553
        %v4586 = vadd.f32 %v4521, %v4554
        %v4587 = vadd.f32 %v4522, %v4555
        %v4588 = vadd.f32 %v4523, %v4556
        %v4589 = vadd.f32 %v4524, %v4557
        %v4590 = vadd.f32 %v4525, %v4558
        %v4591 = vadd.f32 %v4526, %v4559
        %v4592 = vadd.f32 %v4527, %v4560
        %v4593 = vadd.f32 %v4528, %v4561
        %v4594 = vadd.f32 %v4529, %v4562
        %v4595 = vadd.f32 %v4530, %v4563
        %v4596 = vadd.f32 %v4531, %v4564
        %v4597 = vrot.slane %v1237, 3
        %v4598 = vrot.slane %v1240, 3
        %v4599 = vrot.slane %v1243, 3
        %v4600 = vrot.slane %v1246, 3
        %v4601 = vrot.slane %v1249, 3
        %v4602 = vrot.slane %v1252, 3
        %v4603 = vrot.slane %v1255, 3
        %v4604 = vrot.slane %v1258, 3
        %v4605 = vrot.slane %v1261, 3
        %v4606 = vrot.slane %v1264, 3
        %v4607 = vrot.slane %v1267, 3
        %v4608 = vrot.slane %v1270, 3
        %v4609 = vrot.slane %v1273, 3
        %v4610 = vrot.slane %v1276, 3
        %v4611 = vrot.slane %v1279, 3
        %v4612 = vrot.slane %v1282, 3
        %v4613 = vrot.slane %v1285, 3
        %v4614 = vrot.slane %v1288, 3
        %v4615 = vrot.slane %v1291, 3
        %v4616 = vrot.slane %v1294, 3
        %v4617 = vrot.slane %v1297, 3
        %v4618 = vrot.slane %v1300, 3
        %v4619 = vrot.slane %v1238, 3
        %v4620 = vrot.slane %v1241, 3
        %v4621 = vrot.slane %v1244, 3
        %v4622 = vrot.slane %v1247, 3
        %v4623 = vrot.slane %v1250, 3
        %v4624 = vrot.slane %v1253, 3
        %v4625 = vrot.slane %v1256, 3
        %v4626 = vrot.slane %v1259, 3
        %v4627 = vrot.slane %v1262, 3
        %v4628 = vrot.slane %v1265, 3
        %v4629 = vrot.slane %v1268, 3
        %v4630 = vrot.slane %v1271, 3
        %v4631 = vrot.slane %v1274, 3
        %v4632 = vrot.slane %v1277, 3
        %v4633 = vrot.slane %v1280, 3
        %v4634 = vrot.slane %v1283, 3
        %v4635 = vrot.slane %v1286, 3
        %v4636 = vrot.slane %v1289, 3
        %v4637 = vrot.slane %v1292, 3
        %v4638 = vrot.slane %v1295, 3
        %v4639 = vrot.slane %v1298, 3
        %v4640 = vrot.slane %v1301, 3
        %v4641 = vrot.slane %v1239, 3
        %v4642 = vrot.slane %v1242, 3
        %v4643 = vrot.slane %v1245, 3
        %v4644 = vrot.slane %v1248, 3
        %v4645 = vrot.slane %v1251, 3
        %v4646 = vrot.slane %v1254, 3
        %v4647 = vrot.slane %v1257, 3
        %v4648 = vrot.slane %v1260, 3
        %v4649 = vrot.slane %v1263, 3
        %v4650 = vrot.slane %v1266, 3
        %v4651 = vrot.slane %v1269, 3
        %v4652 = vrot.slane %v1272, 3
        %v4653 = vrot.slane %v1275, 3
        %v4654 = vrot.slane %v1278, 3
        %v4655 = vrot.slane %v1281, 3
        %v4656 = vrot.slane %v1284, 3
        %v4657 = vrot.slane %v1287, 3
        %v4658 = vrot.slane %v1290, 3
        %v4659 = vrot.slane %v1293, 3
        %v4660 = vrot.slane %v1296, 3
        %v4661 = vrot.slane %v1299, 3
        %v4662 = vrot.slane %v1302, 3
        %vm4663 = vcmp.lt.s32.totalorder %v1377, 5
        %v4664 = vsel %vm4663, %v4619, %v4641
        %v4665 = vsel %vm4663, %v4620, %v4642
        %v4666 = vsel %vm4663, %v4621, %v4643
        %v4667 = vsel %vm4663, %v4622, %v4644
        %v4668 = vsel %vm4663, %v4623, %v4645
        %v4669 = vsel %vm4663, %v4624, %v4646
        %v4670 = vsel %vm4663, %v4625, %v4647
        %v4671 = vsel %vm4663, %v4626, %v4648
        %v4672 = vsel %vm4663, %v4627, %v4649
        %v4673 = vsel %vm4663, %v4628, %v4650
        %v4674 = vsel %vm4663, %v4629, %v4651
        %v4675 = vsel %vm4663, %v4630, %v4652
        %v4676 = vsel %vm4663, %v4631, %v4653
        %v4677 = vsel %vm4663, %v4632, %v4654
        %v4678 = vsel %vm4663, %v4633, %v4655
        %v4679 = vsel %vm4663, %v4634, %v4656
        %v4680 = vsel %vm4663, %v4635, %v4657
        %v4681 = vsel %vm4663, %v4636, %v4658
        %v4682 = vsel %vm4663, %v4637, %v4659
        %v4683 = vsel %vm4663, %v4638, %v4660
        %v4684 = vsel %vm4663, %v4639, %v4661
        %v4685 = vsel %vm4663, %v4640, %v4662
        %v4686 = vsel %vm4663, %v4597, %v4619
        %v4687 = vsel %vm4663, %v4598, %v4620
        %v4688 = vsel %vm4663, %v4599, %v4621
        %v4689 = vsel %vm4663, %v4600, %v4622
        %v4690 = vsel %vm4663, %v4601, %v4623
        %v4691 = vsel %vm4663, %v4602, %v4624
        %v4692 = vsel %vm4663, %v4603, %v4625
        %v4693 = vsel %vm4663, %v4604, %v4626
        %v4694 = vsel %vm4663, %v4605, %v4627
        %v4695 = vsel %vm4663, %v4606, %v4628
        %v4696 = vsel %vm4663, %v4607, %v4629
        %v4697 = vsel %vm4663, %v4608, %v4630
        %v4698 = vsel %vm4663, %v4609, %v4631
        %v4699 = vsel %vm4663, %v4610, %v4632
        %v4700 = vsel %vm4663, %v4611, %v4633
        %v4701 = vsel %vm4663, %v4612, %v4634
        %v4702 = vsel %vm4663, %v4613, %v4635
        %v4703 = vsel %vm4663, %v4614, %v4636
        %v4704 = vsel %vm4663, %v4615, %v4637
        %v4705 = vsel %vm4663, %v4616, %v4638
        %v4706 = vsel %vm4663, %v4617, %v4639
        %v4707 = vsel %vm4663, %v4618, %v4640
        %v4708 = vperm.slane %v1303, 6
        %v4709 = vmul.f32 %v4686, %v4708
        %v4710 = vmul.f32 %v4664, %v4708
        %v4711 = vmul.f32 %v4687, %v4708
        %v4712 = vmul.f32 %v4665, %v4708
        %v4713 = vmul.f32 %v4688, %v4708
        %v4714 = vmul.f32 %v4666, %v4708
        %v4715 = vmul.f32 %v4689, %v4708
        %v4716 = vmul.f32 %v4667, %v4708
        %v4717 = vmul.f32 %v4690, %v4708
        %v4718 = vmul.f32 %v4668, %v4708
        %v4719 = vmul.f32 %v4691, %v4708
        %v4720 = vmul.f32 %v4669, %v4708
        %v4721 = vmul.f32 %v4692, %v4708
        %v4722 = vmul.f32 %v4670, %v4708
        %v4723 = vmul.f32 %v4693, %v4708
        %v4724 = vmul.f32 %v4671, %v4708
        %v4725 = vmul.f32 %v4694, %v4708
        %v4726 = vmul.f32 %v4672, %v4708
        %v4727 = vmul.f32 %v4695, %v4708
        %v4728 = vmul.f32 %v4673, %v4708
        %v4729 = vmul.f32 %v4696, %v4708
        %v4730 = vmul.f32 %v4674, %v4708
        %v4731 = vmul.f32 %v4697, %v4708
        %v4732 = vmul.f32 %v4675, %v4708
        %v4733 = vmul.f32 %v4698, %v4708
        %v4734 = vmul.f32 %v4676, %v4708
        %v4735 = vmul.f32 %v4699, %v4708
        %v4736 = vmul.f32 %v4677, %v4708
        %v4737 = vmul.f32 %v4700, %v4708
        %v4738 = vmul.f32 %v4678, %v4708
        %v4739 = vmul.f32 %v4701, %v4708
        %v4740 = vmul.f32 %v4679, %v4708
        %v4741 = vadd.f32 %v4565, %v4709
        %v4742 = vadd.f32 %v4566, %v4710
        %v4743 = vadd.f32 %v4567, %v4711
        %v4744 = vadd.f32 %v4568, %v4712
        %v4745 = vadd.f32 %v4569, %v4713
        %v4746 = vadd.f32 %v4570, %v4714
        %v4747 = vadd.f32 %v4571, %v4715
        %v4748 = vadd.f32 %v4572, %v4716
        %v4749 = vadd.f32 %v4573, %v4717
        %v4750 = vadd.f32 %v4574, %v4718
        %v4751 = vadd.f32 %v4575, %v4719
        %v4752 = vadd.f32 %v4576, %v4720
        %v4753 = vadd.f32 %v4577, %v4721
        %v4754 = vadd.f32 %v4578, %v4722
        %v4755 = vadd.f32 %v4579, %v4723
        %v4756 = vadd.f32 %v4580, %v4724
        %v4757 = vadd.f32 %v4581, %v4725
        %v4758 = vadd.f32 %v4582, %v4726
        %v4759 = vadd.f32 %v4583, %v4727
        %v4760 = vadd.f32 %v4584, %v4728
        %v4761 = vadd.f32 %v4585, %v4729
        %v4762 = vadd.f32 %v4586, %v4730
        %v4763 = vadd.f32 %v4587, %v4731
        %v4764 = vadd.f32 %v4588, %v4732
        %v4765 = vadd.f32 %v4589, %v4733
        %v4766 = vadd.f32 %v4590, %v4734
        %v4767 = vadd.f32 %v4591, %v4735
        %v4768 = vadd.f32 %v4592, %v4736
        %v4769 = vadd.f32 %v4593, %v4737
        %v4770 = vadd.f32 %v4594, %v4738
        %v4771 = vadd.f32 %v4595, %v4739
        %v4772 = vadd.f32 %v4596, %v4740
        %v4773 = vperm.slane %v1304, 5
        %v4774 = vmul.f32 %v4687, %v4773
        %v4775 = vmul.f32 %v4665, %v4773
        %v4776 = vmul.f32 %v4688, %v4773
        %v4777 = vmul.f32 %v4666, %v4773
        %v4778 = vmul.f32 %v4689, %v4773
        %v4779 = vmul.f32 %v4667, %v4773
        %v4780 = vmul.f32 %v4690, %v4773
        %v4781 = vmul.f32 %v4668, %v4773
        %v4782 = vmul.f32 %v4691, %v4773
        %v4783 = vmul.f32 %v4669, %v4773
        %v4784 = vmul.f32 %v4692, %v4773
        %v4785 = vmul.f32 %v4670, %v4773
        %v4786 = vmul.f32 %v4693, %v4773
        %v4787 = vmul.f32 %v4671, %v4773
        %v4788 = vmul.f32 %v4694, %v4773
        %v4789 = vmul.f32 %v4672, %v4773
        %v4790 = vmul.f32 %v4695, %v4773
        %v4791 = vmul.f32 %v4673, %v4773
        %v4792 = vmul.f32 %v4696, %v4773
        %v4793 = vmul.f32 %v4674, %v4773
        %v4794 = vmul.f32 %v4697, %v4773
        %v4795 = vmul.f32 %v4675, %v4773
        %v4796 = vmul.f32 %v4698, %v4773
        %v4797 = vmul.f32 %v4676, %v4773
        %v4798 = vmul.f32 %v4699, %v4773
        %v4799 = vmul.f32 %v4677, %v4773
        %v4800 = vmul.f32 %v4700, %v4773
        %v4801 = vmul.f32 %v4678, %v4773
        %v4802 = vmul.f32 %v4701, %v4773
        %v4803 = vmul.f32 %v4679, %v4773
        %v4804 = vmul.f32 %v4702, %v4773
        %v4805 = vmul.f32 %v4680, %v4773
        %v4806 = vadd.f32 %v4741, %v4774
        %v4807 = vadd.f32 %v4742, %v4775
        %v4808 = vadd.f32 %v4743, %v4776
        %v4809 = vadd.f32 %v4744, %v4777
        %v4810 = vadd.f32 %v4745, %v4778
        %v4811 = vadd.f32 %v4746, %v4779
        %v4812 = vadd.f32 %v4747, %v4780
        %v4813 = vadd.f32 %v4748, %v4781
        %v4814 = vadd.f32 %v4749, %v4782
        %v4815 = vadd.f32 %v4750, %v4783
        %v4816 = vadd.f32 %v4751, %v4784
        %v4817 = vadd.f32 %v4752, %v4785
        %v4818 = vadd.f32 %v4753, %v4786
        %v4819 = vadd.f32 %v4754, %v4787
        %v4820 = vadd.f32 %v4755, %v4788
        %v4821 = vadd.f32 %v4756, %v4789
        %v4822 = vadd.f32 %v4757, %v4790
        %v4823 = vadd.f32 %v4758, %v4791
        %v4824 = vadd.f32 %v4759, %v4792
        %v4825 = vadd.f32 %v4760, %v4793
        %v4826 = vadd.f32 %v4761, %v4794
        %v4827 = vadd.f32 %v4762, %v4795
        %v4828 = vadd.f32 %v4763, %v4796
        %v4829 = vadd.f32 %v4764, %v4797
        %v4830 = vadd.f32 %v4765, %v4798
        %v4831 = vadd.f32 %v4766, %v4799
        %v4832 = vadd.f32 %v4767, %v4800
        %v4833 = vadd.f32 %v4768, %v4801
        %v4834 = vadd.f32 %v4769, %v4802
        %v4835 = vadd.f32 %v4770, %v4803
        %v4836 = vadd.f32 %v4771, %v4804
        %v4837 = vadd.f32 %v4772, %v4805
        %v4838 = vperm.slane %v1305, 4
        %v4839 = vmul.f32 %v4688, %v4838
        %v4840 = vmul.f32 %v4666, %v4838
        %v4841 = vmul.f32 %v4689, %v4838
        %v4842 = vmul.f32 %v4667, %v4838
        %v4843 = vmul.f32 %v4690, %v4838
        %v4844 = vmul.f32 %v4668, %v4838
        %v4845 = vmul.f32 %v4691, %v4838
        %v4846 = vmul.f32 %v4669, %v4838
        %v4847 = vmul.f32 %v4692, %v4838
        %v4848 = vmul.f32 %v4670, %v4838
        %v4849 = vmul.f32 %v4693, %v4838
        %v4850 = vmul.f32 %v4671, %v4838
        %v4851 = vmul.f32 %v4694, %v4838
        %v4852 = vmul.f32 %v4672, %v4838
        %v4853 = vmul.f32 %v4695, %v4838
        %v4854 = vmul.f32 %v4673, %v4838
        %v4855 = vmul.f32 %v4696, %v4838
        %v4856 = vmul.f32 %v4674, %v4838
        %v4857 = vmul.f32 %v4697, %v4838
        %v4858 = vmul.f32 %v4675, %v4838
        %v4859 = vmul.f32 %v4698, %v4838
        %v4860 = vmul.f32 %v4676, %v4838
        %v4861 = vmul.f32 %v4699, %v4838
        %v4862 = vmul.f32 %v4677, %v4838
        %v4863 = vmul.f32 %v4700, %v4838
        %v4864 = vmul.f32 %v4678, %v4838
        %v4865 = vmul.f32 %v4701, %v4838
        %v4866 = vmul.f32 %v4679, %v4838
        %v4867 = vmul.f32 %v4702, %v4838
        %v4868 = vmul.f32 %v4680, %v4838
        %v4869 = vmul.f32 %v4703, %v4838
        %v4870 = vmul.f32 %v4681, %v4838
        %v4871 = vadd.f32 %v4806, %v4839
        %v4872 = vadd.f32 %v4807, %v4840
        %v4873 = vadd.f32 %v4808, %v4841
        %v4874 = vadd.f32 %v4809, %v4842
        %v4875 = vadd.f32 %v4810, %v4843
        %v4876 = vadd.f32 %v4811, %v4844
        %v4877 = vadd.f32 %v4812, %v4845
        %v4878 = vadd.f32 %v4813, %v4846
        %v4879 = vadd.f32 %v4814, %v4847
        %v4880 = vadd.f32 %v4815, %v4848
        %v4881 = vadd.f32 %v4816, %v4849
        %v4882 = vadd.f32 %v4817, %v4850
        %v4883 = vadd.f32 %v4818, %v4851
        %v4884 = vadd.f32 %v4819, %v4852
        %v4885 = vadd.f32 %v4820, %v4853
        %v4886 = vadd.f32 %v4821, %v4854
        %v4887 = vadd.f32 %v4822, %v4855
        %v4888 = vadd.f32 %v4823, %v4856
        %v4889 = vadd.f32 %v4824, %v4857
        %v4890 = vadd.f32 %v4825, %v4858
        %v4891 = vadd.f32 %v4826, %v4859
        %v4892 = vadd.f32 %v4827, %v4860
        %v4893 = vadd.f32 %v4828, %v4861
        %v4894 = vadd.f32 %v4829, %v4862
        %v4895 = vadd.f32 %v4830, %v4863
        %v4896 = vadd.f32 %v4831, %v4864
        %v4897 = vadd.f32 %v4832, %v4865
        %v4898 = vadd.f32 %v4833, %v4866
        %v4899 = vadd.f32 %v4834, %v4867
        %v4900 = vadd.f32 %v4835, %v4868
        %v4901 = vadd.f32 %v4836, %v4869
        %v4902 = vadd.f32 %v4837, %v4870
        %v4903 = vperm.slane %v1306, 3
        %v4904 = vmul.f32 %v4689, %v4903
        %v4905 = vmul.f32 %v4667, %v4903
        %v4906 = vmul.f32 %v4690, %v4903
        %v4907 = vmul.f32 %v4668, %v4903
        %v4908 = vmul.f32 %v4691, %v4903
        %v4909 = vmul.f32 %v4669, %v4903
        %v4910 = vmul.f32 %v4692, %v4903
        %v4911 = vmul.f32 %v4670, %v4903
        %v4912 = vmul.f32 %v4693, %v4903
        %v4913 = vmul.f32 %v4671, %v4903
        %v4914 = vmul.f32 %v4694, %v4903
        %v4915 = vmul.f32 %v4672, %v4903
        %v4916 = vmul.f32 %v4695, %v4903
        %v4917 = vmul.f32 %v4673, %v4903
        %v4918 = vmul.f32 %v4696, %v4903
        %v4919 = vmul.f32 %v4674, %v4903
        %v4920 = vmul.f32 %v4697, %v4903
        %v4921 = vmul.f32 %v4675, %v4903
        %v4922 = vmul.f32 %v4698, %v4903
        %v4923 = vmul.f32 %v4676, %v4903
        %v4924 = vmul.f32 %v4699, %v4903
        %v4925 = vmul.f32 %v4677, %v4903
        %v4926 = vmul.f32 %v4700, %v4903
        %v4927 = vmul.f32 %v4678, %v4903
        %v4928 = vmul.f32 %v4701, %v4903
        %v4929 = vmul.f32 %v4679, %v4903
        %v4930 = vmul.f32 %v4702, %v4903
        %v4931 = vmul.f32 %v4680, %v4903
        %v4932 = vmul.f32 %v4703, %v4903
        %v4933 = vmul.f32 %v4681, %v4903
        %v4934 = vmul.f32 %v4704, %v4903
        %v4935 = vmul.f32 %v4682, %v4903
        %v4936 = vadd.f32 %v4871, %v4904
        %v4937 = vadd.f32 %v4872, %v4905
        %v4938 = vadd.f32 %v4873, %v4906
        %v4939 = vadd.f32 %v4874, %v4907
        %v4940 = vadd.f32 %v4875, %v4908
        %v4941 = vadd.f32 %v4876, %v4909
        %v4942 = vadd.f32 %v4877, %v4910
        %v4943 = vadd.f32 %v4878, %v4911
        %v4944 = vadd.f32 %v4879, %v4912
        %v4945 = vadd.f32 %v4880, %v4913
        %v4946 = vadd.f32 %v4881, %v4914
        %v4947 = vadd.f32 %v4882, %v4915
        %v4948 = vadd.f32 %v4883, %v4916
        %v4949 = vadd.f32 %v4884, %v4917
        %v4950 = vadd.f32 %v4885, %v4918
        %v4951 = vadd.f32 %v4886, %v4919
        %v4952 = vadd.f32 %v4887, %v4920
        %v4953 = vadd.f32 %v4888, %v4921
        %v4954 = vadd.f32 %v4889, %v4922
        %v4955 = vadd.f32 %v4890, %v4923
        %v4956 = vadd.f32 %v4891, %v4924
        %v4957 = vadd.f32 %v4892, %v4925
        %v4958 = vadd.f32 %v4893, %v4926
        %v4959 = vadd.f32 %v4894, %v4927
        %v4960 = vadd.f32 %v4895, %v4928
        %v4961 = vadd.f32 %v4896, %v4929
        %v4962 = vadd.f32 %v4897, %v4930
        %v4963 = vadd.f32 %v4898, %v4931
        %v4964 = vadd.f32 %v4899, %v4932
        %v4965 = vadd.f32 %v4900, %v4933
        %v4966 = vadd.f32 %v4901, %v4934
        %v4967 = vadd.f32 %v4902, %v4935
        %v4968 = vperm.slane %v1307, 2
        %v4969 = vmul.f32 %v4690, %v4968
        %v4970 = vmul.f32 %v4668, %v4968
        %v4971 = vmul.f32 %v4691, %v4968
        %v4972 = vmul.f32 %v4669, %v4968
        %v4973 = vmul.f32 %v4692, %v4968
        %v4974 = vmul.f32 %v4670, %v4968
        %v4975 = vmul.f32 %v4693, %v4968
        %v4976 = vmul.f32 %v4671, %v4968
        %v4977 = vmul.f32 %v4694, %v4968
        %v4978 = vmul.f32 %v4672, %v4968
        %v4979 = vmul.f32 %v4695, %v4968
        %v4980 = vmul.f32 %v4673, %v4968
        %v4981 = vmul.f32 %v4696, %v4968
        %v4982 = vmul.f32 %v4674, %v4968
        %v4983 = vmul.f32 %v4697, %v4968
        %v4984 = vmul.f32 %v4675, %v4968
        %v4985 = vmul.f32 %v4698, %v4968
        %v4986 = vmul.f32 %v4676, %v4968
        %v4987 = vmul.f32 %v4699, %v4968
        %v4988 = vmul.f32 %v4677, %v4968
        %v4989 = vmul.f32 %v4700, %v4968
        %v4990 = vmul.f32 %v4678, %v4968
        %v4991 = vmul.f32 %v4701, %v4968
        %v4992 = vmul.f32 %v4679, %v4968
        %v4993 = vmul.f32 %v4702, %v4968
        %v4994 = vmul.f32 %v4680, %v4968
        %v4995 = vmul.f32 %v4703, %v4968
        %v4996 = vmul.f32 %v4681, %v4968
        %v4997 = vmul.f32 %v4704, %v4968
        %v4998 = vmul.f32 %v4682, %v4968
        %v4999 = vmul.f32 %v4705, %v4968
        %v5000 = vmul.f32 %v4683, %v4968
        %v5001 = vadd.f32 %v4936, %v4969
        %v5002 = vadd.f32 %v4937, %v4970
        %v5003 = vadd.f32 %v4938, %v4971
        %v5004 = vadd.f32 %v4939, %v4972
        %v5005 = vadd.f32 %v4940, %v4973
        %v5006 = vadd.f32 %v4941, %v4974
        %v5007 = vadd.f32 %v4942, %v4975
        %v5008 = vadd.f32 %v4943, %v4976
        %v5009 = vadd.f32 %v4944, %v4977
        %v5010 = vadd.f32 %v4945, %v4978
        %v5011 = vadd.f32 %v4946, %v4979
        %v5012 = vadd.f32 %v4947, %v4980
        %v5013 = vadd.f32 %v4948, %v4981
        %v5014 = vadd.f32 %v4949, %v4982
        %v5015 = vadd.f32 %v4950, %v4983
        %v5016 = vadd.f32 %v4951, %v4984
        %v5017 = vadd.f32 %v4952, %v4985
        %v5018 = vadd.f32 %v4953, %v4986
        %v5019 = vadd.f32 %v4954, %v4987
        %v5020 = vadd.f32 %v4955, %v4988
        %v5021 = vadd.f32 %v4956, %v4989
        %v5022 = vadd.f32 %v4957, %v4990
        %v5023 = vadd.f32 %v4958, %v4991
        %v5024 = vadd.f32 %v4959, %v4992
        %v5025 = vadd.f32 %v4960, %v4993
        %v5026 = vadd.f32 %v4961, %v4994
        %v5027 = vadd.f32 %v4962, %v4995
        %v5028 = vadd.f32 %v4963, %v4996
        %v5029 = vadd.f32 %v4964, %v4997
        %v5030 = vadd.f32 %v4965, %v4998
        %v5031 = vadd.f32 %v4966, %v4999
        %v5032 = vadd.f32 %v4967, %v5000
        %v5033 = vperm.slane %v1308, 1
        %v5034 = vmul.f32 %v4691, %v5033
        %v5035 = vmul.f32 %v4669, %v5033
        %v5036 = vmul.f32 %v4692, %v5033
        %v5037 = vmul.f32 %v4670, %v5033
        %v5038 = vmul.f32 %v4693, %v5033
        %v5039 = vmul.f32 %v4671, %v5033
        %v5040 = vmul.f32 %v4694, %v5033
        %v5041 = vmul.f32 %v4672, %v5033
        %v5042 = vmul.f32 %v4695, %v5033
        %v5043 = vmul.f32 %v4673, %v5033
        %v5044 = vmul.f32 %v4696, %v5033
        %v5045 = vmul.f32 %v4674, %v5033
        %v5046 = vmul.f32 %v4697, %v5033
        %v5047 = vmul.f32 %v4675, %v5033
        %v5048 = vmul.f32 %v4698, %v5033
        %v5049 = vmul.f32 %v4676, %v5033
        %v5050 = vmul.f32 %v4699, %v5033
        %v5051 = vmul.f32 %v4677, %v5033
        %v5052 = vmul.f32 %v4700, %v5033
        %v5053 = vmul.f32 %v4678, %v5033
        %v5054 = vmul.f32 %v4701, %v5033
        %v5055 = vmul.f32 %v4679, %v5033
        %v5056 = vmul.f32 %v4702, %v5033
        %v5057 = vmul.f32 %v4680, %v5033
        %v5058 = vmul.f32 %v4703, %v5033
        %v5059 = vmul.f32 %v4681, %v5033
        %v5060 = vmul.f32 %v4704, %v5033
        %v5061 = vmul.f32 %v4682, %v5033
        %v5062 = vmul.f32 %v4705, %v5033
        %v5063 = vmul.f32 %v4683, %v5033
        %v5064 = vmul.f32 %v4706, %v5033
        %v5065 = vmul.f32 %v4684, %v5033
        %v5066 = vadd.f32 %v5001, %v5034
        %v5067 = vadd.f32 %v5002, %v5035
        %v5068 = vadd.f32 %v5003, %v5036
        %v5069 = vadd.f32 %v5004, %v5037
        %v5070 = vadd.f32 %v5005, %v5038
        %v5071 = vadd.f32 %v5006, %v5039
        %v5072 = vadd.f32 %v5007, %v5040
        %v5073 = vadd.f32 %v5008, %v5041
        %v5074 = vadd.f32 %v5009, %v5042
        %v5075 = vadd.f32 %v5010, %v5043
        %v5076 = vadd.f32 %v5011, %v5044
        %v5077 = vadd.f32 %v5012, %v5045
        %v5078 = vadd.f32 %v5013, %v5046
        %v5079 = vadd.f32 %v5014, %v5047
        %v5080 = vadd.f32 %v5015, %v5048
        %v5081 = vadd.f32 %v5016, %v5049
        %v5082 = vadd.f32 %v5017, %v5050
        %v5083 = vadd.f32 %v5018, %v5051
        %v5084 = vadd.f32 %v5019, %v5052
        %v5085 = vadd.f32 %v5020, %v5053
        %v5086 = vadd.f32 %v5021, %v5054
        %v5087 = vadd.f32 %v5022, %v5055
        %v5088 = vadd.f32 %v5023, %v5056
        %v5089 = vadd.f32 %v5024, %v5057
        %v5090 = vadd.f32 %v5025, %v5058
        %v5091 = vadd.f32 %v5026, %v5059
        %v5092 = vadd.f32 %v5027, %v5060
        %v5093 = vadd.f32 %v5028, %v5061
        %v5094 = vadd.f32 %v5029, %v5062
        %v5095 = vadd.f32 %v5030, %v5063
        %v5096 = vadd.f32 %v5031, %v5064
        %v5097 = vadd.f32 %v5032, %v5065
        %v5098 = vperm.slane %v1309, 0
        %v5099 = vmul.f32 %v4692, %v5098
        %v5100 = vmul.f32 %v4670, %v5098
        %v5101 = vmul.f32 %v4693, %v5098
        %v5102 = vmul.f32 %v4671, %v5098
        %v5103 = vmul.f32 %v4694, %v5098
        %v5104 = vmul.f32 %v4672, %v5098
        %v5105 = vmul.f32 %v4695, %v5098
        %v5106 = vmul.f32 %v4673, %v5098
        %v5107 = vmul.f32 %v4696, %v5098
        %v5108 = vmul.f32 %v4674, %v5098
        %v5109 = vmul.f32 %v4697, %v5098
        %v5110 = vmul.f32 %v4675, %v5098
        %v5111 = vmul.f32 %v4698, %v5098
        %v5112 = vmul.f32 %v4676, %v5098
        %v5113 = vmul.f32 %v4699, %v5098
        %v5114 = vmul.f32 %v4677, %v5098
        %v5115 = vmul.f32 %v4700, %v5098
        %v5116 = vmul.f32 %v4678, %v5098
        %v5117 = vmul.f32 %v4701, %v5098
        %v5118 = vmul.f32 %v4679, %v5098
        %v5119 = vmul.f32 %v4702, %v5098
        %v5120 = vmul.f32 %v4680, %v5098
        %v5121 = vmul.f32 %v4703, %v5098
        %v5122 = vmul.f32 %v4681, %v5098
        %v5123 = vmul.f32 %v4704, %v5098
        %v5124 = vmul.f32 %v4682, %v5098
        %v5125 = vmul.f32 %v4705, %v5098
        %v5126 = vmul.f32 %v4683, %v5098
        %v5127 = vmul.f32 %v4706, %v5098
        %v5128 = vmul.f32 %v4684, %v5098
        %v5129 = vmul.f32 %v4707, %v5098
        %v5130 = vmul.f32 %v4685, %v5098
        %v5131 = vadd.f32 %v5066, %v5099
        %v5132 = vadd.f32 %v5067, %v5100
        %v5133 = vadd.f32 %v5068, %v5101
        %v5134 = vadd.f32 %v5069, %v5102
        %v5135 = vadd.f32 %v5070, %v5103
        %v5136 = vadd.f32 %v5071, %v5104
        %v5137 = vadd.f32 %v5072, %v5105
        %v5138 = vadd.f32 %v5073, %v5106
        %v5139 = vadd.f32 %v5074, %v5107
        %v5140 = vadd.f32 %v5075, %v5108
        %v5141 = vadd.f32 %v5076, %v5109
        %v5142 = vadd.f32 %v5077, %v5110
        %v5143 = vadd.f32 %v5078, %v5111
        %v5144 = vadd.f32 %v5079, %v5112
        %v5145 = vadd.f32 %v5080, %v5113
        %v5146 = vadd.f32 %v5081, %v5114
        %v5147 = vadd.f32 %v5082, %v5115
        %v5148 = vadd.f32 %v5083, %v5116
        %v5149 = vadd.f32 %v5084, %v5117
        %v5150 = vadd.f32 %v5085, %v5118
        %v5151 = vadd.f32 %v5086, %v5119
        %v5152 = vadd.f32 %v5087, %v5120
        %v5153 = vadd.f32 %v5088, %v5121
        %v5154 = vadd.f32 %v5089, %v5122
        %v5155 = vadd.f32 %v5090, %v5123
        %v5156 = vadd.f32 %v5091, %v5124
        %v5157 = vadd.f32 %v5092, %v5125
        %v5158 = vadd.f32 %v5093, %v5126
        %v5159 = vadd.f32 %v5094, %v5127
        %v5160 = vadd.f32 %v5095, %v5128
        %v5161 = vadd.f32 %v5096, %v5129
        %v5162 = vadd.f32 %v5097, %v5130
        %v5163 = vld [vmem:[%s9] sm:$0x1]
        %v5165 = vperm.slane %v5163, 0
        %v5167 = vadd.f32 %v5131, %v5165
        %v5168 = vadd.f32 %v5132, %v5165
        %v5169 = vadd.f32 %v5133, %v5165
        %v5170 = vadd.f32 %v5134, %v5165
        %v5171 = vadd.f32 %v5135, %v5165
        %v5172 = vadd.f32 %v5136, %v5165
        %v5173 = vadd.f32 %v5137, %v5165
        %v5174 = vadd.f32 %v5138, %v5165
        %v5175 = vadd.f32 %v5139, %v5165
        %v5176 = vadd.f32 %v5140, %v5165
        %v5177 = vadd.f32 %v5141, %v5165
        %v5178 = vadd.f32 %v5142, %v5165
        %v5179 = vadd.f32 %v5143, %v5165
        %v5180 = vadd.f32 %v5144, %v5165
        %v5181 = vadd.f32 %v5145, %v5165
        %v5182 = vadd.f32 %v5146, %v5165
        %v5183 = vadd.f32 %v5147, %v5165
        %v5184 = vadd.f32 %v5148, %v5165
        %v5185 = vadd.f32 %v5149, %v5165
        %v5186 = vadd.f32 %v5150, %v5165
        %v5187 = vadd.f32 %v5151, %v5165
        %v5188 = vadd.f32 %v5152, %v5165
        %v5189 = vadd.f32 %v5153, %v5165
        %v5190 = vadd.f32 %v5154, %v5165
        %v5191 = vadd.f32 %v5155, %v5165
        %v5192 = vadd.f32 %v5156, %v5165
        %v5193 = vadd.f32 %v5157, %v5165
        %v5194 = vadd.f32 %v5158, %v5165
        %v5195 = vadd.f32 %v5159, %v5165
        %v5196 = vadd.f32 %v5160, %v5165
        %v5197 = vadd.f32 %v5161, %v5165
        %v5198 = vadd.f32 %v5162, %v5165
        %5199 = vst.msk [vmem:[%s393] sm:$0xff] %vm434, %v5167
        %5200 = vst.msk [vmem:[%s393 + $0x8] sm:$0xff] %vm434, %v5168
        %5201 = vst.msk [vmem:[%s393 + $0x10] sm:$0xff] %vm434, %v5169
        %5202 = vst.msk [vmem:[%s393 + $0x18] sm:$0xff] %vm434, %v5170
        %5203 = vst.msk [vmem:[%s393 + $0x20] sm:$0xff] %vm434, %v5171
        %5204 = vst.msk [vmem:[%s393 + $0x28] sm:$0xff] %vm434, %v5172
        %5205 = vst.msk [vmem:[%s393 + $0x30] sm:$0xff] %vm434, %v5173
        %5206 = vst.msk [vmem:[%s393 + $0x38] sm:$0xff] %vm434, %v5174
        %5207 = vst.msk [vmem:[%s393 + $0x40] sm:$0xff] %vm434, %v5175
        %5208 = vst.msk [vmem:[%s393 + $0x48] sm:$0xff] %vm434, %v5176
        %5209 = vst.msk [vmem:[%s393 + $0x50] sm:$0xff] %vm434, %v5177
        %5210 = vst.msk [vmem:[%s393 + $0x58] sm:$0xff] %vm434, %v5178
        %5211 = vst.msk [vmem:[%s393 + $0x60] sm:$0xff] %vm434, %v5179
        %5212 = vst.msk [vmem:[%s393 + $0x68] sm:$0xff] %vm434, %v5180
        %5213 = vst.msk [vmem:[%s393 + $0x70] sm:$0xff] %vm434, %v5181
        %5214 = vst.msk [vmem:[%s393 + $0x78] sm:$0xff] %vm434, %v5182
        %5215 = vst.msk [vmem:[%s393 + $0x80] sm:$0xff] %vm434, %v5183
        %5216 = vst.msk [vmem:[%s393 + $0x88] sm:$0xff] %vm434, %v5184
        %5217 = vst.msk [vmem:[%s393 + $0x90] sm:$0xff] %vm434, %v5185
        %5218 = vst.msk [vmem:[%s393 + $0x98] sm:$0xff] %vm434, %v5186
        %5219 = vst.msk [vmem:[%s393 + $0xa0] sm:$0xff] %vm434, %v5187
        %5220 = vst.msk [vmem:[%s393 + $0xa8] sm:$0xff] %vm434, %v5188
        %5221 = vst.msk [vmem:[%s393 + $0xb0] sm:$0xff] %vm434, %v5189
        %5222 = vst.msk [vmem:[%s393 + $0xb8] sm:$0xff] %vm434, %v5190
        %5223 = vst.msk [vmem:[%s393 + $0xc0] sm:$0xff] %vm434, %v5191
        %5224 = vst.msk [vmem:[%s393 + $0xc8] sm:$0xff] %vm434, %v5192
        %5225 = vst.msk [vmem:[%s393 + $0xd0] sm:$0xff] %vm434, %v5193
        %5226 = vst.msk [vmem:[%s393 + $0xd8] sm:$0xff] %vm434, %v5194
        %5227 = vst.msk [vmem:[%s393 + $0xe0] sm:$0xff] %vm434, %v5195
        %5228 = vst.msk [vmem:[%s393 + $0xe8] sm:$0xff] %vm434, %v5196
        %5229 = vst.msk [vmem:[%s393 + $0xf0] sm:$0xff] %vm434, %v5197
        %5230 = vst.msk [vmem:[%s393 + $0xf8] sm:$0xff] %vm434, %v5198
        %s5231 = sand.u32 %s251, 1
        %s5232 = scalar_lea.sflag [#allocation5], %s5231
        %s5233 = sand.u32 %s251, 1
        %s5234 = smul.addr %s5233, 256
        %s5235 = scalar_lea.vmem [#allocation8], %s5234
        // Predicated region
        $region69: #{aio_block_forward.1} parent=59 // pred_check
          %p5236 = pneg %p261
        $region70: #{aio_block_forward.1} parent=59 // pred_check_branch
          %5238 = sbr.rel (%p5236) target = $region72
        $region71: #{aio_block_forward.1} parent=59 // pred_region
          %5240 = vsyncadd %s5232, 0
          %s5241 = smul.addr %s28, 32
          %s5242 = smul.addr %s5241, 8
          %s5243 = scalar_lea.hbm %s10, %s5242
          %s5244 = sshll.u32 %s5235, 4
          %s5245 = int_to_ptr.vmem [resolvable:$true] %s5244
          %s5246 = sshll.u32 %s5243, 4
          %s5247 = int_to_ptr.hbm [resolvable:$true] %s5246
          %5252 = dma.vmem_to_hbm [thread:$0]  %s5245, 4096, %s5247, %s5232, 128, 128, 8
        $region72: #{aio_block_forward.1} parent=59 // pred_fallthru
          _
      $region60: #{aio_block_forward.1} parent=5 // pred_fallthru
        _
      %p5253 = scmp.le.s32.totalorder 2, %s23
      // Predicated region
      $region73: #{aio_block_forward.1} parent=5 // pred_check
        %p5254 = pneg %p5253
      $region74: #{aio_block_forward.1} parent=5 // pred_check_branch
        %5256 = sbr.rel (%p5254) target = $region76
      $region75: #{aio_block_forward.1} parent=5 // pred_region
        %s5257 = ssub.s32 %s23, 2
        // Predicated region
        $region77: #{aio_block_forward.1} parent=75 // pred_check
          %p5258 = pneg %p267
        $region78: #{aio_block_forward.1} parent=75 // pred_check_branch
          %5260 = sbr.rel (%p5258) target = $region80
        $region79: #{aio_block_forward.1} parent=75 // pred_region
          %s5261 = sand.u32 %s252, 1
          %s5262 = scalar_lea.sflag [#allocation5], %s5261
          %s5263 = sand.u32 %s252, 1
          %s5264 = smul.addr %s5263, 256
          %s5265 = scalar_lea.vmem [#allocation8], %s5264
          %5267 = dma.done %s5262, 4096
        $region80: #{aio_block_forward.1} parent=75 // pred_fallthru
          _
      $region76: #{aio_block_forward.1} parent=5 // pred_fallthru
        _
    $region6: #{aio_block_forward.1} parent=1 // loop_footer
      %s27 = sadd.s32 1, %s23
    $region7: #{aio_block_forward.1} parent=1 // loop_footer_branch
      %22 = sbr.rel target = $region3
    $region8: #{aio_block_forward.1} parent=1 // loop_exit
      _
    %5268 = vsyncpa [#allocation4], 1
    %s5269 = scalar_lea.sflag [#allocation4], 1
    %5270 = vsyncpa %s5269, 1
    %5271 = vsyncpa [#allocation5], 1
    %s5272 = scalar_lea.sflag [#allocation5], 1
    %5273 = vsyncpa %s5272, 1
    %5274 = vsyncpa [#allocation6], 1
    %s5275 = scalar_lea.sflag [#allocation6], 1
    %5276 = vsyncpa %s5275, 1

</llo_original>
